<compile_context>
chip_gen: v5e
topology: v5e:2x2
jax: 0.10.0
libtpu: 0.0.40
codegen_flags: <defaults>
</compile_context>

<pallas_src>
import math
from functools import partial

import numpy as np
import jax
import jax.numpy as jnp
from jax.experimental import pallas as pl
from jax.experimental.pallas import tpu as pltpu


# ----------------------------- fused forward kernel -----------------------------

def _fused_forward_kernel(freqs_ref, tvals_ref, enc_w_ref, emb_ref,
                          qkv_w_ref, o_w_ref, ff1_w_ref, ff2_w_ref,
                          pp_w_ref, dec_sw_ref, bias_ref, out_ref,
                          *, B, S, L, M, V, E, H, NL, F, C, OUTW, boff):
    """Entire End2EndModel forward, VMEM resident, no grid."""
    f32 = jnp.float32
    Dh = E // H
    scale = 1.0 / math.sqrt(Dh)
    BM = B * M

    def bias(name):
        off, n = boff[name]
        return bias_ref[:, off:off + n]              # (1, n), lane-aligned static slice

    def layer_norm(y, g_name, b_name):
        mu = jnp.mean(y, axis=-1, keepdims=True)
        var = jnp.mean(jnp.square(y - mu), axis=-1, keepdims=True)
        return (y - mu) * jax.lax.rsqrt(var + 1e-5) * bias(g_name) + bias(b_name)

    def softmax_last(s):
        s = s - jnp.max(s, axis=-1, keepdims=True)
        p = jnp.exp(s)
        return p / jnp.sum(p, axis=-1, keepdims=True)

    # Static block-diagonal mask: x2 rows are m-major (row = m*B + b); a token may only
    # attend to tokens of the same batch element (same row index mod B).
    row = jax.lax.broadcasted_iota(jnp.int32, (BM, BM), 0)
    col = jax.lax.broadcasted_iota(jnp.int32, (BM, BM), 1)
    attn_mask = jnp.where((row % B) == (col % B), 0.0, -1e30).astype(f32)

    def mha(x2, a_idx):
        """Masked self-attention over the full (B*M, E) slab: one fused QKV projection,
        H per-head matmuls — no per-batch loop."""
        qkv_w = qkv_w_ref[a_idx * E:(a_idx + 1) * E, :]      # (E, 3E) sublane-aligned slice
        o_w = o_w_ref[a_idx * E:(a_idx + 1) * E, :]          # (E, E)
        qkv = jnp.dot(x2, qkv_w, preferred_element_type=f32) + bias(f"qkv_b{a_idx}")
        heads = []
        for h in range(H):
            q = qkv[:, h * Dh:(h + 1) * Dh]
            k = qkv[:, E + h * Dh:E + (h + 1) * Dh]
            v = qkv[:, 2 * E + h * Dh:2 * E + (h + 1) * Dh]
            s = jax.lax.dot_general(q, k, (((1,), (1,)), ((), ())),
                                    preferred_element_type=f32) * scale + attn_mask
            heads.append(jnp.dot(softmax_last(s), v, preferred_element_type=f32))
        ctx = jnp.concatenate(heads, axis=-1)                # (BM, E)
        return jnp.dot(ctx, o_w, preferred_element_type=f32) + bias(f"o_b{a_idx}")

    # ---------------- 1. Signal encoding (one fused sin over (B, S*L)) ----------------
    terms = jnp.sin(freqs_ref[...] * tvals_ref[...])         # 2*pi folded into tvals
    ctx_sig = terms[:, 0:L]
    for i in range(1, S):
        ctx_sig = ctx_sig + terms[:, i * L:(i + 1) * L]
    norm = jnp.sqrt(jnp.sum(ctx_sig * ctx_sig, axis=-1, keepdims=True)) + 1e-8
    sig = ctx_sig / norm                                      # (B, L)

    # ---------------- 2. Tokenization ----------------
    logits_flat = jnp.dot(sig, enc_w_ref[...], preferred_element_type=f32) + bias("enc_b")
    # Stack the M per-token logit blocks along sublanes (m-major rows): ONE softmax and
    # ONE embedding matmul produce the whole (B*M, E) token-embedding slab.
    logit_rows = jnp.concatenate(
        [logits_flat[:, m * V:(m + 1) * V] for m in range(M)], axis=0)        # (M*B, V)
    x2 = jnp.dot(softmax_last(logit_rows), emb_ref[...], preferred_element_type=f32)

    x2 = layer_norm(x2 + mha(x2, 0), "ln_g0", "ln_b0")        # token attention block
    x2 = layer_norm(x2 + mha(x2, 1), "ln_g1", "ln_b1")        # refiner attention block

    # ---------------- 3. Intermediate transformer (post-norm, ReLU FFN) ----------------
    for l in range(NL):
        x2 = layer_norm(x2 + mha(x2, 2 + l), f"ln_g{2 + 2 * l}", f"ln_b{2 + 2 * l}")
        w1 = ff1_w_ref[:, l * F:(l + 1) * F]                  # (E, F) lane-aligned slice
        hid = jnp.maximum(
            jnp.dot(x2, w1, preferred_element_type=f32) + bias(f"ff_b1_{l}"), 0.0)
        # ff2 weights of both layers are lane-packed; one MXU pass computes all NL output
        # blocks (same K), keep only this layer's E lanes.
        ff_all = jnp.dot(hid, ff2_w_ref[...], preferred_element_type=f32)     # (BM, NL*E)
        ff_out = ff_all[:, l * E:(l + 1) * E] + bias(f"ff_b2_{l}")
        x2 = layer_norm(x2 + ff_out, f"ln_g{3 + 2 * l}", f"ln_b{3 + 2 * l}")

    # ---------------- 4. Pattern decoder ----------------
    # (B, M*E) flatten @ pp_w folded into M partial matmuls summed (no row shuffles).
    pat = jnp.dot(x2[0:B, :], pp_w_ref[0:E, :], preferred_element_type=f32)
    for m in range(1, M):
        pat = pat + jnp.dot(x2[m * B:(m + 1) * B, :], pp_w_ref[m * E:(m + 1) * E, :],
                            preferred_element_type=f32)
    pat = pat + bias("pp_b")                                  # (B, V)
    # length-1-sequence decoder MHA (softmax == 1) folded offline into a single linear
    attn_out = jnp.dot(pat, dec_sw_ref[:, 0:V], preferred_element_type=f32) + bias("da_b")
    refined = layer_norm(pat + attn_out, "dec_ln_g", "dec_ln_b")
    char = jnp.dot(refined, dec_sw_ref[:, V:V + C], preferred_element_type=f32) + bias("cd_b")

    # single lane-padded packed output: [token_logits | char_logits | zero pad]
    pad = OUTW - (M * V + C)
    pieces = [logits_flat, char]
    if pad:
        pieces.append(jnp.zeros((B, pad), f32))
    out_ref[...] = jnp.concatenate(pieces, axis=1)


# ----------------------------- weight packing -----------------------------

def _pack_bias_slab(segments):
    """Concatenate 1-D params into one (1, TOT) slab; each segment starts lane-aligned."""
    offsets = {}
    parts = []
    off = 0
    for name, arr in segments:
        arr = jnp.asarray(arr, jnp.float32).reshape(-1)
        n = int(arr.shape[0])
        offsets[name] = (off, n)
        parts.append(arr)
        pad = (-n) % 128
        if pad:
            parts.append(jnp.zeros((pad,), jnp.float32))
        off += n + pad
    slab = jnp.concatenate(parts).reshape(1, -1)
    return slab, offsets


# ----------------------------- wrapper -----------------------------

def end2end_forward(input_indices, params, cfg):
    B, S = input_indices.shape
    L, M, V = cfg["signal_length"], cfg["m_tokens"], cfg["token_vocab_size"]
    E, C = cfg["token_embedding_dim"], cfg["char_vocab_size"]
    H, NL, F = cfg["num_heads"], cfg["num_layers"], cfg["dim_feedforward"]
    OUTW = ((M * V + C + 127) // 128) * 128

    # tiny JAX glue: prime-frequency gather + per-position repeat for the fused sin arg
    freqs = jnp.take(params["prime_tensor"], input_indices).astype(jnp.float32)   # (B, S)
    freqs_rep = jnp.repeat(freqs, L, axis=1)                                       # (B, S*L)

    # trace-time constant: 2*pi * cyclically shifted time vectors, flattened
    t = np.linspace(0.0, 1.0, L, dtype=np.float32)
    jj = np.arange(L)[None, :]
    ii = np.arange(S)[:, None]
    tvals_flat = jnp.asarray((2.0 * np.pi * t[(jj - ii) % L]).reshape(1, S * L))

    # ---- packed matmul weights ----
    attn_list = [params["token_attn"], params["refiner_attn"]] + \
                [lyr["attn"] for lyr in params["transformer_layers"]]
    qkv_w_all = jnp.concatenate(
        [jnp.concatenate([a["wq"], a["wk"], a["wv"]], axis=1) for a in attn_list], axis=0)
    o_w_all = jnp.concatenate([a["wo"] for a in attn_list], axis=0)
    ff1_w_all = jnp.concatenate([lyr["ff_w1"] for lyr in params["transformer_layers"]], axis=1)
    ff2_w_all = jnp.concatenate([lyr["ff_w2"] for lyr in params["transformer_layers"]], axis=1)
    # decoder attention acts on a length-1 sequence -> softmax == 1 -> fold Wv@Wo offline
    da = params["dec_attn"]
    da_w = da["wv"] @ da["wo"]
    da_b = da["bv"] @ da["wo"] + da["bo"]
    dec_small_w = jnp.concatenate([da_w, params["dec_cd_w"]], axis=1)              # (V, V+C)

    # ---- one lane-aligned slab for every (1, N) bias / LayerNorm parameter ----
    segs = [("enc_b", params["enc_lin_b"])]
    for a_idx, a in enumerate(attn_list):
        segs.append((f"qkv_b{a_idx}", jnp.concatenate([a["bq"], a["bk"], a["bv"]])))
        segs.append((f"o_b{a_idx}", a["bo"]))
    ln_list = [params["token_norm"], params["refiner_norm"]]
    for lyr in params["transformer_layers"]:
        ln_list += [lyr["ln1"], lyr["ln2"]]
    for idx, (g, b) in enumerate(ln_list):
        segs.append((f"ln_g{idx}", g))
        segs.append((f"ln_b{idx}", b))
    for l, lyr in enumerate(params["transformer_layers"]):
        segs.append((f"ff_b1_{l}", lyr["ff_b1"]))
        segs.append((f"ff_b2_{l}", lyr["ff_b2"]))
    segs += [("pp_b", params["dec_pp_b"]), ("da_b", da_b),
             ("dec_ln_g", params["dec_norm"][0]), ("dec_ln_b", params["dec_norm"][1]),
             ("cd_b", params["dec_cd_b"])]
    bias_slab, boff = _pack_bias_slab(segs)

    inputs = [freqs_rep, tvals_flat, params["enc_lin_w"], params["token_embedding"],
              qkv_w_all, o_w_all, ff1_w_all, ff2_w_all,
              params["dec_pp_w"], dec_small_w, bias_slab]

    kernel = partial(_fused_forward_kernel, B=B, S=S, L=L, M=M, V=V, E=E, H=H,
                     NL=NL, F=F, C=C, OUTW=OUTW, boff=boff)
    out = pl.pallas_call(
        kernel,
        out_shape=jax.ShapeDtypeStruct((B, OUTW), jnp.float32),
        in_specs=[pl.BlockSpec(memory_space=pltpu.MemorySpace.VMEM)] * len(inputs),
        out_specs=pl.BlockSpec(memory_space=pltpu.MemorySpace.VMEM),
    )(*inputs)

    char_logits = out[:, M * V:M * V + C]
    token_logits = out[:, :M * V].reshape(B, M, V)
    return char_logits, token_logits


# ----------------------------- deterministic parameter init -----------------------------

def _first_primes(n):
    primes = []
    c = 2
    while len(primes) < n:
        if all(c % p for p in primes):
            primes.append(c)
        c += 1
    return primes


def _dense(key, din, dout, scale=0.05):
    kw, kb = jax.random.split(key)
    w = jax.random.normal(kw, (din, dout), jnp.float32) * scale
    b = jax.random.normal(kb, (dout,), jnp.float32) * scale
    return w, b


def _mha_params(key, d):
    ks = jax.random.split(key, 4)
    wq, bq = _dense(ks[0], d, d)
    wk, bk = _dense(ks[1], d, d)
    wv, bv = _dense(ks[2], d, d)
    wo, bo = _dense(ks[3], d, d)
    return dict(wq=wq, bq=bq, wk=wk, bk=bk, wv=wv, bv=bv, wo=wo, bo=bo)


def _ln_params(d):
    return jnp.ones((d,), jnp.float32), jnp.zeros((d,), jnp.float32)


def init_params(key, cfg):
    L, M, V = cfg["signal_length"], cfg["m_tokens"], cfg["token_vocab_size"]
    E, C, F = cfg["token_embedding_dim"], cfg["char_vocab_size"], cfg["dim_feedforward"]
    keys = iter(jax.random.split(key, 64))
    p = {}
    p["prime_tensor"] = jnp.asarray(_first_primes(C), jnp.float32)
    p["enc_lin_w"], p["enc_lin_b"] = _dense(next(keys), L, M * V)
    p["token_embedding"] = jax.random.normal(next(keys), (V, E), jnp.float32) * 0.05
    p["token_attn"] = _mha_params(next(keys), E)
    p["token_norm"] = _ln_params(E)
    p["refiner_attn"] = _mha_params(next(keys), E)
    p["refiner_norm"] = _ln_params(E)
    layers = []
    for _ in range(cfg["num_layers"]):
        lyr = dict(attn=_mha_params(next(keys), E), ln1=_ln_params(E), ln2=_ln_params(E))
        lyr["ff_w1"], lyr["ff_b1"] = _dense(next(keys), E, F)
        lyr["ff_w2"], lyr["ff_b2"] = _dense(next(keys), F, E)
        layers.append(lyr)
    p["transformer_layers"] = layers
    p["dec_pp_w"], p["dec_pp_b"] = _dense(next(keys), M * E, V)
    p["dec_attn"] = _mha_params(next(keys), V)
    p["dec_norm"] = _ln_params(V)
    p["dec_cd_w"], p["dec_cd_b"] = _dense(next(keys), V, C)
    return p


# ----------------------------- main -----------------------------

if __name__ == "__main__":
    cfg = dict(
        signal_length=64,
        seq_length=8,
        m_tokens=4,
        token_vocab_size=16,
        token_embedding_dim=32,
        char_vocab_size=24,
        num_heads=4,
        dim_feedforward=2048,   # nn.TransformerEncoderLayer default
        num_layers=2,
    )
    key = jax.random.PRNGKey(0)
    params = init_params(key, cfg)
    input_indices = jax.random.randint(
        jax.random.fold_in(key, 123), (2, cfg["seq_length"]), 0, cfg["char_vocab_size"]
    )

    fwd = jax.jit(partial(end2end_forward, cfg=cfg))
    char_logits, token_logits = fwd(input_indices, params)
    jax.block_until_ready((char_logits, token_logits))

    assert char_logits.shape == (2, cfg["char_vocab_size"])
    assert token_logits.shape == (2, cfg["m_tokens"], cfg["token_vocab_size"])
    assert bool(jnp.all(jnp.isfinite(char_logits))) and bool(jnp.all(jnp.isfinite(token_logits)))
    print("KERNEL_OK")
</pallas_src>

<mosaic_0001>
module attributes {stable_mosaic.version = 11 : i64} {
  func.func @_fused_forward_kernel(%arg0: memref<2x512xf32, #tpu.memory_space<vmem>>, %arg1: memref<1x512xf32, #tpu.memory_space<vmem>>, %arg2: memref<64x64xf32, #tpu.memory_space<vmem>>, %arg3: memref<16x32xf32, #tpu.memory_space<vmem>>, %arg4: memref<128x96xf32, #tpu.memory_space<vmem>>, %arg5: memref<128x32xf32, #tpu.memory_space<vmem>>, %arg6: memref<32x4096xf32, #tpu.memory_space<vmem>>, %arg7: memref<2048x64xf32, #tpu.memory_space<vmem>>, %arg8: memref<128x16xf32, #tpu.memory_space<vmem>>, %arg9: memref<16x40xf32, #tpu.memory_space<vmem>>, %arg10: memref<1x7680xf32, #tpu.memory_space<vmem>>, %arg11: memref<2x128xf32, #tpu.memory_space<vmem>>) attributes {dimension_semantics = [], scalar_prefetch = 0 : i64, scratch_operands = 0 : i64, tpu.core_type = #tpu.core_type<tc>} {
    %0 = tpu.iota {dimensions = array<i32: 0>} : vector<8x8xi32>
    %1 = tpu.iota {dimensions = array<i32: 1>} : vector<8x8xi32>
    %c2_i32 = arith.constant 2 : i32
    %c0_i32 = arith.constant 0 : i32
    %2 = arith.cmpi eq, %c2_i32, %c0_i32 : i32
    %c1_i32 = arith.constant 1 : i32
    %3 = arith.select %2, %c1_i32, %c2_i32 : i32
    %4 = vector.broadcast %3 : i32 to vector<8x8xi32>
    %5 = arith.remsi %0, %4 : vector<8x8xi32>
    %c0_i32_0 = arith.constant 0 : i32
    %6 = vector.broadcast %c0_i32_0 : i32 to vector<8x8xi32>
    %7 = arith.cmpi ne, %5, %6 : vector<8x8xi32>
    %c0_i32_1 = arith.constant 0 : i32
    %8 = vector.broadcast %c0_i32_1 : i32 to vector<8x8xi32>
    %9 = arith.cmpi slt, %5, %8 : vector<8x8xi32>
    %c0_i32_2 = arith.constant 0 : i32
    %10 = arith.cmpi slt, %3, %c0_i32_2 : i32
    %11 = vector.broadcast %10 : i1 to vector<8x8xi1>
    %12 = vector.broadcast %11 : vector<8x8xi1> to vector<8x8xi1>
    %13 = arith.xori %9, %12 : vector<8x8xi1>
    %14 = arith.andi %13, %7 : vector<8x8xi1>
    %15 = vector.broadcast %3 : i32 to vector<8x8xi32>
    %16 = arith.addi %5, %15 : vector<8x8xi32>
    %17 = arith.select %14, %16, %5 : vector<8x8xi1>, vector<8x8xi32>
    %c2_i32_3 = arith.constant 2 : i32
    %c0_i32_4 = arith.constant 0 : i32
    %18 = arith.cmpi eq, %c2_i32_3, %c0_i32_4 : i32
    %c1_i32_5 = arith.constant 1 : i32
    %19 = arith.select %18, %c1_i32_5, %c2_i32_3 : i32
    %20 = vector.broadcast %19 : i32 to vector<8x8xi32>
    %21 = arith.remsi %1, %20 : vector<8x8xi32>
    %c0_i32_6 = arith.constant 0 : i32
    %22 = vector.broadcast %c0_i32_6 : i32 to vector<8x8xi32>
    %23 = arith.cmpi ne, %21, %22 : vector<8x8xi32>
    %c0_i32_7 = arith.constant 0 : i32
    %24 = vector.broadcast %c0_i32_7 : i32 to vector<8x8xi32>
    %25 = arith.cmpi slt, %21, %24 : vector<8x8xi32>
    %c0_i32_8 = arith.constant 0 : i32
    %26 = arith.cmpi slt, %19, %c0_i32_8 : i32
    %27 = vector.broadcast %26 : i1 to vector<8x8xi1>
    %28 = vector.broadcast %27 : vector<8x8xi1> to vector<8x8xi1>
    %29 = arith.xori %25, %28 : vector<8x8xi1>
    %30 = arith.andi %29, %23 : vector<8x8xi1>
    %31 = vector.broadcast %19 : i32 to vector<8x8xi32>
    %32 = arith.addi %21, %31 : vector<8x8xi32>
    %33 = arith.select %30, %32, %21 : vector<8x8xi1>, vector<8x8xi32>
    %34 = arith.cmpi eq, %17, %33 : vector<8x8xi32>
    %cst = arith.constant 0.000000e+00 : f32
    %cst_9 = arith.constant -1.000000e+30 : f32
    %35 = vector.broadcast %cst : f32 to vector<8x8xf32>
    %36 = vector.broadcast %cst_9 : f32 to vector<8x8xf32>
    %37 = arith.select %34, %35, %36 : vector<8x8xi1>, vector<8x8xf32>
    %c0 = arith.constant 0 : index
    %c0_10 = arith.constant 0 : index
    %38 = vector.load %arg0[%c0, %c0_10] : memref<2x512xf32, #tpu.memory_space<vmem>>, vector<2x512xf32>
    %c0_11 = arith.constant 0 : index
    %c0_12 = arith.constant 0 : index
    %39 = vector.load %arg1[%c0_11, %c0_12] : memref<1x512xf32, #tpu.memory_space<vmem>>, vector<1x512xf32>
    %40 = vector.broadcast %39 : vector<1x512xf32> to vector<2x512xf32>
    %41 = arith.mulf %38, %40 : vector<2x512xf32>
    %42 = math.sin %41 : vector<2x512xf32>
    %43 = vector.extract_strided_slice %42 {offsets = [0, 0], sizes = [2, 64], strides = [1, 1]} : vector<2x512xf32> to vector<2x64xf32>
    %44 = vector.extract_strided_slice %42 {offsets = [0, 64], sizes = [2, 64], strides = [1, 1]} : vector<2x512xf32> to vector<2x64xf32>
    %45 = arith.addf %43, %44 : vector<2x64xf32>
    %46 = vector.extract_strided_slice %42 {offsets = [0, 128], sizes = [2, 64], strides = [1, 1]} : vector<2x512xf32> to vector<2x64xf32>
    %47 = arith.addf %45, %46 : vector<2x64xf32>
    %48 = vector.extract_strided_slice %42 {offsets = [0, 192], sizes = [2, 64], strides = [1, 1]} : vector<2x512xf32> to vector<2x64xf32>
    %49 = arith.addf %47, %48 : vector<2x64xf32>
    %50 = vector.extract_strided_slice %42 {offsets = [0, 256], sizes = [2, 64], strides = [1, 1]} : vector<2x512xf32> to vector<2x64xf32>
    %51 = arith.addf %49, %50 : vector<2x64xf32>
    %52 = vector.extract_strided_slice %42 {offsets = [0, 320], sizes = [2, 64], strides = [1, 1]} : vector<2x512xf32> to vector<2x64xf32>
    %53 = arith.addf %51, %52 : vector<2x64xf32>
    %54 = vector.extract_strided_slice %42 {offsets = [0, 384], sizes = [2, 64], strides = [1, 1]} : vector<2x512xf32> to vector<2x64xf32>
    %55 = arith.addf %53, %54 : vector<2x64xf32>
    %56 = vector.extract_strided_slice %42 {offsets = [0, 448], sizes = [2, 64], strides = [1, 1]} : vector<2x512xf32> to vector<2x64xf32>
    %57 = arith.addf %55, %56 : vector<2x64xf32>
    %58 = arith.mulf %57, %57 : vector<2x64xf32>
    %cst_13 = arith.constant dense<0.000000e+00> : vector<2xf32>
    %59 = vector.multi_reduction <add>, %58, %cst_13 [1] : vector<2x64xf32> to vector<2xf32>
    %60 = vector.shape_cast %59 : vector<2xf32> to vector<2x1xf32>
    %61 = math.sqrt %60 : vector<2x1xf32>
    %cst_14 = arith.constant 9.99999993E-9 : f32
    %62 = vector.broadcast %cst_14 : f32 to vector<2x1xf32>
    %63 = arith.addf %61, %62 : vector<2x1xf32>
    %64 = vector.broadcast %63 : vector<2x1xf32> to vector<2x64xf32>
    %65 = arith.divf %57, %64 : vector<2x64xf32>
    %c0_15 = arith.constant 0 : index
    %c0_16 = arith.constant 0 : index
    %66 = vector.load %arg2[%c0_15, %c0_16] : memref<64x64xf32, #tpu.memory_space<vmem>>, vector<64x64xf32>
    %cst_17 = arith.constant dense<0.000000e+00> : vector<2x64xf32>
    %67 = tpu.matmul %65, %66, %cst_17 {dimension_numbers = #tpu.dot_dimension_numbers<[1], [0], [0], [1], [0, 0, 1, 1], [], []>} : vector<2x64xf32>, vector<64x64xf32>, vector<2x64xf32> -> vector<2x64xf32>
    %c0_18 = arith.constant 0 : index
    %c0_19 = arith.constant 0 : index
    %68 = vector.load %arg10[%c0_18, %c0_19] : memref<1x7680xf32, #tpu.memory_space<vmem>>, vector<1x64xf32>
    %69 = vector.broadcast %68 : vector<1x64xf32> to vector<2x64xf32>
    %70 = arith.addf %67, %69 : vector<2x64xf32>
    %71 = vector.extract_strided_slice %70 {offsets = [0, 0], sizes = [2, 16], strides = [1, 1]} : vector<2x64xf32> to vector<2x16xf32>
    %72 = vector.extract_strided_slice %70 {offsets = [0, 16], sizes = [2, 16], strides = [1, 1]} : vector<2x64xf32> to vector<2x16xf32>
    %73 = vector.extract_strided_slice %70 {offsets = [0, 32], sizes = [2, 16], strides = [1, 1]} : vector<2x64xf32> to vector<2x16xf32>
    %74 = vector.extract_strided_slice %70 {offsets = [0, 48], sizes = [2, 16], strides = [1, 1]} : vector<2x64xf32> to vector<2x16xf32>
    %75 = tpu.concatenate %71, %72, %73, %74 in 0 : vector<2x16xf32>, vector<2x16xf32>, vector<2x16xf32>, vector<2x16xf32> -> vector<8x16xf32>
    %cst_20 = arith.constant dense<0xFF800000> : vector<8xf32>
    %76 = vector.multi_reduction <maximumf>, %75, %cst_20 [1] : vector<8x16xf32> to vector<8xf32>
    %77 = vector.shape_cast %76 : vector<8xf32> to vector<8x1xf32>
    %78 = vector.broadcast %77 : vector<8x1xf32> to vector<8x16xf32>
    %79 = arith.subf %75, %78 : vector<8x16xf32>
    %80 = math.exp %79 : vector<8x16xf32>
    %cst_21 = arith.constant dense<0.000000e+00> : vector<8xf32>
    %81 = vector.multi_reduction <add>, %80, %cst_21 [1] : vector<8x16xf32> to vector<8xf32>
    %82 = vector.shape_cast %81 : vector<8xf32> to vector<8x1xf32>
    %83 = vector.broadcast %82 : vector<8x1xf32> to vector<8x16xf32>
    %84 = arith.divf %80, %83 : vector<8x16xf32>
    %c0_22 = arith.constant 0 : index
    %c0_23 = arith.constant 0 : index
    %85 = vector.load %arg3[%c0_22, %c0_23] : memref<16x32xf32, #tpu.memory_space<vmem>>, vector<16x32xf32>
    %cst_24 = arith.constant dense<0.000000e+00> : vector<8x32xf32>
    %86 = tpu.matmul %84, %85, %cst_24 {dimension_numbers = #tpu.dot_dimension_numbers<[1], [0], [0], [1], [0, 0, 1, 1], [], []>} : vector<8x16xf32>, vector<16x32xf32>, vector<8x32xf32> -> vector<8x32xf32>
    %c0_25 = arith.constant 0 : index
    %c0_26 = arith.constant 0 : index
    %87 = vector.load %arg4[%c0_25, %c0_26] : memref<128x96xf32, #tpu.memory_space<vmem>>, vector<32x96xf32>
    %c0_27 = arith.constant 0 : index
    %c0_28 = arith.constant 0 : index
    %88 = vector.load %arg5[%c0_27, %c0_28] : memref<128x32xf32, #tpu.memory_space<vmem>>, vector<32x32xf32>
    %cst_29 = arith.constant dense<0.000000e+00> : vector<8x96xf32>
    %89 = tpu.matmul %86, %87, %cst_29 {dimension_numbers = #tpu.dot_dimension_numbers<[1], [0], [0], [1], [0, 0, 1, 1], [], []>} : vector<8x32xf32>, vector<32x96xf32>, vector<8x96xf32> -> vector<8x96xf32>
    %c0_30 = arith.constant 0 : index
    %c128 = arith.constant 128 : index
    %90 = vector.load %arg10[%c0_30, %c128] : memref<1x7680xf32, #tpu.memory_space<vmem>>, vector<1x96xf32>
    %91 = vector.broadcast %90 : vector<1x96xf32> to vector<8x96xf32>
    %92 = arith.addf %89, %91 : vector<8x96xf32>
    %93 = vector.extract_strided_slice %92 {offsets = [0, 0], sizes = [8, 8], strides = [1, 1]} : vector<8x96xf32> to vector<8x8xf32>
    %94 = vector.extract_strided_slice %92 {offsets = [0, 32], sizes = [8, 8], strides = [1, 1]} : vector<8x96xf32> to vector<8x8xf32>
    %95 = vector.extract_strided_slice %92 {offsets = [0, 64], sizes = [8, 8], strides = [1, 1]} : vector<8x96xf32> to vector<8x8xf32>
    %cst_31 = arith.constant dense<0.000000e+00> : vector<8x8xf32>
    %96 = tpu.matmul %93, %94, %cst_31 {dimension_numbers = #tpu.dot_dimension_numbers<[1], [1], [0], [0], [0, 0, 1, 0], [], []>} : vector<8x8xf32>, vector<8x8xf32>, vector<8x8xf32> -> vector<8x8xf32>
    %cst_32 = arith.constant 0.353553385 : f32
    %97 = vector.broadcast %cst_32 : f32 to vector<8x8xf32>
    %98 = arith.mulf %96, %97 : vector<8x8xf32>
    %99 = arith.addf %98, %37 : vector<8x8xf32>
    %cst_33 = arith.constant dense<0xFF800000> : vector<8xf32>
    %100 = vector.multi_reduction <maximumf>, %99, %cst_33 [1] : vector<8x8xf32> to vector<8xf32>
    %101 = vector.shape_cast %100 : vector<8xf32> to vector<8x1xf32>
    %102 = vector.broadcast %101 : vector<8x1xf32> to vector<8x8xf32>
    %103 = arith.subf %99, %102 : vector<8x8xf32>
    %104 = math.exp %103 : vector<8x8xf32>
    %cst_34 = arith.constant dense<0.000000e+00> : vector<8xf32>
    %105 = vector.multi_reduction <add>, %104, %cst_34 [1] : vector<8x8xf32> to vector<8xf32>
    %106 = vector.shape_cast %105 : vector<8xf32> to vector<8x1xf32>
    %107 = vector.broadcast %106 : vector<8x1xf32> to vector<8x8xf32>
    %108 = arith.divf %104, %107 : vector<8x8xf32>
    %cst_35 = arith.constant dense<0.000000e+00> : vector<8x8xf32>
    %109 = tpu.matmul %108, %95, %cst_35 {dimension_numbers = #tpu.dot_dimension_numbers<[1], [0], [0], [1], [0, 0, 1, 1], [], []>} : vector<8x8xf32>, vector<8x8xf32>, vector<8x8xf32> -> vector<8x8xf32>
    %110 = vector.extract_strided_slice %92 {offsets = [0, 8], sizes = [8, 8], strides = [1, 1]} : vector<8x96xf32> to vector<8x8xf32>
    %111 = vector.extract_strided_slice %92 {offsets = [0, 40], sizes = [8, 8], strides = [1, 1]} : vector<8x96xf32> to vector<8x8xf32>
    %112 = vector.extract_strided_slice %92 {offsets = [0, 72], sizes = [8, 8], strides = [1, 1]} : vector<8x96xf32> to vector<8x8xf32>
    %cst_36 = arith.constant dense<0.000000e+00> : vector<8x8xf32>
    %113 = tpu.matmul %110, %111, %cst_36 {dimension_numbers = #tpu.dot_dimension_numbers<[1], [1], [0], [0], [0, 0, 1, 0], [], []>} : vector<8x8xf32>, vector<8x8xf32>, vector<8x8xf32> -> vector<8x8xf32>
    %cst_37 = arith.constant 0.353553385 : f32
    %114 = vector.broadcast %cst_37 : f32 to vector<8x8xf32>
    %115 = arith.mulf %113, %114 : vector<8x8xf32>
    %116 = arith.addf %115, %37 : vector<8x8xf32>
    %cst_38 = arith.constant dense<0xFF800000> : vector<8xf32>
    %117 = vector.multi_reduction <maximumf>, %116, %cst_38 [1] : vector<8x8xf32> to vector<8xf32>
    %118 = vector.shape_cast %117 : vector<8xf32> to vector<8x1xf32>
    %119 = vector.broadcast %118 : vector<8x1xf32> to vector<8x8xf32>
    %120 = arith.subf %116, %119 : vector<8x8xf32>
    %121 = math.exp %120 : vector<8x8xf32>
    %cst_39 = arith.constant dense<0.000000e+00> : vector<8xf32>
    %122 = vector.multi_reduction <add>, %121, %cst_39 [1] : vector<8x8xf32> to vector<8xf32>
    %123 = vector.shape_cast %122 : vector<8xf32> to vector<8x1xf32>
    %124 = vector.broadcast %123 : vector<8x1xf32> to vector<8x8xf32>
    %125 = arith.divf %121, %124 : vector<8x8xf32>
    %cst_40 = arith.constant dense<0.000000e+00> : vector<8x8xf32>
    %126 = tpu.matmul %125, %112, %cst_40 {dimension_numbers = #tpu.dot_dimension_numbers<[1], [0], [0], [1], [0, 0, 1, 1], [], []>} : vector<8x8xf32>, vector<8x8xf32>, vector<8x8xf32> -> vector<8x8xf32>
    %127 = vector.extract_strided_slice %92 {offsets = [0, 16], sizes = [8, 8], strides = [1, 1]} : vector<8x96xf32> to vector<8x8xf32>
    %128 = vector.extract_strided_slice %92 {offsets = [0, 48], sizes = [8, 8], strides = [1, 1]} : vector<8x96xf32> to vector<8x8xf32>
    %129 = vector.extract_strided_slice %92 {offsets = [0, 80], sizes = [8, 8], strides = [1, 1]} : vector<8x96xf32> to vector<8x8xf32>
    %cst_41 = arith.constant dense<0.000000e+00> : vector<8x8xf32>
    %130 = tpu.matmul %127, %128, %cst_41 {dimension_numbers = #tpu.dot_dimension_numbers<[1], [1], [0], [0], [0, 0, 1, 0], [], []>} : vector<8x8xf32>, vector<8x8xf32>, vector<8x8xf32> -> vector<8x8xf32>
    %cst_42 = arith.constant 0.353553385 : f32
    %131 = vector.broadcast %cst_42 : f32 to vector<8x8xf32>
    %132 = arith.mulf %130, %131 : vector<8x8xf32>
    %133 = arith.addf %132, %37 : vector<8x8xf32>
    %cst_43 = arith.constant dense<0xFF800000> : vector<8xf32>
    %134 = vector.multi_reduction <maximumf>, %133, %cst_43 [1] : vector<8x8xf32> to vector<8xf32>
    %135 = vector.shape_cast %134 : vector<8xf32> to vector<8x1xf32>
    %136 = vector.broadcast %135 : vector<8x1xf32> to vector<8x8xf32>
    %137 = arith.subf %133, %136 : vector<8x8xf32>
    %138 = math.exp %137 : vector<8x8xf32>
    %cst_44 = arith.constant dense<0.000000e+00> : vector<8xf32>
    %139 = vector.multi_reduction <add>, %138, %cst_44 [1] : vector<8x8xf32> to vector<8xf32>
    %140 = vector.shape_cast %139 : vector<8xf32> to vector<8x1xf32>
    %141 = vector.broadcast %140 : vector<8x1xf32> to vector<8x8xf32>
    %142 = arith.divf %138, %141 : vector<8x8xf32>
    %cst_45 = arith.constant dense<0.000000e+00> : vector<8x8xf32>
    %143 = tpu.matmul %142, %129, %cst_45 {dimension_numbers = #tpu.dot_dimension_numbers<[1], [0], [0], [1], [0, 0, 1, 1], [], []>} : vector<8x8xf32>, vector<8x8xf32>, vector<8x8xf32> -> vector<8x8xf32>
    %144 = vector.extract_strided_slice %92 {offsets = [0, 24], sizes = [8, 8], strides = [1, 1]} : vector<8x96xf32> to vector<8x8xf32>
    %145 = vector.extract_strided_slice %92 {offsets = [0, 56], sizes = [8, 8], strides = [1, 1]} : vector<8x96xf32> to vector<8x8xf32>
    %146 = vector.extract_strided_slice %92 {offsets = [0, 88], sizes = [8, 8], strides = [1, 1]} : vector<8x96xf32> to vector<8x8xf32>
    %cst_46 = arith.constant dense<0.000000e+00> : vector<8x8xf32>
    %147 = tpu.matmul %144, %145, %cst_46 {dimension_numbers = #tpu.dot_dimension_numbers<[1], [1], [0], [0], [0, 0, 1, 0], [], []>} : vector<8x8xf32>, vector<8x8xf32>, vector<8x8xf32> -> vector<8x8xf32>
    %cst_47 = arith.constant 0.353553385 : f32
    %148 = vector.broadcast %cst_47 : f32 to vector<8x8xf32>
    %149 = arith.mulf %147, %148 : vector<8x8xf32>
    %150 = arith.addf %149, %37 : vector<8x8xf32>
    %cst_48 = arith.constant dense<0xFF800000> : vector<8xf32>
    %151 = vector.multi_reduction <maximumf>, %150, %cst_48 [1] : vector<8x8xf32> to vector<8xf32>
    %152 = vector.shape_cast %151 : vector<8xf32> to vector<8x1xf32>
    %153 = vector.broadcast %152 : vector<8x1xf32> to vector<8x8xf32>
    %154 = arith.subf %150, %153 : vector<8x8xf32>
    %155 = math.exp %154 : vector<8x8xf32>
    %cst_49 = arith.constant dense<0.000000e+00> : vector<8xf32>
    %156 = vector.multi_reduction <add>, %155, %cst_49 [1] : vector<8x8xf32> to vector<8xf32>
    %157 = vector.shape_cast %156 : vector<8xf32> to vector<8x1xf32>
    %158 = vector.broadcast %157 : vector<8x1xf32> to vector<8x8xf32>
    %159 = arith.divf %155, %158 : vector<8x8xf32>
    %cst_50 = arith.constant dense<0.000000e+00> : vector<8x8xf32>
    %160 = tpu.matmul %159, %146, %cst_50 {dimension_numbers = #tpu.dot_dimension_numbers<[1], [0], [0], [1], [0, 0, 1, 1], [], []>} : vector<8x8xf32>, vector<8x8xf32>, vector<8x8xf32> -> vector<8x8xf32>
    %161 = tpu.concatenate %109, %126, %143, %160 in 1 : vector<8x8xf32>, vector<8x8xf32>, vector<8x8xf32>, vector<8x8xf32> -> vector<8x32xf32>
    %cst_51 = arith.constant dense<0.000000e+00> : vector<8x32xf32>
    %162 = tpu.matmul %161, %88, %cst_51 {dimension_numbers = #tpu.dot_dimension_numbers<[1], [0], [0], [1], [0, 0, 1, 1], [], []>} : vector<8x32xf32>, vector<32x32xf32>, vector<8x32xf32> -> vector<8x32xf32>
    %c0_52 = arith.constant 0 : index
    %c256 = arith.constant 256 : index
    %163 = vector.load %arg10[%c0_52, %c256] : memref<1x7680xf32, #tpu.memory_space<vmem>>, vector<1x32xf32>
    %164 = vector.broadcast %163 : vector<1x32xf32> to vector<8x32xf32>
    %165 = arith.addf %162, %164 : vector<8x32xf32>
    %166 = arith.addf %86, %165 : vector<8x32xf32>
    %cst_53 = arith.constant dense<0.000000e+00> : vector<8xf32>
    %167 = vector.multi_reduction <add>, %166, %cst_53 [1] : vector<8x32xf32> to vector<8xf32>
    %168 = vector.shape_cast %167 : vector<8xf32> to vector<8x1xf32>
    %cst_54 = arith.constant 3.200000e+01 : f32
    %169 = vector.broadcast %cst_54 : f32 to vector<8x1xf32>
    %170 = arith.divf %168, %169 : vector<8x1xf32>
    %171 = vector.broadcast %170 : vector<8x1xf32> to vector<8x32xf32>
    %172 = arith.subf %166, %171 : vector<8x32xf32>
    %173 = arith.mulf %172, %172 : vector<8x32xf32>
    %cst_55 = arith.constant dense<0.000000e+00> : vector<8xf32>
    %174 = vector.multi_reduction <add>, %173, %cst_55 [1] : vector<8x32xf32> to vector<8xf32>
    %175 = vector.shape_cast %174 : vector<8xf32> to vector<8x1xf32>
    %cst_56 = arith.constant 3.200000e+01 : f32
    %176 = vector.broadcast %cst_56 : f32 to vector<8x1xf32>
    %177 = arith.divf %175, %176 : vector<8x1xf32>
    %178 = vector.broadcast %170 : vector<8x1xf32> to vector<8x32xf32>
    %179 = arith.subf %166, %178 : vector<8x32xf32>
    %cst_57 = arith.constant 9.99999974E-6 : f32
    %180 = vector.broadcast %cst_57 : f32 to vector<8x1xf32>
    %181 = arith.addf %177, %180 : vector<8x1xf32>
    %182 = math.rsqrt %181 : vector<8x1xf32>
    %183 = vector.broadcast %182 : vector<8x1xf32> to vector<8x32xf32>
    %184 = arith.mulf %179, %183 : vector<8x32xf32>
    %c0_58 = arith.constant 0 : index
    %c1152 = arith.constant 1152 : index
    %185 = vector.load %arg10[%c0_58, %c1152] : memref<1x7680xf32, #tpu.memory_space<vmem>>, vector<1x32xf32>
    %186 = vector.broadcast %185 : vector<1x32xf32> to vector<8x32xf32>
    %187 = arith.mulf %184, %186 : vector<8x32xf32>
    %c0_59 = arith.constant 0 : index
    %c1280 = arith.constant 1280 : index
    %188 = vector.load %arg10[%c0_59, %c1280] : memref<1x7680xf32, #tpu.memory_space<vmem>>, vector<1x32xf32>
    %189 = vector.broadcast %188 : vector<1x32xf32> to vector<8x32xf32>
    %190 = arith.addf %187, %189 : vector<8x32xf32>
    %c32 = arith.constant 32 : index
    %c0_60 = arith.constant 0 : index
    %191 = vector.load %arg4[%c32, %c0_60] : memref<128x96xf32, #tpu.memory_space<vmem>>, vector<32x96xf32>
    %c32_61 = arith.constant 32 : index
    %c0_62 = arith.constant 0 : index
    %192 = vector.load %arg5[%c32_61, %c0_62] : memref<128x32xf32, #tpu.memory_space<vmem>>, vector<32x32xf32>
    %cst_63 = arith.constant dense<0.000000e+00> : vector<8x96xf32>
    %193 = tpu.matmul %190, %191, %cst_63 {dimension_numbers = #tpu.dot_dimension_numbers<[1], [0], [0], [1], [0, 0, 1, 1], [], []>} : vector<8x32xf32>, vector<32x96xf32>, vector<8x96xf32> -> vector<8x96xf32>
    %c0_64 = arith.constant 0 : index
    %c384 = arith.constant 384 : index
    %194 = vector.load %arg10[%c0_64, %c384] : memref<1x7680xf32, #tpu.memory_space<vmem>>, vector<1x96xf32>
    %195 = vector.broadcast %194 : vector<1x96xf32> to vector<8x96xf32>
    %196 = arith.addf %193, %195 : vector<8x96xf32>
    %197 = vector.extract_strided_slice %196 {offsets = [0, 0], sizes = [8, 8], strides = [1, 1]} : vector<8x96xf32> to vector<8x8xf32>
    %198 = vector.extract_strided_slice %196 {offsets = [0, 32], sizes = [8, 8], strides = [1, 1]} : vector<8x96xf32> to vector<8x8xf32>
    %199 = vector.extract_strided_slice %196 {offsets = [0, 64], sizes = [8, 8], strides = [1, 1]} : vector<8x96xf32> to vector<8x8xf32>
    %cst_65 = arith.constant dense<0.000000e+00> : vector<8x8xf32>
    %200 = tpu.matmul %197, %198, %cst_65 {dimension_numbers = #tpu.dot_dimension_numbers<[1], [1], [0], [0], [0, 0, 1, 0], [], []>} : vector<8x8xf32>, vector<8x8xf32>, vector<8x8xf32> -> vector<8x8xf32>
    %cst_66 = arith.constant 0.353553385 : f32
    %201 = vector.broadcast %cst_66 : f32 to vector<8x8xf32>
    %202 = arith.mulf %200, %201 : vector<8x8xf32>
    %203 = arith.addf %202, %37 : vector<8x8xf32>
    %cst_67 = arith.constant dense<0xFF800000> : vector<8xf32>
    %204 = vector.multi_reduction <maximumf>, %203, %cst_67 [1] : vector<8x8xf32> to vector<8xf32>
    %205 = vector.shape_cast %204 : vector<8xf32> to vector<8x1xf32>
    %206 = vector.broadcast %205 : vector<8x1xf32> to vector<8x8xf32>
    %207 = arith.subf %203, %206 : vector<8x8xf32>
    %208 = math.exp %207 : vector<8x8xf32>
    %cst_68 = arith.constant dense<0.000000e+00> : vector<8xf32>
    %209 = vector.multi_reduction <add>, %208, %cst_68 [1] : vector<8x8xf32> to vector<8xf32>
    %210 = vector.shape_cast %209 : vector<8xf32> to vector<8x1xf32>
    %211 = vector.broadcast %210 : vector<8x1xf32> to vector<8x8xf32>
    %212 = arith.divf %208, %211 : vector<8x8xf32>
    %cst_69 = arith.constant dense<0.000000e+00> : vector<8x8xf32>
    %213 = tpu.matmul %212, %199, %cst_69 {dimension_numbers = #tpu.dot_dimension_numbers<[1], [0], [0], [1], [0, 0, 1, 1], [], []>} : vector<8x8xf32>, vector<8x8xf32>, vector<8x8xf32> -> vector<8x8xf32>
    %214 = vector.extract_strided_slice %196 {offsets = [0, 8], sizes = [8, 8], strides = [1, 1]} : vector<8x96xf32> to vector<8x8xf32>
    %215 = vector.extract_strided_slice %196 {offsets = [0, 40], sizes = [8, 8], strides = [1, 1]} : vector<8x96xf32> to vector<8x8xf32>
    %216 = vector.extract_strided_slice %196 {offsets = [0, 72], sizes = [8, 8], strides = [1, 1]} : vector<8x96xf32> to vector<8x8xf32>
    %cst_70 = arith.constant dense<0.000000e+00> : vector<8x8xf32>
    %217 = tpu.matmul %214, %215, %cst_70 {dimension_numbers = #tpu.dot_dimension_numbers<[1], [1], [0], [0], [0, 0, 1, 0], [], []>} : vector<8x8xf32>, vector<8x8xf32>, vector<8x8xf32> -> vector<8x8xf32>
    %cst_71 = arith.constant 0.353553385 : f32
    %218 = vector.broadcast %cst_71 : f32 to vector<8x8xf32>
    %219 = arith.mulf %217, %218 : vector<8x8xf32>
    %220 = arith.addf %219, %37 : vector<8x8xf32>
    %cst_72 = arith.constant dense<0xFF800000> : vector<8xf32>
    %221 = vector.multi_reduction <maximumf>, %220, %cst_72 [1] : vector<8x8xf32> to vector<8xf32>
    %222 = vector.shape_cast %221 : vector<8xf32> to vector<8x1xf32>
    %223 = vector.broadcast %222 : vector<8x1xf32> to vector<8x8xf32>
    %224 = arith.subf %220, %223 : vector<8x8xf32>
    %225 = math.exp %224 : vector<8x8xf32>
    %cst_73 = arith.constant dense<0.000000e+00> : vector<8xf32>
    %226 = vector.multi_reduction <add>, %225, %cst_73 [1] : vector<8x8xf32> to vector<8xf32>
    %227 = vector.shape_cast %226 : vector<8xf32> to vector<8x1xf32>
    %228 = vector.broadcast %227 : vector<8x1xf32> to vector<8x8xf32>
    %229 = arith.divf %225, %228 : vector<8x8xf32>
    %cst_74 = arith.constant dense<0.000000e+00> : vector<8x8xf32>
    %230 = tpu.matmul %229, %216, %cst_74 {dimension_numbers = #tpu.dot_dimension_numbers<[1], [0], [0], [1], [0, 0, 1, 1], [], []>} : vector<8x8xf32>, vector<8x8xf32>, vector<8x8xf32> -> vector<8x8xf32>
    %231 = vector.extract_strided_slice %196 {offsets = [0, 16], sizes = [8, 8], strides = [1, 1]} : vector<8x96xf32> to vector<8x8xf32>
    %232 = vector.extract_strided_slice %196 {offsets = [0, 48], sizes = [8, 8], strides = [1, 1]} : vector<8x96xf32> to vector<8x8xf32>
    %233 = vector.extract_strided_slice %196 {offsets = [0, 80], sizes = [8, 8], strides = [1, 1]} : vector<8x96xf32> to vector<8x8xf32>
    %cst_75 = arith.constant dense<0.000000e+00> : vector<8x8xf32>
    %234 = tpu.matmul %231, %232, %cst_75 {dimension_numbers = #tpu.dot_dimension_numbers<[1], [1], [0], [0], [0, 0, 1, 0], [], []>} : vector<8x8xf32>, vector<8x8xf32>, vector<8x8xf32> -> vector<8x8xf32>
    %cst_76 = arith.constant 0.353553385 : f32
    %235 = vector.broadcast %cst_76 : f32 to vector<8x8xf32>
    %236 = arith.mulf %234, %235 : vector<8x8xf32>
    %237 = arith.addf %236, %37 : vector<8x8xf32>
    %cst_77 = arith.constant dense<0xFF800000> : vector<8xf32>
    %238 = vector.multi_reduction <maximumf>, %237, %cst_77 [1] : vector<8x8xf32> to vector<8xf32>
    %239 = vector.shape_cast %238 : vector<8xf32> to vector<8x1xf32>
    %240 = vector.broadcast %239 : vector<8x1xf32> to vector<8x8xf32>
    %241 = arith.subf %237, %240 : vector<8x8xf32>
    %242 = math.exp %241 : vector<8x8xf32>
    %cst_78 = arith.constant dense<0.000000e+00> : vector<8xf32>
    %243 = vector.multi_reduction <add>, %242, %cst_78 [1] : vector<8x8xf32> to vector<8xf32>
    %244 = vector.shape_cast %243 : vector<8xf32> to vector<8x1xf32>
    %245 = vector.broadcast %244 : vector<8x1xf32> to vector<8x8xf32>
    %246 = arith.divf %242, %245 : vector<8x8xf32>
    %cst_79 = arith.constant dense<0.000000e+00> : vector<8x8xf32>
    %247 = tpu.matmul %246, %233, %cst_79 {dimension_numbers = #tpu.dot_dimension_numbers<[1], [0], [0], [1], [0, 0, 1, 1], [], []>} : vector<8x8xf32>, vector<8x8xf32>, vector<8x8xf32> -> vector<8x8xf32>
    %248 = vector.extract_strided_slice %196 {offsets = [0, 24], sizes = [8, 8], strides = [1, 1]} : vector<8x96xf32> to vector<8x8xf32>
    %249 = vector.extract_strided_slice %196 {offsets = [0, 56], sizes = [8, 8], strides = [1, 1]} : vector<8x96xf32> to vector<8x8xf32>
    %250 = vector.extract_strided_slice %196 {offsets = [0, 88], sizes = [8, 8], strides = [1, 1]} : vector<8x96xf32> to vector<8x8xf32>
    %cst_80 = arith.constant dense<0.000000e+00> : vector<8x8xf32>
    %251 = tpu.matmul %248, %249, %cst_80 {dimension_numbers = #tpu.dot_dimension_numbers<[1], [1], [0], [0], [0, 0, 1, 0], [], []>} : vector<8x8xf32>, vector<8x8xf32>, vector<8x8xf32> -> vector<8x8xf32>
    %cst_81 = arith.constant 0.353553385 : f32
    %252 = vector.broadcast %cst_81 : f32 to vector<8x8xf32>
    %253 = arith.mulf %251, %252 : vector<8x8xf32>
    %254 = arith.addf %253, %37 : vector<8x8xf32>
    %cst_82 = arith.constant dense<0xFF800000> : vector<8xf32>
    %255 = vector.multi_reduction <maximumf>, %254, %cst_82 [1] : vector<8x8xf32> to vector<8xf32>
    %256 = vector.shape_cast %255 : vector<8xf32> to vector<8x1xf32>
    %257 = vector.broadcast %256 : vector<8x1xf32> to vector<8x8xf32>
    %258 = arith.subf %254, %257 : vector<8x8xf32>
    %259 = math.exp %258 : vector<8x8xf32>
    %cst_83 = arith.constant dense<0.000000e+00> : vector<8xf32>
    %260 = vector.multi_reduction <add>, %259, %cst_83 [1] : vector<8x8xf32> to vector<8xf32>
    %261 = vector.shape_cast %260 : vector<8xf32> to vector<8x1xf32>
    %262 = vector.broadcast %261 : vector<8x1xf32> to vector<8x8xf32>
    %263 = arith.divf %259, %262 : vector<8x8xf32>
    %cst_84 = arith.constant dense<0.000000e+00> : vector<8x8xf32>
    %264 = tpu.matmul %263, %250, %cst_84 {dimension_numbers = #tpu.dot_dimension_numbers<[1], [0], [0], [1], [0, 0, 1, 1], [], []>} : vector<8x8xf32>, vector<8x8xf32>, vector<8x8xf32> -> vector<8x8xf32>
    %265 = tpu.concatenate %213, %230, %247, %264 in 1 : vector<8x8xf32>, vector<8x8xf32>, vector<8x8xf32>, vector<8x8xf32> -> vector<8x32xf32>
    %cst_85 = arith.constant dense<0.000000e+00> : vector<8x32xf32>
    %266 = tpu.matmul %265, %192, %cst_85 {dimension_numbers = #tpu.dot_dimension_numbers<[1], [0], [0], [1], [0, 0, 1, 1], [], []>} : vector<8x32xf32>, vector<32x32xf32>, vector<8x32xf32> -> vector<8x32xf32>
    %c0_86 = arith.constant 0 : index
    %c512 = arith.constant 512 : index
    %267 = vector.load %arg10[%c0_86, %c512] : memref<1x7680xf32, #tpu.memory_space<vmem>>, vector<1x32xf32>
    %268 = vector.broadcast %267 : vector<1x32xf32> to vector<8x32xf32>
    %269 = arith.addf %266, %268 : vector<8x32xf32>
    %270 = arith.addf %190, %269 : vector<8x32xf32>
    %cst_87 = arith.constant dense<0.000000e+00> : vector<8xf32>
    %271 = vector.multi_reduction <add>, %270, %cst_87 [1] : vector<8x32xf32> to vector<8xf32>
    %272 = vector.shape_cast %271 : vector<8xf32> to vector<8x1xf32>
    %cst_88 = arith.constant 3.200000e+01 : f32
    %273 = vector.broadcast %cst_88 : f32 to vector<8x1xf32>
    %274 = arith.divf %272, %273 : vector<8x1xf32>
    %275 = vector.broadcast %274 : vector<8x1xf32> to vector<8x32xf32>
    %276 = arith.subf %270, %275 : vector<8x32xf32>
    %277 = arith.mulf %276, %276 : vector<8x32xf32>
    %cst_89 = arith.constant dense<0.000000e+00> : vector<8xf32>
    %278 = vector.multi_reduction <add>, %277, %cst_89 [1] : vector<8x32xf32> to vector<8xf32>
    %279 = vector.shape_cast %278 : vector<8xf32> to vector<8x1xf32>
    %cst_90 = arith.constant 3.200000e+01 : f32
    %280 = vector.broadcast %cst_90 : f32 to vector<8x1xf32>
    %281 = arith.divf %279, %280 : vector<8x1xf32>
    %282 = vector.broadcast %274 : vector<8x1xf32> to vector<8x32xf32>
    %283 = arith.subf %270, %282 : vector<8x32xf32>
    %cst_91 = arith.constant 9.99999974E-6 : f32
    %284 = vector.broadcast %cst_91 : f32 to vector<8x1xf32>
    %285 = arith.addf %281, %284 : vector<8x1xf32>
    %286 = math.rsqrt %285 : vector<8x1xf32>
    %287 = vector.broadcast %286 : vector<8x1xf32> to vector<8x32xf32>
    %288 = arith.mulf %283, %287 : vector<8x32xf32>
    %c0_92 = arith.constant 0 : index
    %c1408 = arith.constant 1408 : index
    %289 = vector.load %arg10[%c0_92, %c1408] : memref<1x7680xf32, #tpu.memory_space<vmem>>, vector<1x32xf32>
    %290 = vector.broadcast %289 : vector<1x32xf32> to vector<8x32xf32>
    %291 = arith.mulf %288, %290 : vector<8x32xf32>
    %c0_93 = arith.constant 0 : index
    %c1536 = arith.constant 1536 : index
    %292 = vector.load %arg10[%c0_93, %c1536] : memref<1x7680xf32, #tpu.memory_space<vmem>>, vector<1x32xf32>
    %293 = vector.broadcast %292 : vector<1x32xf32> to vector<8x32xf32>
    %294 = arith.addf %291, %293 : vector<8x32xf32>
    %c64 = arith.constant 64 : index
    %c0_94 = arith.constant 0 : index
    %295 = vector.load %arg4[%c64, %c0_94] : memref<128x96xf32, #tpu.memory_space<vmem>>, vector<32x96xf32>
    %c64_95 = arith.constant 64 : index
    %c0_96 = arith.constant 0 : index
    %296 = vector.load %arg5[%c64_95, %c0_96] : memref<128x32xf32, #tpu.memory_space<vmem>>, vector<32x32xf32>
    %cst_97 = arith.constant dense<0.000000e+00> : vector<8x96xf32>
    %297 = tpu.matmul %294, %295, %cst_97 {dimension_numbers = #tpu.dot_dimension_numbers<[1], [0], [0], [1], [0, 0, 1, 1], [], []>} : vector<8x32xf32>, vector<32x96xf32>, vector<8x96xf32> -> vector<8x96xf32>
    %c0_98 = arith.constant 0 : index
    %c640 = arith.constant 640 : index
    %298 = vector.load %arg10[%c0_98, %c640] : memref<1x7680xf32, #tpu.memory_space<vmem>>, vector<1x96xf32>
    %299 = vector.broadcast %298 : vector<1x96xf32> to vector<8x96xf32>
    %300 = arith.addf %297, %299 : vector<8x96xf32>
    %301 = vector.extract_strided_slice %300 {offsets = [0, 0], sizes = [8, 8], strides = [1, 1]} : vector<8x96xf32> to vector<8x8xf32>
    %302 = vector.extract_strided_slice %300 {offsets = [0, 32], sizes = [8, 8], strides = [1, 1]} : vector<8x96xf32> to vector<8x8xf32>
    %303 = vector.extract_strided_slice %300 {offsets = [0, 64], sizes = [8, 8], strides = [1, 1]} : vector<8x96xf32> to vector<8x8xf32>
    %cst_99 = arith.constant dense<0.000000e+00> : vector<8x8xf32>
    %304 = tpu.matmul %301, %302, %cst_99 {dimension_numbers = #tpu.dot_dimension_numbers<[1], [1], [0], [0], [0, 0, 1, 0], [], []>} : vector<8x8xf32>, vector<8x8xf32>, vector<8x8xf32> -> vector<8x8xf32>
    %cst_100 = arith.constant 0.353553385 : f32
    %305 = vector.broadcast %cst_100 : f32 to vector<8x8xf32>
    %306 = arith.mulf %304, %305 : vector<8x8xf32>
    %307 = arith.addf %306, %37 : vector<8x8xf32>
    %cst_101 = arith.constant dense<0xFF800000> : vector<8xf32>
    %308 = vector.multi_reduction <maximumf>, %307, %cst_101 [1] : vector<8x8xf32> to vector<8xf32>
    %309 = vector.shape_cast %308 : vector<8xf32> to vector<8x1xf32>
    %310 = vector.broadcast %309 : vector<8x1xf32> to vector<8x8xf32>
    %311 = arith.subf %307, %310 : vector<8x8xf32>
    %312 = math.exp %311 : vector<8x8xf32>
    %cst_102 = arith.constant dense<0.000000e+00> : vector<8xf32>
    %313 = vector.multi_reduction <add>, %312, %cst_102 [1] : vector<8x8xf32> to vector<8xf32>
    %314 = vector.shape_cast %313 : vector<8xf32> to vector<8x1xf32>
    %315 = vector.broadcast %314 : vector<8x1xf32> to vector<8x8xf32>
    %316 = arith.divf %312, %315 : vector<8x8xf32>
    %cst_103 = arith.constant dense<0.000000e+00> : vector<8x8xf32>
    %317 = tpu.matmul %316, %303, %cst_103 {dimension_numbers = #tpu.dot_dimension_numbers<[1], [0], [0], [1], [0, 0, 1, 1], [], []>} : vector<8x8xf32>, vector<8x8xf32>, vector<8x8xf32> -> vector<8x8xf32>
    %318 = vector.extract_strided_slice %300 {offsets = [0, 8], sizes = [8, 8], strides = [1, 1]} : vector<8x96xf32> to vector<8x8xf32>
    %319 = vector.extract_strided_slice %300 {offsets = [0, 40], sizes = [8, 8], strides = [1, 1]} : vector<8x96xf32> to vector<8x8xf32>
    %320 = vector.extract_strided_slice %300 {offsets = [0, 72], sizes = [8, 8], strides = [1, 1]} : vector<8x96xf32> to vector<8x8xf32>
    %cst_104 = arith.constant dense<0.000000e+00> : vector<8x8xf32>
    %321 = tpu.matmul %318, %319, %cst_104 {dimension_numbers = #tpu.dot_dimension_numbers<[1], [1], [0], [0], [0, 0, 1, 0], [], []>} : vector<8x8xf32>, vector<8x8xf32>, vector<8x8xf32> -> vector<8x8xf32>
    %cst_105 = arith.constant 0.353553385 : f32
    %322 = vector.broadcast %cst_105 : f32 to vector<8x8xf32>
    %323 = arith.mulf %321, %322 : vector<8x8xf32>
    %324 = arith.addf %323, %37 : vector<8x8xf32>
    %cst_106 = arith.constant dense<0xFF800000> : vector<8xf32>
    %325 = vector.multi_reduction <maximumf>, %324, %cst_106 [1] : vector<8x8xf32> to vector<8xf32>
    %326 = vector.shape_cast %325 : vector<8xf32> to vector<8x1xf32>
    %327 = vector.broadcast %326 : vector<8x1xf32> to vector<8x8xf32>
    %328 = arith.subf %324, %327 : vector<8x8xf32>
    %329 = math.exp %328 : vector<8x8xf32>
    %cst_107 = arith.constant dense<0.000000e+00> : vector<8xf32>
    %330 = vector.multi_reduction <add>, %329, %cst_107 [1] : vector<8x8xf32> to vector<8xf32>
    %331 = vector.shape_cast %330 : vector<8xf32> to vector<8x1xf32>
    %332 = vector.broadcast %331 : vector<8x1xf32> to vector<8x8xf32>
    %333 = arith.divf %329, %332 : vector<8x8xf32>
    %cst_108 = arith.constant dense<0.000000e+00> : vector<8x8xf32>
    %334 = tpu.matmul %333, %320, %cst_108 {dimension_numbers = #tpu.dot_dimension_numbers<[1], [0], [0], [1], [0, 0, 1, 1], [], []>} : vector<8x8xf32>, vector<8x8xf32>, vector<8x8xf32> -> vector<8x8xf32>
    %335 = vector.extract_strided_slice %300 {offsets = [0, 16], sizes = [8, 8], strides = [1, 1]} : vector<8x96xf32> to vector<8x8xf32>
    %336 = vector.extract_strided_slice %300 {offsets = [0, 48], sizes = [8, 8], strides = [1, 1]} : vector<8x96xf32> to vector<8x8xf32>
    %337 = vector.extract_strided_slice %300 {offsets = [0, 80], sizes = [8, 8], strides = [1, 1]} : vector<8x96xf32> to vector<8x8xf32>
    %cst_109 = arith.constant dense<0.000000e+00> : vector<8x8xf32>
    %338 = tpu.matmul %335, %336, %cst_109 {dimension_numbers = #tpu.dot_dimension_numbers<[1], [1], [0], [0], [0, 0, 1, 0], [], []>} : vector<8x8xf32>, vector<8x8xf32>, vector<8x8xf32> -> vector<8x8xf32>
    %cst_110 = arith.constant 0.353553385 : f32
    %339 = vector.broadcast %cst_110 : f32 to vector<8x8xf32>
    %340 = arith.mulf %338, %339 : vector<8x8xf32>
    %341 = arith.addf %340, %37 : vector<8x8xf32>
    %cst_111 = arith.constant dense<0xFF800000> : vector<8xf32>
    %342 = vector.multi_reduction <maximumf>, %341, %cst_111 [1] : vector<8x8xf32> to vector<8xf32>
    %343 = vector.shape_cast %342 : vector<8xf32> to vector<8x1xf32>
    %344 = vector.broadcast %343 : vector<8x1xf32> to vector<8x8xf32>
    %345 = arith.subf %341, %344 : vector<8x8xf32>
    %346 = math.exp %345 : vector<8x8xf32>
    %cst_112 = arith.constant dense<0.000000e+00> : vector<8xf32>
    %347 = vector.multi_reduction <add>, %346, %cst_112 [1] : vector<8x8xf32> to vector<8xf32>
    %348 = vector.shape_cast %347 : vector<8xf32> to vector<8x1xf32>
    %349 = vector.broadcast %348 : vector<8x1xf32> to vector<8x8xf32>
    %350 = arith.divf %346, %349 : vector<8x8xf32>
    %cst_113 = arith.constant dense<0.000000e+00> : vector<8x8xf32>
    %351 = tpu.matmul %350, %337, %cst_113 {dimension_numbers = #tpu.dot_dimension_numbers<[1], [0], [0], [1], [0, 0, 1, 1], [], []>} : vector<8x8xf32>, vector<8x8xf32>, vector<8x8xf32> -> vector<8x8xf32>
    %352 = vector.extract_strided_slice %300 {offsets = [0, 24], sizes = [8, 8], strides = [1, 1]} : vector<8x96xf32> to vector<8x8xf32>
    %353 = vector.extract_strided_slice %300 {offsets = [0, 56], sizes = [8, 8], strides = [1, 1]} : vector<8x96xf32> to vector<8x8xf32>
    %354 = vector.extract_strided_slice %300 {offsets = [0, 88], sizes = [8, 8], strides = [1, 1]} : vector<8x96xf32> to vector<8x8xf32>
    %cst_114 = arith.constant dense<0.000000e+00> : vector<8x8xf32>
    %355 = tpu.matmul %352, %353, %cst_114 {dimension_numbers = #tpu.dot_dimension_numbers<[1], [1], [0], [0], [0, 0, 1, 0], [], []>} : vector<8x8xf32>, vector<8x8xf32>, vector<8x8xf32> -> vector<8x8xf32>
    %cst_115 = arith.constant 0.353553385 : f32
    %356 = vector.broadcast %cst_115 : f32 to vector<8x8xf32>
    %357 = arith.mulf %355, %356 : vector<8x8xf32>
    %358 = arith.addf %357, %37 : vector<8x8xf32>
    %cst_116 = arith.constant dense<0xFF800000> : vector<8xf32>
    %359 = vector.multi_reduction <maximumf>, %358, %cst_116 [1] : vector<8x8xf32> to vector<8xf32>
    %360 = vector.shape_cast %359 : vector<8xf32> to vector<8x1xf32>
    %361 = vector.broadcast %360 : vector<8x1xf32> to vector<8x8xf32>
    %362 = arith.subf %358, %361 : vector<8x8xf32>
    %363 = math.exp %362 : vector<8x8xf32>
    %cst_117 = arith.constant dense<0.000000e+00> : vector<8xf32>
    %364 = vector.multi_reduction <add>, %363, %cst_117 [1] : vector<8x8xf32> to vector<8xf32>
    %365 = vector.shape_cast %364 : vector<8xf32> to vector<8x1xf32>
    %366 = vector.broadcast %365 : vector<8x1xf32> to vector<8x8xf32>
    %367 = arith.divf %363, %366 : vector<8x8xf32>
    %cst_118 = arith.constant dense<0.000000e+00> : vector<8x8xf32>
    %368 = tpu.matmul %367, %354, %cst_118 {dimension_numbers = #tpu.dot_dimension_numbers<[1], [0], [0], [1], [0, 0, 1, 1], [], []>} : vector<8x8xf32>, vector<8x8xf32>, vector<8x8xf32> -> vector<8x8xf32>
    %369 = tpu.concatenate %317, %334, %351, %368 in 1 : vector<8x8xf32>, vector<8x8xf32>, vector<8x8xf32>, vector<8x8xf32> -> vector<8x32xf32>
    %cst_119 = arith.constant dense<0.000000e+00> : vector<8x32xf32>
    %370 = tpu.matmul %369, %296, %cst_119 {dimension_numbers = #tpu.dot_dimension_numbers<[1], [0], [0], [1], [0, 0, 1, 1], [], []>} : vector<8x32xf32>, vector<32x32xf32>, vector<8x32xf32> -> vector<8x32xf32>
    %c0_120 = arith.constant 0 : index
    %c768 = arith.constant 768 : index
    %371 = vector.load %arg10[%c0_120, %c768] : memref<1x7680xf32, #tpu.memory_space<vmem>>, vector<1x32xf32>
    %372 = vector.broadcast %371 : vector<1x32xf32> to vector<8x32xf32>
    %373 = arith.addf %370, %372 : vector<8x32xf32>
    %374 = arith.addf %294, %373 : vector<8x32xf32>
    %cst_121 = arith.constant dense<0.000000e+00> : vector<8xf32>
    %375 = vector.multi_reduction <add>, %374, %cst_121 [1] : vector<8x32xf32> to vector<8xf32>
    %376 = vector.shape_cast %375 : vector<8xf32> to vector<8x1xf32>
    %cst_122 = arith.constant 3.200000e+01 : f32
    %377 = vector.broadcast %cst_122 : f32 to vector<8x1xf32>
    %378 = arith.divf %376, %377 : vector<8x1xf32>
    %379 = vector.broadcast %378 : vector<8x1xf32> to vector<8x32xf32>
    %380 = arith.subf %374, %379 : vector<8x32xf32>
    %381 = arith.mulf %380, %380 : vector<8x32xf32>
    %cst_123 = arith.constant dense<0.000000e+00> : vector<8xf32>
    %382 = vector.multi_reduction <add>, %381, %cst_123 [1] : vector<8x32xf32> to vector<8xf32>
    %383 = vector.shape_cast %382 : vector<8xf32> to vector<8x1xf32>
    %cst_124 = arith.constant 3.200000e+01 : f32
    %384 = vector.broadcast %cst_124 : f32 to vector<8x1xf32>
    %385 = arith.divf %383, %384 : vector<8x1xf32>
    %386 = vector.broadcast %378 : vector<8x1xf32> to vector<8x32xf32>
    %387 = arith.subf %374, %386 : vector<8x32xf32>
    %cst_125 = arith.constant 9.99999974E-6 : f32
    %388 = vector.broadcast %cst_125 : f32 to vector<8x1xf32>
    %389 = arith.addf %385, %388 : vector<8x1xf32>
    %390 = math.rsqrt %389 : vector<8x1xf32>
    %391 = vector.broadcast %390 : vector<8x1xf32> to vector<8x32xf32>
    %392 = arith.mulf %387, %391 : vector<8x32xf32>
    %c0_126 = arith.constant 0 : index
    %c1664 = arith.constant 1664 : index
    %393 = vector.load %arg10[%c0_126, %c1664] : memref<1x7680xf32, #tpu.memory_space<vmem>>, vector<1x32xf32>
    %394 = vector.broadcast %393 : vector<1x32xf32> to vector<8x32xf32>
    %395 = arith.mulf %392, %394 : vector<8x32xf32>
    %c0_127 = arith.constant 0 : index
    %c1792 = arith.constant 1792 : index
    %396 = vector.load %arg10[%c0_127, %c1792] : memref<1x7680xf32, #tpu.memory_space<vmem>>, vector<1x32xf32>
    %397 = vector.broadcast %396 : vector<1x32xf32> to vector<8x32xf32>
    %398 = arith.addf %395, %397 : vector<8x32xf32>
    %c0_128 = arith.constant 0 : index
    %c0_129 = arith.constant 0 : index
    %399 = vector.load %arg6[%c0_128, %c0_129] : memref<32x4096xf32, #tpu.memory_space<vmem>>, vector<32x2048xf32>
    %cst_130 = arith.constant dense<0.000000e+00> : vector<8x2048xf32>
    %400 = tpu.matmul %398, %399, %cst_130 {dimension_numbers = #tpu.dot_dimension_numbers<[1], [0], [0], [1], [0, 0, 1, 1], [], []>} : vector<8x32xf32>, vector<32x2048xf32>, vector<8x2048xf32> -> vector<8x2048xf32>
    %c0_131 = arith.constant 0 : index
    %c2688 = arith.constant 2688 : index
    %401 = vector.load %arg10[%c0_131, %c2688] : memref<1x7680xf32, #tpu.memory_space<vmem>>, vector<1x2048xf32>
    %402 = vector.broadcast %401 : vector<1x2048xf32> to vector<8x2048xf32>
    %403 = arith.addf %400, %402 : vector<8x2048xf32>
    %cst_132 = arith.constant 0.000000e+00 : f32
    %404 = vector.broadcast %cst_132 : f32 to vector<8x2048xf32>
    %405 = arith.maximumf %403, %404 : vector<8x2048xf32>
    %c0_133 = arith.constant 0 : index
    %c0_134 = arith.constant 0 : index
    %406 = vector.load %arg7[%c0_133, %c0_134] : memref<2048x64xf32, #tpu.memory_space<vmem>>, vector<2048x64xf32>
    %cst_135 = arith.constant dense<0.000000e+00> : vector<8x64xf32>
    %407 = tpu.matmul %405, %406, %cst_135 {dimension_numbers = #tpu.dot_dimension_numbers<[1], [0], [0], [1], [0, 0, 1, 1], [], []>} : vector<8x2048xf32>, vector<2048x64xf32>, vector<8x64xf32> -> vector<8x64xf32>
    %408 = vector.extract_strided_slice %407 {offsets = [0, 0], sizes = [8, 32], strides = [1, 1]} : vector<8x64xf32> to vector<8x32xf32>
    %c0_136 = arith.constant 0 : index
    %c4736 = arith.constant 4736 : index
    %409 = vector.load %arg10[%c0_136, %c4736] : memref<1x7680xf32, #tpu.memory_space<vmem>>, vector<1x32xf32>
    %410 = vector.broadcast %409 : vector<1x32xf32> to vector<8x32xf32>
    %411 = arith.addf %408, %410 : vector<8x32xf32>
    %412 = arith.addf %398, %411 : vector<8x32xf32>
    %cst_137 = arith.constant dense<0.000000e+00> : vector<8xf32>
    %413 = vector.multi_reduction <add>, %412, %cst_137 [1] : vector<8x32xf32> to vector<8xf32>
    %414 = vector.shape_cast %413 : vector<8xf32> to vector<8x1xf32>
    %cst_138 = arith.constant 3.200000e+01 : f32
    %415 = vector.broadcast %cst_138 : f32 to vector<8x1xf32>
    %416 = arith.divf %414, %415 : vector<8x1xf32>
    %417 = vector.broadcast %416 : vector<8x1xf32> to vector<8x32xf32>
    %418 = arith.subf %412, %417 : vector<8x32xf32>
    %419 = arith.mulf %418, %418 : vector<8x32xf32>
    %cst_139 = arith.constant dense<0.000000e+00> : vector<8xf32>
    %420 = vector.multi_reduction <add>, %419, %cst_139 [1] : vector<8x32xf32> to vector<8xf32>
    %421 = vector.shape_cast %420 : vector<8xf32> to vector<8x1xf32>
    %cst_140 = arith.constant 3.200000e+01 : f32
    %422 = vector.broadcast %cst_140 : f32 to vector<8x1xf32>
    %423 = arith.divf %421, %422 : vector<8x1xf32>
    %424 = vector.broadcast %416 : vector<8x1xf32> to vector<8x32xf32>
    %425 = arith.subf %412, %424 : vector<8x32xf32>
    %cst_141 = arith.constant 9.99999974E-6 : f32
    %426 = vector.broadcast %cst_141 : f32 to vector<8x1xf32>
    %427 = arith.addf %423, %426 : vector<8x1xf32>
    %428 = math.rsqrt %427 : vector<8x1xf32>
    %429 = vector.broadcast %428 : vector<8x1xf32> to vector<8x32xf32>
    %430 = arith.mulf %425, %429 : vector<8x32xf32>
    %c0_142 = arith.constant 0 : index
    %c1920 = arith.constant 1920 : index
    %431 = vector.load %arg10[%c0_142, %c1920] : memref<1x7680xf32, #tpu.memory_space<vmem>>, vector<1x32xf32>
    %432 = vector.broadcast %431 : vector<1x32xf32> to vector<8x32xf32>
    %433 = arith.mulf %430, %432 : vector<8x32xf32>
    %c0_143 = arith.constant 0 : index
    %c2048 = arith.constant 2048 : index
    %434 = vector.load %arg10[%c0_143, %c2048] : memref<1x7680xf32, #tpu.memory_space<vmem>>, vector<1x32xf32>
    %435 = vector.broadcast %434 : vector<1x32xf32> to vector<8x32xf32>
    %436 = arith.addf %433, %435 : vector<8x32xf32>
    %c96 = arith.constant 96 : index
    %c0_144 = arith.constant 0 : index
    %437 = vector.load %arg4[%c96, %c0_144] : memref<128x96xf32, #tpu.memory_space<vmem>>, vector<32x96xf32>
    %c96_145 = arith.constant 96 : index
    %c0_146 = arith.constant 0 : index
    %438 = vector.load %arg5[%c96_145, %c0_146] : memref<128x32xf32, #tpu.memory_space<vmem>>, vector<32x32xf32>
    %cst_147 = arith.constant dense<0.000000e+00> : vector<8x96xf32>
    %439 = tpu.matmul %436, %437, %cst_147 {dimension_numbers = #tpu.dot_dimension_numbers<[1], [0], [0], [1], [0, 0, 1, 1], [], []>} : vector<8x32xf32>, vector<32x96xf32>, vector<8x96xf32> -> vector<8x96xf32>
    %c0_148 = arith.constant 0 : index
    %c896 = arith.constant 896 : index
    %440 = vector.load %arg10[%c0_148, %c896] : memref<1x7680xf32, #tpu.memory_space<vmem>>, vector<1x96xf32>
    %441 = vector.broadcast %440 : vector<1x96xf32> to vector<8x96xf32>
    %442 = arith.addf %439, %441 : vector<8x96xf32>
    %443 = vector.extract_strided_slice %442 {offsets = [0, 0], sizes = [8, 8], strides = [1, 1]} : vector<8x96xf32> to vector<8x8xf32>
    %444 = vector.extract_strided_slice %442 {offsets = [0, 32], sizes = [8, 8], strides = [1, 1]} : vector<8x96xf32> to vector<8x8xf32>
    %445 = vector.extract_strided_slice %442 {offsets = [0, 64], sizes = [8, 8], strides = [1, 1]} : vector<8x96xf32> to vector<8x8xf32>
    %cst_149 = arith.constant dense<0.000000e+00> : vector<8x8xf32>
    %446 = tpu.matmul %443, %444, %cst_149 {dimension_numbers = #tpu.dot_dimension_numbers<[1], [1], [0], [0], [0, 0, 1, 0], [], []>} : vector<8x8xf32>, vector<8x8xf32>, vector<8x8xf32> -> vector<8x8xf32>
    %cst_150 = arith.constant 0.353553385 : f32
    %447 = vector.broadcast %cst_150 : f32 to vector<8x8xf32>
    %448 = arith.mulf %446, %447 : vector<8x8xf32>
    %449 = arith.addf %448, %37 : vector<8x8xf32>
    %cst_151 = arith.constant dense<0xFF800000> : vector<8xf32>
    %450 = vector.multi_reduction <maximumf>, %449, %cst_151 [1] : vector<8x8xf32> to vector<8xf32>
    %451 = vector.shape_cast %450 : vector<8xf32> to vector<8x1xf32>
    %452 = vector.broadcast %451 : vector<8x1xf32> to vector<8x8xf32>
    %453 = arith.subf %449, %452 : vector<8x8xf32>
    %454 = math.exp %453 : vector<8x8xf32>
    %cst_152 = arith.constant dense<0.000000e+00> : vector<8xf32>
    %455 = vector.multi_reduction <add>, %454, %cst_152 [1] : vector<8x8xf32> to vector<8xf32>
    %456 = vector.shape_cast %455 : vector<8xf32> to vector<8x1xf32>
    %457 = vector.broadcast %456 : vector<8x1xf32> to vector<8x8xf32>
    %458 = arith.divf %454, %457 : vector<8x8xf32>
    %cst_153 = arith.constant dense<0.000000e+00> : vector<8x8xf32>
    %459 = tpu.matmul %458, %445, %cst_153 {dimension_numbers = #tpu.dot_dimension_numbers<[1], [0], [0], [1], [0, 0, 1, 1], [], []>} : vector<8x8xf32>, vector<8x8xf32>, vector<8x8xf32> -> vector<8x8xf32>
    %460 = vector.extract_strided_slice %442 {offsets = [0, 8], sizes = [8, 8], strides = [1, 1]} : vector<8x96xf32> to vector<8x8xf32>
    %461 = vector.extract_strided_slice %442 {offsets = [0, 40], sizes = [8, 8], strides = [1, 1]} : vector<8x96xf32> to vector<8x8xf32>
    %462 = vector.extract_strided_slice %442 {offsets = [0, 72], sizes = [8, 8], strides = [1, 1]} : vector<8x96xf32> to vector<8x8xf32>
    %cst_154 = arith.constant dense<0.000000e+00> : vector<8x8xf32>
    %463 = tpu.matmul %460, %461, %cst_154 {dimension_numbers = #tpu.dot_dimension_numbers<[1], [1], [0], [0], [0, 0, 1, 0], [], []>} : vector<8x8xf32>, vector<8x8xf32>, vector<8x8xf32> -> vector<8x8xf32>
    %cst_155 = arith.constant 0.353553385 : f32
    %464 = vector.broadcast %cst_155 : f32 to vector<8x8xf32>
    %465 = arith.mulf %463, %464 : vector<8x8xf32>
    %466 = arith.addf %465, %37 : vector<8x8xf32>
    %cst_156 = arith.constant dense<0xFF800000> : vector<8xf32>
    %467 = vector.multi_reduction <maximumf>, %466, %cst_156 [1] : vector<8x8xf32> to vector<8xf32>
    %468 = vector.shape_cast %467 : vector<8xf32> to vector<8x1xf32>
    %469 = vector.broadcast %468 : vector<8x1xf32> to vector<8x8xf32>
    %470 = arith.subf %466, %469 : vector<8x8xf32>
    %471 = math.exp %470 : vector<8x8xf32>
    %cst_157 = arith.constant dense<0.000000e+00> : vector<8xf32>
    %472 = vector.multi_reduction <add>, %471, %cst_157 [1] : vector<8x8xf32> to vector<8xf32>
    %473 = vector.shape_cast %472 : vector<8xf32> to vector<8x1xf32>
    %474 = vector.broadcast %473 : vector<8x1xf32> to vector<8x8xf32>
    %475 = arith.divf %471, %474 : vector<8x8xf32>
    %cst_158 = arith.constant dense<0.000000e+00> : vector<8x8xf32>
    %476 = tpu.matmul %475, %462, %cst_158 {dimension_numbers = #tpu.dot_dimension_numbers<[1], [0], [0], [1], [0, 0, 1, 1], [], []>} : vector<8x8xf32>, vector<8x8xf32>, vector<8x8xf32> -> vector<8x8xf32>
    %477 = vector.extract_strided_slice %442 {offsets = [0, 16], sizes = [8, 8], strides = [1, 1]} : vector<8x96xf32> to vector<8x8xf32>
    %478 = vector.extract_strided_slice %442 {offsets = [0, 48], sizes = [8, 8], strides = [1, 1]} : vector<8x96xf32> to vector<8x8xf32>
    %479 = vector.extract_strided_slice %442 {offsets = [0, 80], sizes = [8, 8], strides = [1, 1]} : vector<8x96xf32> to vector<8x8xf32>
    %cst_159 = arith.constant dense<0.000000e+00> : vector<8x8xf32>
    %480 = tpu.matmul %477, %478, %cst_159 {dimension_numbers = #tpu.dot_dimension_numbers<[1], [1], [0], [0], [0, 0, 1, 0], [], []>} : vector<8x8xf32>, vector<8x8xf32>, vector<8x8xf32> -> vector<8x8xf32>
    %cst_160 = arith.constant 0.353553385 : f32
    %481 = vector.broadcast %cst_160 : f32 to vector<8x8xf32>
    %482 = arith.mulf %480, %481 : vector<8x8xf32>
    %483 = arith.addf %482, %37 : vector<8x8xf32>
    %cst_161 = arith.constant dense<0xFF800000> : vector<8xf32>
    %484 = vector.multi_reduction <maximumf>, %483, %cst_161 [1] : vector<8x8xf32> to vector<8xf32>
    %485 = vector.shape_cast %484 : vector<8xf32> to vector<8x1xf32>
    %486 = vector.broadcast %485 : vector<8x1xf32> to vector<8x8xf32>
    %487 = arith.subf %483, %486 : vector<8x8xf32>
    %488 = math.exp %487 : vector<8x8xf32>
    %cst_162 = arith.constant dense<0.000000e+00> : vector<8xf32>
    %489 = vector.multi_reduction <add>, %488, %cst_162 [1] : vector<8x8xf32> to vector<8xf32>
    %490 = vector.shape_cast %489 : vector<8xf32> to vector<8x1xf32>
    %491 = vector.broadcast %490 : vector<8x1xf32> to vector<8x8xf32>
    %492 = arith.divf %488, %491 : vector<8x8xf32>
    %cst_163 = arith.constant dense<0.000000e+00> : vector<8x8xf32>
    %493 = tpu.matmul %492, %479, %cst_163 {dimension_numbers = #tpu.dot_dimension_numbers<[1], [0], [0], [1], [0, 0, 1, 1], [], []>} : vector<8x8xf32>, vector<8x8xf32>, vector<8x8xf32> -> vector<8x8xf32>
    %494 = vector.extract_strided_slice %442 {offsets = [0, 24], sizes = [8, 8], strides = [1, 1]} : vector<8x96xf32> to vector<8x8xf32>
    %495 = vector.extract_strided_slice %442 {offsets = [0, 56], sizes = [8, 8], strides = [1, 1]} : vector<8x96xf32> to vector<8x8xf32>
    %496 = vector.extract_strided_slice %442 {offsets = [0, 88], sizes = [8, 8], strides = [1, 1]} : vector<8x96xf32> to vector<8x8xf32>
    %cst_164 = arith.constant dense<0.000000e+00> : vector<8x8xf32>
    %497 = tpu.matmul %494, %495, %cst_164 {dimension_numbers = #tpu.dot_dimension_numbers<[1], [1], [0], [0], [0, 0, 1, 0], [], []>} : vector<8x8xf32>, vector<8x8xf32>, vector<8x8xf32> -> vector<8x8xf32>
    %cst_165 = arith.constant 0.353553385 : f32
    %498 = vector.broadcast %cst_165 : f32 to vector<8x8xf32>
    %499 = arith.mulf %497, %498 : vector<8x8xf32>
    %500 = arith.addf %499, %37 : vector<8x8xf32>
    %cst_166 = arith.constant dense<0xFF800000> : vector<8xf32>
    %501 = vector.multi_reduction <maximumf>, %500, %cst_166 [1] : vector<8x8xf32> to vector<8xf32>
    %502 = vector.shape_cast %501 : vector<8xf32> to vector<8x1xf32>
    %503 = vector.broadcast %502 : vector<8x1xf32> to vector<8x8xf32>
    %504 = arith.subf %500, %503 : vector<8x8xf32>
    %505 = math.exp %504 : vector<8x8xf32>
    %cst_167 = arith.constant dense<0.000000e+00> : vector<8xf32>
    %506 = vector.multi_reduction <add>, %505, %cst_167 [1] : vector<8x8xf32> to vector<8xf32>
    %507 = vector.shape_cast %506 : vector<8xf32> to vector<8x1xf32>
    %508 = vector.broadcast %507 : vector<8x1xf32> to vector<8x8xf32>
    %509 = arith.divf %505, %508 : vector<8x8xf32>
    %cst_168 = arith.constant dense<0.000000e+00> : vector<8x8xf32>
    %510 = tpu.matmul %509, %496, %cst_168 {dimension_numbers = #tpu.dot_dimension_numbers<[1], [0], [0], [1], [0, 0, 1, 1], [], []>} : vector<8x8xf32>, vector<8x8xf32>, vector<8x8xf32> -> vector<8x8xf32>
    %511 = tpu.concatenate %459, %476, %493, %510 in 1 : vector<8x8xf32>, vector<8x8xf32>, vector<8x8xf32>, vector<8x8xf32> -> vector<8x32xf32>
    %cst_169 = arith.constant dense<0.000000e+00> : vector<8x32xf32>
    %512 = tpu.matmul %511, %438, %cst_169 {dimension_numbers = #tpu.dot_dimension_numbers<[1], [0], [0], [1], [0, 0, 1, 1], [], []>} : vector<8x32xf32>, vector<32x32xf32>, vector<8x32xf32> -> vector<8x32xf32>
    %c0_170 = arith.constant 0 : index
    %c1024 = arith.constant 1024 : index
    %513 = vector.load %arg10[%c0_170, %c1024] : memref<1x7680xf32, #tpu.memory_space<vmem>>, vector<1x32xf32>
    %514 = vector.broadcast %513 : vector<1x32xf32> to vector<8x32xf32>
    %515 = arith.addf %512, %514 : vector<8x32xf32>
    %516 = arith.addf %436, %515 : vector<8x32xf32>
    %cst_171 = arith.constant dense<0.000000e+00> : vector<8xf32>
    %517 = vector.multi_reduction <add>, %516, %cst_171 [1] : vector<8x32xf32> to vector<8xf32>
    %518 = vector.shape_cast %517 : vector<8xf32> to vector<8x1xf32>
    %cst_172 = arith.constant 3.200000e+01 : f32
    %519 = vector.broadcast %cst_172 : f32 to vector<8x1xf32>
    %520 = arith.divf %518, %519 : vector<8x1xf32>
    %521 = vector.broadcast %520 : vector<8x1xf32> to vector<8x32xf32>
    %522 = arith.subf %516, %521 : vector<8x32xf32>
    %523 = arith.mulf %522, %522 : vector<8x32xf32>
    %cst_173 = arith.constant dense<0.000000e+00> : vector<8xf32>
    %524 = vector.multi_reduction <add>, %523, %cst_173 [1] : vector<8x32xf32> to vector<8xf32>
    %525 = vector.shape_cast %524 : vector<8xf32> to vector<8x1xf32>
    %cst_174 = arith.constant 3.200000e+01 : f32
    %526 = vector.broadcast %cst_174 : f32 to vector<8x1xf32>
    %527 = arith.divf %525, %526 : vector<8x1xf32>
    %528 = vector.broadcast %520 : vector<8x1xf32> to vector<8x32xf32>
    %529 = arith.subf %516, %528 : vector<8x32xf32>
    %cst_175 = arith.constant 9.99999974E-6 : f32
    %530 = vector.broadcast %cst_175 : f32 to vector<8x1xf32>
    %531 = arith.addf %527, %530 : vector<8x1xf32>
    %532 = math.rsqrt %531 : vector<8x1xf32>
    %533 = vector.broadcast %532 : vector<8x1xf32> to vector<8x32xf32>
    %534 = arith.mulf %529, %533 : vector<8x32xf32>
    %c0_176 = arith.constant 0 : index
    %c2176 = arith.constant 2176 : index
    %535 = vector.load %arg10[%c0_176, %c2176] : memref<1x7680xf32, #tpu.memory_space<vmem>>, vector<1x32xf32>
    %536 = vector.broadcast %535 : vector<1x32xf32> to vector<8x32xf32>
    %537 = arith.mulf %534, %536 : vector<8x32xf32>
    %c0_177 = arith.constant 0 : index
    %c2304 = arith.constant 2304 : index
    %538 = vector.load %arg10[%c0_177, %c2304] : memref<1x7680xf32, #tpu.memory_space<vmem>>, vector<1x32xf32>
    %539 = vector.broadcast %538 : vector<1x32xf32> to vector<8x32xf32>
    %540 = arith.addf %537, %539 : vector<8x32xf32>
    %c0_178 = arith.constant 0 : index
    %c2048_179 = arith.constant 2048 : index
    %541 = vector.load %arg6[%c0_178, %c2048_179] : memref<32x4096xf32, #tpu.memory_space<vmem>>, vector<32x2048xf32>
    %cst_180 = arith.constant dense<0.000000e+00> : vector<8x2048xf32>
    %542 = tpu.matmul %540, %541, %cst_180 {dimension_numbers = #tpu.dot_dimension_numbers<[1], [0], [0], [1], [0, 0, 1, 1], [], []>} : vector<8x32xf32>, vector<32x2048xf32>, vector<8x2048xf32> -> vector<8x2048xf32>
    %c0_181 = arith.constant 0 : index
    %c4864 = arith.constant 4864 : index
    %543 = vector.load %arg10[%c0_181, %c4864] : memref<1x7680xf32, #tpu.memory_space<vmem>>, vector<1x2048xf32>
    %544 = vector.broadcast %543 : vector<1x2048xf32> to vector<8x2048xf32>
    %545 = arith.addf %542, %544 : vector<8x2048xf32>
    %cst_182 = arith.constant 0.000000e+00 : f32
    %546 = vector.broadcast %cst_182 : f32 to vector<8x2048xf32>
    %547 = arith.maximumf %545, %546 : vector<8x2048xf32>
    %c0_183 = arith.constant 0 : index
    %c0_184 = arith.constant 0 : index
    %548 = vector.load %arg7[%c0_183, %c0_184] : memref<2048x64xf32, #tpu.memory_space<vmem>>, vector<2048x64xf32>
    %cst_185 = arith.constant dense<0.000000e+00> : vector<8x64xf32>
    %549 = tpu.matmul %547, %548, %cst_185 {dimension_numbers = #tpu.dot_dimension_numbers<[1], [0], [0], [1], [0, 0, 1, 1], [], []>} : vector<8x2048xf32>, vector<2048x64xf32>, vector<8x64xf32> -> vector<8x64xf32>
    %550 = vector.extract_strided_slice %549 {offsets = [0, 32], sizes = [8, 32], strides = [1, 1]} : vector<8x64xf32> to vector<8x32xf32>
    %c0_186 = arith.constant 0 : index
    %c6912 = arith.constant 6912 : index
    %551 = vector.load %arg10[%c0_186, %c6912] : memref<1x7680xf32, #tpu.memory_space<vmem>>, vector<1x32xf32>
    %552 = vector.broadcast %551 : vector<1x32xf32> to vector<8x32xf32>
    %553 = arith.addf %550, %552 : vector<8x32xf32>
    %554 = arith.addf %540, %553 : vector<8x32xf32>
    %cst_187 = arith.constant dense<0.000000e+00> : vector<8xf32>
    %555 = vector.multi_reduction <add>, %554, %cst_187 [1] : vector<8x32xf32> to vector<8xf32>
    %556 = vector.shape_cast %555 : vector<8xf32> to vector<8x1xf32>
    %cst_188 = arith.constant 3.200000e+01 : f32
    %557 = vector.broadcast %cst_188 : f32 to vector<8x1xf32>
    %558 = arith.divf %556, %557 : vector<8x1xf32>
    %559 = vector.broadcast %558 : vector<8x1xf32> to vector<8x32xf32>
    %560 = arith.subf %554, %559 : vector<8x32xf32>
    %561 = arith.mulf %560, %560 : vector<8x32xf32>
    %cst_189 = arith.constant dense<0.000000e+00> : vector<8xf32>
    %562 = vector.multi_reduction <add>, %561, %cst_189 [1] : vector<8x32xf32> to vector<8xf32>
    %563 = vector.shape_cast %562 : vector<8xf32> to vector<8x1xf32>
    %cst_190 = arith.constant 3.200000e+01 : f32
    %564 = vector.broadcast %cst_190 : f32 to vector<8x1xf32>
    %565 = arith.divf %563, %564 : vector<8x1xf32>
    %566 = vector.broadcast %558 : vector<8x1xf32> to vector<8x32xf32>
    %567 = arith.subf %554, %566 : vector<8x32xf32>
    %cst_191 = arith.constant 9.99999974E-6 : f32
    %568 = vector.broadcast %cst_191 : f32 to vector<8x1xf32>
    %569 = arith.addf %565, %568 : vector<8x1xf32>
    %570 = math.rsqrt %569 : vector<8x1xf32>
    %571 = vector.broadcast %570 : vector<8x1xf32> to vector<8x32xf32>
    %572 = arith.mulf %567, %571 : vector<8x32xf32>
    %c0_192 = arith.constant 0 : index
    %c2432 = arith.constant 2432 : index
    %573 = vector.load %arg10[%c0_192, %c2432] : memref<1x7680xf32, #tpu.memory_space<vmem>>, vector<1x32xf32>
    %574 = vector.broadcast %573 : vector<1x32xf32> to vector<8x32xf32>
    %575 = arith.mulf %572, %574 : vector<8x32xf32>
    %c0_193 = arith.constant 0 : index
    %c2560 = arith.constant 2560 : index
    %576 = vector.load %arg10[%c0_193, %c2560] : memref<1x7680xf32, #tpu.memory_space<vmem>>, vector<1x32xf32>
    %577 = vector.broadcast %576 : vector<1x32xf32> to vector<8x32xf32>
    %578 = arith.addf %575, %577 : vector<8x32xf32>
    %579 = vector.extract_strided_slice %578 {offsets = [0, 0], sizes = [2, 32], strides = [1, 1]} : vector<8x32xf32> to vector<2x32xf32>
    %c0_194 = arith.constant 0 : index
    %c0_195 = arith.constant 0 : index
    %580 = vector.load %arg8[%c0_194, %c0_195] : memref<128x16xf32, #tpu.memory_space<vmem>>, vector<32x16xf32>
    %cst_196 = arith.constant dense<0.000000e+00> : vector<2x16xf32>
    %581 = tpu.matmul %579, %580, %cst_196 {dimension_numbers = #tpu.dot_dimension_numbers<[1], [0], [0], [1], [0, 0, 1, 1], [], []>} : vector<2x32xf32>, vector<32x16xf32>, vector<2x16xf32> -> vector<2x16xf32>
    %582 = vector.extract_strided_slice %578 {offsets = [2, 0], sizes = [2, 32], strides = [1, 1]} : vector<8x32xf32> to vector<2x32xf32>
    %c32_197 = arith.constant 32 : index
    %c0_198 = arith.constant 0 : index
    %583 = vector.load %arg8[%c32_197, %c0_198] : memref<128x16xf32, #tpu.memory_space<vmem>>, vector<32x16xf32>
    %cst_199 = arith.constant dense<0.000000e+00> : vector<2x16xf32>
    %584 = tpu.matmul %582, %583, %cst_199 {dimension_numbers = #tpu.dot_dimension_numbers<[1], [0], [0], [1], [0, 0, 1, 1], [], []>} : vector<2x32xf32>, vector<32x16xf32>, vector<2x16xf32> -> vector<2x16xf32>
    %585 = arith.addf %581, %584 : vector<2x16xf32>
    %586 = vector.extract_strided_slice %578 {offsets = [4, 0], sizes = [2, 32], strides = [1, 1]} : vector<8x32xf32> to vector<2x32xf32>
    %c64_200 = arith.constant 64 : index
    %c0_201 = arith.constant 0 : index
    %587 = vector.load %arg8[%c64_200, %c0_201] : memref<128x16xf32, #tpu.memory_space<vmem>>, vector<32x16xf32>
    %cst_202 = arith.constant dense<0.000000e+00> : vector<2x16xf32>
    %588 = tpu.matmul %586, %587, %cst_202 {dimension_numbers = #tpu.dot_dimension_numbers<[1], [0], [0], [1], [0, 0, 1, 1], [], []>} : vector<2x32xf32>, vector<32x16xf32>, vector<2x16xf32> -> vector<2x16xf32>
    %589 = arith.addf %585, %588 : vector<2x16xf32>
    %590 = vector.extract_strided_slice %578 {offsets = [6, 0], sizes = [2, 32], strides = [1, 1]} : vector<8x32xf32> to vector<2x32xf32>
    %c96_203 = arith.constant 96 : index
    %c0_204 = arith.constant 0 : index
    %591 = vector.load %arg8[%c96_203, %c0_204] : memref<128x16xf32, #tpu.memory_space<vmem>>, vector<32x16xf32>
    %cst_205 = arith.constant dense<0.000000e+00> : vector<2x16xf32>
    %592 = tpu.matmul %590, %591, %cst_205 {dimension_numbers = #tpu.dot_dimension_numbers<[1], [0], [0], [1], [0, 0, 1, 1], [], []>} : vector<2x32xf32>, vector<32x16xf32>, vector<2x16xf32> -> vector<2x16xf32>
    %593 = arith.addf %589, %592 : vector<2x16xf32>
    %c0_206 = arith.constant 0 : index
    %c7040 = arith.constant 7040 : index
    %594 = vector.load %arg10[%c0_206, %c7040] : memref<1x7680xf32, #tpu.memory_space<vmem>>, vector<1x16xf32>
    %595 = vector.broadcast %594 : vector<1x16xf32> to vector<2x16xf32>
    %596 = arith.addf %593, %595 : vector<2x16xf32>
    %c0_207 = arith.constant 0 : index
    %c0_208 = arith.constant 0 : index
    %597 = vector.load %arg9[%c0_207, %c0_208] : memref<16x40xf32, #tpu.memory_space<vmem>>, vector<16x16xf32>
    %cst_209 = arith.constant dense<0.000000e+00> : vector<2x16xf32>
    %598 = tpu.matmul %596, %597, %cst_209 {dimension_numbers = #tpu.dot_dimension_numbers<[1], [0], [0], [1], [0, 0, 1, 1], [], []>} : vector<2x16xf32>, vector<16x16xf32>, vector<2x16xf32> -> vector<2x16xf32>
    %c0_210 = arith.constant 0 : index
    %c7168 = arith.constant 7168 : index
    %599 = vector.load %arg10[%c0_210, %c7168] : memref<1x7680xf32, #tpu.memory_space<vmem>>, vector<1x16xf32>
    %600 = vector.broadcast %599 : vector<1x16xf32> to vector<2x16xf32>
    %601 = arith.addf %598, %600 : vector<2x16xf32>
    %602 = arith.addf %596, %601 : vector<2x16xf32>
    %cst_211 = arith.constant dense<0.000000e+00> : vector<2xf32>
    %603 = vector.multi_reduction <add>, %602, %cst_211 [1] : vector<2x16xf32> to vector<2xf32>
    %604 = vector.shape_cast %603 : vector<2xf32> to vector<2x1xf32>
    %cst_212 = arith.constant 1.600000e+01 : f32
    %605 = vector.broadcast %cst_212 : f32 to vector<2x1xf32>
    %606 = arith.divf %604, %605 : vector<2x1xf32>
    %607 = vector.broadcast %606 : vector<2x1xf32> to vector<2x16xf32>
    %608 = arith.subf %602, %607 : vector<2x16xf32>
    %609 = arith.mulf %608, %608 : vector<2x16xf32>
    %cst_213 = arith.constant dense<0.000000e+00> : vector<2xf32>
    %610 = vector.multi_reduction <add>, %609, %cst_213 [1] : vector<2x16xf32> to vector<2xf32>
    %611 = vector.shape_cast %610 : vector<2xf32> to vector<2x1xf32>
    %cst_214 = arith.constant 1.600000e+01 : f32
    %612 = vector.broadcast %cst_214 : f32 to vector<2x1xf32>
    %613 = arith.divf %611, %612 : vector<2x1xf32>
    %614 = vector.broadcast %606 : vector<2x1xf32> to vector<2x16xf32>
    %615 = arith.subf %602, %614 : vector<2x16xf32>
    %cst_215 = arith.constant 9.99999974E-6 : f32
    %616 = vector.broadcast %cst_215 : f32 to vector<2x1xf32>
    %617 = arith.addf %613, %616 : vector<2x1xf32>
    %618 = math.rsqrt %617 : vector<2x1xf32>
    %619 = vector.broadcast %618 : vector<2x1xf32> to vector<2x16xf32>
    %620 = arith.mulf %615, %619 : vector<2x16xf32>
    %c0_216 = arith.constant 0 : index
    %c7296 = arith.constant 7296 : index
    %621 = vector.load %arg10[%c0_216, %c7296] : memref<1x7680xf32, #tpu.memory_space<vmem>>, vector<1x16xf32>
    %622 = vector.broadcast %621 : vector<1x16xf32> to vector<2x16xf32>
    %623 = arith.mulf %620, %622 : vector<2x16xf32>
    %c0_217 = arith.constant 0 : index
    %c7424 = arith.constant 7424 : index
    %624 = vector.load %arg10[%c0_217, %c7424] : memref<1x7680xf32, #tpu.memory_space<vmem>>, vector<1x16xf32>
    %625 = vector.broadcast %624 : vector<1x16xf32> to vector<2x16xf32>
    %626 = arith.addf %623, %625 : vector<2x16xf32>
    %c0_218 = arith.constant 0 : index
    %c16 = arith.constant 16 : index
    %627 = vector.load %arg9[%c0_218, %c16] : memref<16x40xf32, #tpu.memory_space<vmem>>, vector<16x24xf32>
    %cst_219 = arith.constant dense<0.000000e+00> : vector<2x24xf32>
    %628 = tpu.matmul %626, %627, %cst_219 {dimension_numbers = #tpu.dot_dimension_numbers<[1], [0], [0], [1], [0, 0, 1, 1], [], []>} : vector<2x16xf32>, vector<16x24xf32>, vector<2x24xf32> -> vector<2x24xf32>
    %c0_220 = arith.constant 0 : index
    %c7552 = arith.constant 7552 : index
    %629 = vector.load %arg10[%c0_220, %c7552] : memref<1x7680xf32, #tpu.memory_space<vmem>>, vector<1x24xf32>
    %630 = vector.broadcast %629 : vector<1x24xf32> to vector<2x24xf32>
    %631 = arith.addf %628, %630 : vector<2x24xf32>
    %cst_221 = arith.constant 0.000000e+00 : f32
    %632 = vector.broadcast %cst_221 : f32 to vector<2x40xf32>
    %633 = tpu.concatenate %70, %631, %632 in 1 : vector<2x64xf32>, vector<2x24xf32>, vector<2x40xf32> -> vector<2x128xf32>
    %c0_222 = arith.constant 0 : index
    %c0_223 = arith.constant 0 : index
    %634 = vector.load %arg11[%c0_222, %c0_223] : memref<2x128xf32, #tpu.memory_space<vmem>>, vector<2x128xf32>
    tpu.vector_store %arg11[%c0_222, %c0_223], %633 {strides = array<i32>} : memref<2x128xf32, #tpu.memory_space<vmem>>, vector<2x128xf32>,
    return
  }
}

</mosaic_0001>

<llo_original>
// kernel: end2end_forward.1
$region0: #{end2end_forward.1}
  #allocation0 [shape = 'u32[]', space=smem, size = 0x4, offset = 0x4, fixed_abs, tag = 'smem constant byte address 0x4 - core index']
  #allocation1 [shape = 'u32[72,128]{1,0:T(1,128)}', space=vmem, size = 0x9000, scoped, tag = 'internal scratch']
  %s0 = inlined_call_operand.vmem [shape: f32[2,512], index: 0, kind: input, shape index: {}]
  %s1 = inlined_call_operand.vmem [shape: f32[1,512], index: 1, kind: input, shape index: {}]
  %s2 = inlined_call_operand.vmem [shape: f32[64,64], index: 2, kind: input, shape index: {}]
  %s3 = inlined_call_operand.vmem [shape: f32[16,32], index: 3, kind: input, shape index: {}]
  %s4 = inlined_call_operand.vmem [shape: f32[128,96], index: 4, kind: input, shape index: {}]
  %s5 = inlined_call_operand.vmem [shape: f32[128,32], index: 5, kind: input, shape index: {}]
  %s6 = inlined_call_operand.vmem [shape: f32[32,4096], index: 6, kind: input, shape index: {}]
  %s7 = inlined_call_operand.vmem [shape: f32[2048,64], index: 7, kind: input, shape index: {}]
  %s8 = inlined_call_operand.vmem [shape: f32[128,16], index: 8, kind: input, shape index: {}]
  %s9 = inlined_call_operand.vmem [shape: f32[16,40], index: 9, kind: input, shape index: {}]
  %s10 = inlined_call_operand.vmem [shape: f32[1,7680], index: 10, kind: input, shape index: {}]
  %s11 = inlined_call_operand.vmem [shape: f32[2,128], index: 11, kind: output, shape index: {}]
  %s12 = sld [smem:[#allocation0]]
  $region54: #{end2end_forward.1} parent=0
    _
  %s14 = ssub.s32 1, %s12
  %s15 = scalar_select 0, %s14, %s12
  // Predicated region
  $region2: #{end2end_forward.1} parent=0 // pred_check
    _
  $region3: #{end2end_forward.1} parent=0 // pred_check_branch
    %17 = sbr.rel (0) target = $region5
  $region4: #{end2end_forward.1} parent=0 // pred_region
    _
  $region5: #{end2end_forward.1} parent=0 // pred_fallthru
    _
  // Predicated region
  $region6: #{end2end_forward.1} parent=0 // pred_check
    _
  $region7: #{end2end_forward.1} parent=0 // pred_check_branch
    %19 = sbr.rel (0) target = $region9
  $region8: #{end2end_forward.1} parent=0 // pred_region
    _
  $region9: #{end2end_forward.1} parent=0 // pred_fallthru
    _
  // Predicated region
  $region10: #{end2end_forward.1} parent=0 // pred_check
    _
  $region11: #{end2end_forward.1} parent=0 // pred_check_branch
    %21 = sbr.rel (0) target = $region13
  $region12: #{end2end_forward.1} parent=0 // pred_region
    _
  $region13: #{end2end_forward.1} parent=0 // pred_fallthru
    _
  // Predicated region
  $region14: #{end2end_forward.1} parent=0 // pred_check
    _
  $region15: #{end2end_forward.1} parent=0 // pred_check_branch
    %23 = sbr.rel (0) target = $region17
  $region16: #{end2end_forward.1} parent=0 // pred_region
    _
  $region17: #{end2end_forward.1} parent=0 // pred_fallthru
    _
  // Predicated region
  $region18: #{end2end_forward.1} parent=0 // pred_check
    _
  $region19: #{end2end_forward.1} parent=0 // pred_check_branch
    %25 = sbr.rel (0) target = $region21
  $region20: #{end2end_forward.1} parent=0 // pred_region
    _
  $region21: #{end2end_forward.1} parent=0 // pred_fallthru
    _
  // Predicated region
  $region22: #{end2end_forward.1} parent=0 // pred_check
    _
  $region23: #{end2end_forward.1} parent=0 // pred_check_branch
    %27 = sbr.rel (0) target = $region25
  $region24: #{end2end_forward.1} parent=0 // pred_region
    _
  $region25: #{end2end_forward.1} parent=0 // pred_fallthru
    _
  // Predicated region
  $region26: #{end2end_forward.1} parent=0 // pred_check
    _
  $region27: #{end2end_forward.1} parent=0 // pred_check_branch
    %29 = sbr.rel (0) target = $region29
  $region28: #{end2end_forward.1} parent=0 // pred_region
    _
  $region29: #{end2end_forward.1} parent=0 // pred_fallthru
    _
  // Predicated region
  $region30: #{end2end_forward.1} parent=0 // pred_check
    _
  $region31: #{end2end_forward.1} parent=0 // pred_check_branch
    %31 = sbr.rel (0) target = $region33
  $region32: #{end2end_forward.1} parent=0 // pred_region
    _
  $region33: #{end2end_forward.1} parent=0 // pred_fallthru
    _
  // Predicated region
  $region34: #{end2end_forward.1} parent=0 // pred_check
    _
  $region35: #{end2end_forward.1} parent=0 // pred_check_branch
    %33 = sbr.rel (0) target = $region37
  $region36: #{end2end_forward.1} parent=0 // pred_region
    _
  $region37: #{end2end_forward.1} parent=0 // pred_fallthru
    _
  // Predicated region
  $region38: #{end2end_forward.1} parent=0 // pred_check
    _
  $region39: #{end2end_forward.1} parent=0 // pred_check_branch
    %35 = sbr.rel (0) target = $region41
  $region40: #{end2end_forward.1} parent=0 // pred_region
    _
  $region41: #{end2end_forward.1} parent=0 // pred_fallthru
    _
  // Predicated region
  $region42: #{end2end_forward.1} parent=0 // pred_check
    _
  $region43: #{end2end_forward.1} parent=0 // pred_check_branch
    %37 = sbr.rel (0) target = $region45
  $region44: #{end2end_forward.1} parent=0 // pred_region
    _
  $region45: #{end2end_forward.1} parent=0 // pred_fallthru
    _
  %v38 = vlaneseq
  %v39 = vshrl.u32 %v38, 7
  %v40 = vlaneseq
  %v41 = vand.u32 %v40, 127
  %vm42 = vcmp.lt.s32.totalorder %v39, 0
  %v43 = vsub.s32 0, %v39
  %v44 = vsel %vm42, %v43, %v39
  %v45 = vshrl.u32 %v44, 1
  %v46 = vand.u32 %v44, 1
  %v47 = vsub.s32 0, %v46
  %v48 = vsel %vm42, %v47, %v46
  %vm49 = vcmp.ne.s32.totalorder %v48, 0
  %vm50 = vcmp.lt.s32.totalorder %v48, 0
  %vm51 = vmand %vm50, %vm49
  %v52 = vadd.s32 %v48, 2
  %v53 = vsel %vm51, %v52, %v48
  %vm54 = vcmp.lt.s32.totalorder %v41, 0
  %v55 = vsub.s32 0, %v41
  %v56 = vsel %vm54, %v55, %v41
  %v57 = vshrl.u32 %v56, 1
  %v58 = vand.u32 %v56, 1
  %v59 = vsub.s32 0, %v58
  %v60 = vsel %vm54, %v59, %v58
  %vm61 = vcmp.ne.s32.totalorder %v60, 0
  %vm62 = vcmp.lt.s32.totalorder %v60, 0
  %vm63 = vmand %vm62, %vm61
  %v64 = vadd.s32 %v60, 2
  %v65 = vsel %vm63, %v64, %v60
  %vm66 = vcmp.eq.s32.totalorder %v53, %v65
  %v67 = vsel %vm66, 0.0, -1e+30
  %v68 = vld [vmem:[%s0] sm:$0xff]
  %v69 = vld [vmem:[%s1] sm:$0xf]
  %v71 = vperm.slane %v69, 0
  %v72 = vperm.slane %v69, 1
  %v73 = vperm.slane %v69, 2
  %v74 = vperm.slane %v69, 3
  %v75 = vrot.slane %v72, 6
  %v76 = vrot.slane %v73, 4
  %v77 = vrot.slane %v74, 2
  %vm78 = vcmask 1041408
  %v79 = vsel %vm78, %v71, %v75
  %vm80 = vcmask 1045508
  %v81 = vsel %vm80, %v76, %v77
  %vm82 = vcmask 1043456
  %v83 = vsel %vm82, %v79, %v81
  %v85 = vmul.f32 %v68, %v83
  %v86 = vand.u32 2147483647, %v85
  %vm87 = vcmp.le.f32.partialorder %v86, 0.7853982
  %vm88 = vcmp.lt.s32.totalorder %v85, 0
  %v89 = vand.u32 %v85, 2139095040
  %v90 = vshrl.u32 %v89, 23
  %v91 = vsub.s32 %v90, 127
  %v92 = vand.u32 2147483647, %v85
  %v93 = vand.u32 %v92, 8388607
  %v94 = vor.u32 %v93, 8388608
  %v95 = vsub.s32 0, %v94
  %v96 = vadd.s32 %v91, 1
  %vm97 = vcmp.gt.s32.totalorder %v96, 0
  %v98 = vsel %vm97, %v96, 0
  %v99 = vshrl.u32 %v98, 5
  %v100 = vand.u32 %v98, 31
  %v101 = vsub.s32 32, %v100
  %v102 = vshrl.u32 683565275, %v101
  %v103 = vshll.u32 683565275, %v100
  %v104 = vshrl.u32 2475754826, %v101
  %v105 = vor.u32 %v103, %v104
  %v106 = vshll.u32 2475754826, %v100
  %v107 = vshrl.u32 2131351028, %v101
  %v108 = vor.u32 %v106, %v107
  %v109 = vshll.u32 2131351028, %v100
  %v110 = vshrl.u32 2102212464, %v101
  %v111 = vor.u32 %v109, %v110
  %v112 = vshll.u32 2102212464, %v100
  %v113 = vshrl.u32 920167782, %v101
  %v114 = vor.u32 %v112, %v113
  %v115 = vshll.u32 920167782, %v100
  %v116 = vshrl.u32 1326507024, %v101
  %v117 = vor.u32 %v115, %v116
  %vm118 = vcmp.lt.s32.totalorder %v99, 1
  %vm119 = vcmp.lt.s32.totalorder %v99, 2
  %vm120 = vcmp.lt.s32.totalorder %v99, 3
  %vm121 = vcmp.lt.s32.totalorder %v99, 4
  %v122 = vsel %vm118, %v102, %v105
  %v123 = vsel %vm121, %v111, 2102212464
  %v124 = vsel %vm120, %v108, %v123
  %v125 = vsel %vm119, %v122, %v124
  %v126 = vsel %vm118, %v105, %v108
  %v127 = vsel %vm121, %v114, 920167782
  %v128 = vsel %vm120, %v111, %v127
  %v129 = vsel %vm119, %v126, %v128
  %v130 = vsel %vm118, %v108, %v111
  %v131 = vsel %vm121, %v117, 1326507024
  %v132 = vsel %vm120, %v114, %v131
  %v133 = vsel %vm119, %v130, %v132
  %v134 = vshll.u32 %v94, 8
  %v135 = vand.u32 %v134, 65535
  %v136 = vshrl.u32 %v134, 16
  %v137 = vand.u32 %v133, 65535
  %v138 = vshrl.u32 %v133, 16
  %v139 = vmul.u32 %v135, %v137
  %v140 = vmul.u32 %v135, %v138
  %v141 = vmul.u32 %v136, %v137
  %v142 = vmul.u32 %v136, %v138
  %v143 = vshll.u32 %v140, 16
  %v144 = vshrl.u32 %v140, 16
  %v145 = vshll.u32 %v141, 16
  %v146 = vshrl.u32 %v141, 16
  %vm147 = vc.u32 %v139, %v143
  %v148 = vsel %vm147, 1, 0
  %v149 = vadd.s32 %v139, %v143
  %v150 = vadd.s32 %v142, %v148
  %vm151 = vc.u32 %v149, %v145
  %v152 = vsel %vm151, 1, 0
  %v153 = vadd.s32 %v149, %v145
  %v154 = vadd.s32 %v150, %v152
  %v155 = vadd.s32 %v154, %v144
  %v156 = vadd.s32 %v155, %v146
  %v157 = vand.u32 %v134, 65535
  %v158 = vshrl.u32 %v134, 16
  %v159 = vand.u32 %v129, 65535
  %v160 = vshrl.u32 %v129, 16
  %v161 = vmul.u32 %v157, %v159
  %v162 = vmul.u32 %v157, %v160
  %v163 = vmul.u32 %v158, %v159
  %v164 = vmul.u32 %v158, %v160
  %v165 = vshll.u32 %v162, 16
  %v166 = vshrl.u32 %v162, 16
  %v167 = vshll.u32 %v163, 16
  %v168 = vshrl.u32 %v163, 16
  %vm169 = vc.u32 %v161, %v165
  %v170 = vsel %vm169, 1, 0
  %v171 = vadd.s32 %v161, %v165
  %v172 = vadd.s32 %v164, %v170
  %vm173 = vc.u32 %v171, %v167
  %v174 = vsel %vm173, 1, 0
  %v175 = vadd.s32 %v171, %v167
  %v176 = vadd.s32 %v172, %v174
  %v177 = vadd.s32 %v176, %v166
  %v178 = vadd.s32 %v177, %v168
  %v179 = vmul.u32 %v134, %v125
  %v180 = vadd.s32 %v156, %v175
  %vm181 = vc.u32 %v156, %v175
  %v182 = vadd.s32 %v178, 1
  %v183 = vsel %vm181, %v182, %v178
  %v184 = vadd.s32 %v179, %v183
  %v185 = vadd.s32 %v184, 536870912
  %v186 = vshrl.u32 %v185, 30
  %v187 = vshll.u32 %v186, 30
  %v188 = vsub.s32 %v184, %v187
  %vm189 = vcmp.lt.s32.totalorder %v188, 0
  %v190 = vsub.s32 0, %v188
  %v191 = vsel %vm189, %v190, %v188
  %v192 = vclz %v191
  %v193 = vsub.s32 %v192, 2
  %vm194 = vcmp.gt.s32.totalorder 0, %v193
  %v195 = vsel %vm194, 0, %v193
  %v196 = vsub.s32 32, %v195
  %v197 = vshll.u32 %v188, %v195
  %v198 = vshrl.u32 %v180, %v196
  %v199 = vor.u32 %v197, %v198
  %v200 = vsub.s32 4294967266, %v195
  %v201 = vadd.s32 %v200, 127
  %v202 = vshll.u32 %v201, 23
  %v203 = vor.u32 4788187, %v202
  %v204 = vand.u32 2147483647, %v203
  %v206 = vcvt.s32.f32 %v199
  %v207 = vmul.f32 %v206, %v204
  %v208 = vxor.u32 %v207, 2147483648
  %v209 = vsel %vm88, %v208, %v207
  %v210 = vsub.s32 4, %v186
  %v211 = vsel %vm88, %v210, %v186
  %v212 = vsel %vm87, %v85, %v209
  %v213 = vsel %vm87, 0, %v211
  %v214 = vmul.f32 %v212, %v212
  %v215 = vmul.f32 %v214, -0.001358992
  %v216 = vadd.f32 %v215, 0.041655596
  %v217 = vmul.f32 %v214, %v216
  %v218 = vadd.f32 %v217, -0.4999988
  %v219 = vmul.f32 %v214, %v218
  %v220 = vadd.f32 1.0, %v219
  %v221 = vmul.f32 %v212, %v212
  %v222 = vmul.f32 %v221, -0.00019511016
  %v223 = vadd.f32 %v222, 0.008332121
  %v224 = vmul.f32 %v221, %v223
  %v225 = vadd.f32 %v224, -0.16666654
  %v226 = vmul.f32 %v221, %v225
  %v227 = vadd.f32 %v226, 1.0
  %v228 = vmul.f32 %v227, %v212
  %vm229 = vweird.f32 %v85
  %v230 = vadd.s32 %v213, 3
  %v231 = vand.u32 %v230, 3
  %vm232 = vcmp.lt.s32.totalorder %v231, 2
  %vm233 = vcmp.eq.s32.totalorder %v231, 0
  %v234 = vxor.u32 %v228, 2147483648
  %v235 = vsel %vm233, %v220, %v234
  %vm236 = vcmp.eq.s32.totalorder %v231, 2
  %v237 = vxor.u32 %v220, 2147483648
  %v238 = vsel %vm236, %v237, %v228
  %v239 = vsel %vm232, %v235, %v238
  %v240 = vsel %vm229, nan, %v239
  %242 = vrot.lane.b32.xlu0 %v240, 64
  %v243 = vpop.permute.xlu0 %242
  %v245 = vadd.f32 %v240, %v243
  %v246 = vrot.slane %v240, 2
  %v248 = vadd.f32 %v245, %v246
  %v249 = vrot.slane %v243, 2
  %v251 = vadd.f32 %v248, %v249
  %v252 = vrot.slane %v240, 4
  %v254 = vadd.f32 %v251, %v252
  %v255 = vrot.slane %v243, 4
  %v257 = vadd.f32 %v254, %v255
  %v258 = vrot.slane %v240, 6
  %v260 = vadd.f32 %v257, %v258
  %v261 = vrot.slane %v243, 6
  %v263 = vadd.f32 %v260, %v261
  %v264 = vmul.f32 %v263, %v263
  %vm265 = vcmask 517120
  %v266 = vsel %vm265, %v264, 0.0
  %267 = vadd.xlane.f32.xlu0 %v266
  %v268 = vpop.xlane.xlu0 %267
  %v269 = vrsqrt.pop %v268
  %v270 = vmul.f32 %v269, %v268
  %v271 = vmul.f32 %v270, %v269
  %v272 = vmul.f32 0.5, %v271
  %v273 = vsub.f32 1.5, %v272
  %v274 = vmul.f32 %v269, %v273
  %v275 = vmul.f32 %v268, %v274
  %vm276 = vcmp.eq.f32.partialorder %v268, inf
  %v277 = vsel %vm276, %v268, %v275
  %vm278 = vcmp.eq.f32.partialorder %v268, 0.0
  %v279 = vand.u32 %v268, 2147483648
  %v280 = vsel %vm278, %v279, %v277
  %v281 = vadd.f32 %v280, 1e-08
  %v282 = vrcp.pop %v281
  %v283 = vmul.f32 %v281, %v282
  %v284 = vsub.f32 1.0, %v283
  %v285 = vmul.f32 %v282, %v284
  %v286 = vadd.f32 %v282, %v285
  %vm287 = vweird.f32 %v281
  %vm288 = vweird.f32 %v282
  %vm289 = vmor %vm287, %vm288
  %v290 = vsel %vm289, %v282, %v286
  %v291 = vand.u32 2147483647, %v281
  %vm292 = vcmp.eq.f32.partialorder %v291, 8.507059e+37
  %v293 = vand.u32 %v281, 2147483648
  %v294 = vor.u32 1.1754944e-38, %v293
  %v295 = vsel %vm292, %v294, %v290
  %v296 = vmul.f32 %v263, %v295
  %v297 = vld [vmem:[%s2] sm:$0xff]
  %v298 = vld [vmem:[%s2 + $0x8] sm:$0xff]
  %v299 = vld [vmem:[%s2 + $0x10] sm:$0xff]
  %v300 = vld [vmem:[%s2 + $0x18] sm:$0xff]
  %v301 = vld [vmem:[%s2 + $0x20] sm:$0xff]
  %v302 = vld [vmem:[%s2 + $0x28] sm:$0xff]
  %v303 = vld [vmem:[%s2 + $0x30] sm:$0xff]
  %v304 = vld [vmem:[%s2 + $0x38] sm:$0xff]
  %v305 = vld [vmem:[%s10] sm:$0x1]
  %v307 = vperm.slane %v305, 0
  %vm309 = vcmask 523264
  %v311 = vsel %vm309, %v296, 0
  %313 = vmatpush.msra.mxu0 0.0
  %314 = vmatpush.msra.mxu0 0.0
  %315 = vmatpush.msra.mxu0 0.0
  %316 = vmatpush.msra.mxu0 0.0
  %317 = vmatpush.msra.mxu0 0.0
  %318 = vmatpush.msra.mxu0 0.0
  %319 = vmatpush.msra.mxu0 0.0
  %320 = vmatpush.msra.mxu0 0.0
  %321 = vmatpush.msra.mxu0 %v304
  %322 = vmatpush.msra.mxu0 %v303
  %323 = vmatpush.msra.mxu0 %v302
  %324 = vmatpush.msra.mxu0 %v301
  %325 = vmatpush.msra.mxu0 %v300
  %326 = vmatpush.msra.mxu0 %v299
  %327 = vmatpush.msra.mxu0 %v298
  %328 = vmatpush.msra.mxu0 %v297
  %329 = vmatmul.f32.gmra.mxu0 %v311
  %v330 = vpop.f32.mrf.mxu0
  %v331 = vadd.f32 %v307, %v330
  %332 = vdwg.mxu0
  %v334 = vrot.slane %v331, 6
  %335 = vrot.lane.b32.xlu0 %v334, 112
  %v336 = vpop.permute.xlu0 %335
  %v338 = vrot.slane %v331, 4
  %339 = vrot.lane.b32.xlu0 %v338, 96
  %v340 = vpop.permute.xlu0 %339
  %v342 = vrot.slane %v331, 2
  %343 = vrot.lane.b32.xlu0 %v342, 80
  %v344 = vpop.permute.xlu0 %343
  %v346 = vsel %vm78, %v331, %v336
  %v347 = vsel %vm82, %v346, %v340
  %vm348 = vcmask 1045504
  %v349 = vsel %vm348, %v347, %v344
  %vm350 = vcmask 130048
  %v351 = vsel %vm350, %v349, -inf
  %352 = vmax.xlane.f32.xlu0 %v351
  %v353 = vpop.xlane.xlu0 %352
  %v354 = vsub.f32 %v349, %v353
  %v355 = vmul.f32 %v354, 1.442695
  %v356 = vpow.pop %v355
  %v357 = vsel %vm350, %v356, 0.0
  %358 = vadd.xlane.f32.xlu0 %v357
  %v359 = vpop.xlane.xlu0 %358
  %v360 = vrcp.pop %v359
  %v361 = vmul.f32 %v359, %v360
  %v362 = vsub.f32 1.0, %v361
  %v363 = vmul.f32 %v360, %v362
  %v364 = vadd.f32 %v360, %v363
  %vm365 = vweird.f32 %v359
  %vm366 = vweird.f32 %v360
  %vm367 = vmor %vm365, %vm366
  %v368 = vsel %vm367, %v360, %v364
  %v369 = vand.u32 2147483647, %v359
  %vm370 = vcmp.eq.f32.partialorder %v369, 8.507059e+37
  %v371 = vand.u32 %v359, 2147483648
  %v372 = vor.u32 1.1754944e-38, %v371
  %v373 = vsel %vm370, %v372, %v368
  %v374 = vmul.f32 %v356, %v373
  %v375 = vld [vmem:[%s3] sm:$0xff]
  %v376 = vld [vmem:[%s3 + $0x8] sm:$0xff]
  %v378 = vsel %vm350, %v374, 0
  %380 = vmatpush.msra.mxu0 0.0
  %381 = vmatpush.msra.mxu0 0.0
  %382 = vmatpush.msra.mxu0 0.0
  %383 = vmatpush.msra.mxu0 0.0
  %384 = vmatpush.msra.mxu0 0.0
  %385 = vmatpush.msra.mxu0 0.0
  %386 = vmatpush.msra.mxu0 0.0
  %387 = vmatpush.msra.mxu0 0.0
  %388 = vmatpush.msra.mxu0 0.0
  %389 = vmatpush.msra.mxu0 0.0
  %390 = vmatpush.msra.mxu0 0.0
  %391 = vmatpush.msra.mxu0 0.0
  %392 = vmatpush.msra.mxu0 0.0
  %393 = vmatpush.msra.mxu0 0.0
  %394 = vmatpush.msra.mxu0 %v376
  %395 = vmatpush.msra.mxu0 %v375
  %396 = vmatmul.f32.gmra.mxu0 %v378
  %v397 = vpop.f32.mrf.mxu0
  %v398 = vadd.f32 0.0, %v397
  %399 = vdwg.mxu0
  %v400 = vld [vmem:[%s4] sm:$0xff]
  %v401 = vld [vmem:[%s4 + $0x8] sm:$0xff]
  %v402 = vld [vmem:[%s4 + $0x10] sm:$0xff]
  %v403 = vld [vmem:[%s4 + $0x18] sm:$0xff]
  %v404 = vld [vmem:[%s5] sm:$0xff]
  %v405 = vld [vmem:[%s5 + $0x8] sm:$0xff]
  %v406 = vld [vmem:[%s5 + $0x10] sm:$0xff]
  %v407 = vld [vmem:[%s5 + $0x18] sm:$0xff]
  %v408 = vld [vmem:[%s10 + $0x1] sm:$0x1]
  %v410 = vperm.slane %v408, 0
  %vm412 = vcmask 261120
  %v414 = vsel %vm412, %v398, 0
  %416 = vmatpush.msra.mxu0 0.0
  %417 = vmatpush.msra.mxu0 0.0
  %418 = vmatpush.msra.mxu0 0.0
  %419 = vmatpush.msra.mxu0 0.0
  %420 = vmatpush.msra.mxu0 0.0
  %421 = vmatpush.msra.mxu0 0.0
  %422 = vmatpush.msra.mxu0 0.0
  %423 = vmatpush.msra.mxu0 0.0
  %424 = vmatpush.msra.mxu0 0.0
  %425 = vmatpush.msra.mxu0 0.0
  %426 = vmatpush.msra.mxu0 0.0
  %427 = vmatpush.msra.mxu0 0.0
  %428 = vmatpush.msra.mxu0 %v403
  %429 = vmatpush.msra.mxu0 %v402
  %430 = vmatpush.msra.mxu0 %v401
  %431 = vmatpush.msra.mxu0 %v400
  %432 = vmatmul.f32.gmra.mxu0 %v414
  %v433 = vpop.f32.mrf.mxu0
  %v434 = vadd.f32 %v410, %v433
  %435 = vdwg.mxu0
  %437 = vrot.lane.b32.xlu0 %v434, 96
  %v438 = vpop.permute.xlu0 %437
  %vm439 = vcmask 64512
  %v440 = vsel %vm439, %v434, 0
  %v442 = vsel %vm439, %v438, 0
  %444 = vmatpush.xpose.msra.mxu0 0.0
  %445 = vmatpush.xpose.msra.mxu0 0.0
  %446 = vmatpush.xpose.msra.mxu0 0.0
  %447 = vmatpush.xpose.msra.mxu0 0.0
  %448 = vmatpush.xpose.msra.mxu0 0.0
  %449 = vmatpush.xpose.msra.mxu0 0.0
  %450 = vmatpush.xpose.msra.mxu0 0.0
  %451 = vmatpush.xpose.msra.mxu0 0.0
  %452 = vmatpush.xpose.msra.mxu0 0.0
  %453 = vmatpush.xpose.msra.mxu0 0.0
  %454 = vmatpush.xpose.msra.mxu0 0.0
  %455 = vmatpush.xpose.msra.mxu0 0.0
  %456 = vmatpush.xpose.msra.mxu0 0.0
  %457 = vmatpush.xpose.msra.mxu0 0.0
  %458 = vmatpush.xpose.msra.mxu0 0.0
  %459 = vmatpush.xpose.msra.mxu0 %v442
  %460 = vmatmul.f32.gmra.mxu0 %v440
  %v461 = vpop.f32.mrf.mxu0
  %v462 = vadd.f32 0.0, %v461
  %463 = vdwg.mxu0
  %v464 = vmul.f32 %v462, 0.35355338
  %v465 = vadd.f32 %v464, %v67
  %v466 = vsel %vm439, %v465, -inf
  %467 = vmax.xlane.f32.xlu0 %v466
  %v468 = vpop.xlane.xlu0 %467
  %v469 = vsub.f32 %v465, %v468
  %v470 = vmul.f32 %v469, 1.442695
  %v471 = vpow.pop %v470
  %v472 = vsel %vm439, %v471, 0.0
  %473 = vadd.xlane.f32.xlu0 %v472
  %v474 = vpop.xlane.xlu0 %473
  %v475 = vrcp.pop %v474
  %v476 = vmul.f32 %v474, %v475
  %v477 = vsub.f32 1.0, %v476
  %v478 = vmul.f32 %v475, %v477
  %v479 = vadd.f32 %v475, %v478
  %vm480 = vweird.f32 %v474
  %vm481 = vweird.f32 %v475
  %vm482 = vmor %vm480, %vm481
  %v483 = vsel %vm482, %v475, %v479
  %v484 = vand.u32 2147483647, %v474
  %vm485 = vcmp.eq.f32.partialorder %v484, 8.507059e+37
  %v486 = vand.u32 %v474, 2147483648
  %v487 = vor.u32 1.1754944e-38, %v486
  %v488 = vsel %vm485, %v487, %v483
  %v489 = vmul.f32 %v471, %v488
  %490 = vrot.lane.b32.xlu0 %v434, 64
  %v491 = vpop.permute.xlu0 %490
  %v494 = vsel %vm439, %v489, 0
  %496 = vmatpush.msra.mxu0 0.0
  %497 = vmatpush.msra.mxu0 0.0
  %498 = vmatpush.msra.mxu0 0.0
  %499 = vmatpush.msra.mxu0 0.0
  %500 = vmatpush.msra.mxu0 0.0
  %501 = vmatpush.msra.mxu0 0.0
  %502 = vmatpush.msra.mxu0 0.0
  %503 = vmatpush.msra.mxu0 0.0
  %504 = vmatpush.msra.mxu0 0.0
  %505 = vmatpush.msra.mxu0 0.0
  %506 = vmatpush.msra.mxu0 0.0
  %507 = vmatpush.msra.mxu0 0.0
  %508 = vmatpush.msra.mxu0 0.0
  %509 = vmatpush.msra.mxu0 0.0
  %510 = vmatpush.msra.mxu0 0.0
  %511 = vmatpush.msra.mxu0 %v491
  %512 = vmatmul.f32.gmra.mxu0 %v494
  %v513 = vpop.f32.mrf.mxu0
  %v514 = vadd.f32 0.0, %v513
  %515 = vdwg.mxu0
  %516 = vrot.lane.b32.xlu0 %v434, 120
  %v517 = vpop.permute.xlu0 %516
  %518 = vrot.lane.b32.xlu0 %v434, 88
  %v519 = vpop.permute.xlu0 %518
  %v520 = vsel %vm439, %v517, 0
  %v522 = vsel %vm439, %v519, 0
  %524 = vmatpush.xpose.msra.mxu0 0.0
  %525 = vmatpush.xpose.msra.mxu0 0.0
  %526 = vmatpush.xpose.msra.mxu0 0.0
  %527 = vmatpush.xpose.msra.mxu0 0.0
  %528 = vmatpush.xpose.msra.mxu0 0.0
  %529 = vmatpush.xpose.msra.mxu0 0.0
  %530 = vmatpush.xpose.msra.mxu0 0.0
  %531 = vmatpush.xpose.msra.mxu0 0.0
  %532 = vmatpush.xpose.msra.mxu0 0.0
  %533 = vmatpush.xpose.msra.mxu0 0.0
  %534 = vmatpush.xpose.msra.mxu0 0.0
  %535 = vmatpush.xpose.msra.mxu0 0.0
  %536 = vmatpush.xpose.msra.mxu0 0.0
  %537 = vmatpush.xpose.msra.mxu0 0.0
  %538 = vmatpush.xpose.msra.mxu0 0.0
  %539 = vmatpush.xpose.msra.mxu0 %v522
  %540 = vmatmul.f32.gmra.mxu0 %v520
  %v541 = vpop.f32.mrf.mxu0
  %v542 = vadd.f32 0.0, %v541
  %543 = vdwg.mxu0
  %v544 = vmul.f32 %v542, 0.35355338
  %v545 = vadd.f32 %v544, %v67
  %v546 = vsel %vm439, %v545, -inf
  %547 = vmax.xlane.f32.xlu0 %v546
  %v548 = vpop.xlane.xlu0 %547
  %v549 = vsub.f32 %v545, %v548
  %v550 = vmul.f32 %v549, 1.442695
  %v551 = vpow.pop %v550
  %v552 = vsel %vm439, %v551, 0.0
  %553 = vadd.xlane.f32.xlu0 %v552
  %v554 = vpop.xlane.xlu0 %553
  %v555 = vrcp.pop %v554
  %v556 = vmul.f32 %v554, %v555
  %v557 = vsub.f32 1.0, %v556
  %v558 = vmul.f32 %v555, %v557
  %v559 = vadd.f32 %v555, %v558
  %vm560 = vweird.f32 %v554
  %vm561 = vweird.f32 %v555
  %vm562 = vmor %vm560, %vm561
  %v563 = vsel %vm562, %v555, %v559
  %v564 = vand.u32 2147483647, %v554
  %vm565 = vcmp.eq.f32.partialorder %v564, 8.507059e+37
  %v566 = vand.u32 %v554, 2147483648
  %v567 = vor.u32 1.1754944e-38, %v566
  %v568 = vsel %vm565, %v567, %v563
  %v569 = vmul.f32 %v551, %v568
  %570 = vrot.lane.b32.xlu0 %v434, 56
  %v571 = vpop.permute.xlu0 %570
  %v574 = vsel %vm439, %v569, 0
  %576 = vmatpush.msra.mxu0 0.0
  %577 = vmatpush.msra.mxu0 0.0
  %578 = vmatpush.msra.mxu0 0.0
  %579 = vmatpush.msra.mxu0 0.0
  %580 = vmatpush.msra.mxu0 0.0
  %581 = vmatpush.msra.mxu0 0.0
  %582 = vmatpush.msra.mxu0 0.0
  %583 = vmatpush.msra.mxu0 0.0
  %584 = vmatpush.msra.mxu0 0.0
  %585 = vmatpush.msra.mxu0 0.0
  %586 = vmatpush.msra.mxu0 0.0
  %587 = vmatpush.msra.mxu0 0.0
  %588 = vmatpush.msra.mxu0 0.0
  %589 = vmatpush.msra.mxu0 0.0
  %590 = vmatpush.msra.mxu0 0.0
  %591 = vmatpush.msra.mxu0 %v571
  %592 = vmatmul.f32.gmra.mxu0 %v574
  %v593 = vpop.f32.mrf.mxu0
  %v594 = vadd.f32 0.0, %v593
  %595 = vdwg.mxu0
  %596 = vrot.lane.b32.xlu0 %v434, 112
  %v597 = vpop.permute.xlu0 %596
  %598 = vrot.lane.b32.xlu0 %v434, 80
  %v599 = vpop.permute.xlu0 %598
  %v600 = vsel %vm439, %v597, 0
  %v602 = vsel %vm439, %v599, 0
  %604 = vmatpush.xpose.msra.mxu0 0.0
  %605 = vmatpush.xpose.msra.mxu0 0.0
  %606 = vmatpush.xpose.msra.mxu0 0.0
  %607 = vmatpush.xpose.msra.mxu0 0.0
  %608 = vmatpush.xpose.msra.mxu0 0.0
  %609 = vmatpush.xpose.msra.mxu0 0.0
  %610 = vmatpush.xpose.msra.mxu0 0.0
  %611 = vmatpush.xpose.msra.mxu0 0.0
  %612 = vmatpush.xpose.msra.mxu0 0.0
  %613 = vmatpush.xpose.msra.mxu0 0.0
  %614 = vmatpush.xpose.msra.mxu0 0.0
  %615 = vmatpush.xpose.msra.mxu0 0.0
  %616 = vmatpush.xpose.msra.mxu0 0.0
  %617 = vmatpush.xpose.msra.mxu0 0.0
  %618 = vmatpush.xpose.msra.mxu0 0.0
  %619 = vmatpush.xpose.msra.mxu0 %v602
  %620 = vmatmul.f32.gmra.mxu0 %v600
  %v621 = vpop.f32.mrf.mxu0
  %v622 = vadd.f32 0.0, %v621
  %623 = vdwg.mxu0
  %v624 = vmul.f32 %v622, 0.35355338
  %v625 = vadd.f32 %v624, %v67
  %v626 = vsel %vm439, %v625, -inf
  %627 = vmax.xlane.f32.xlu0 %v626
  %v628 = vpop.xlane.xlu0 %627
  %v629 = vsub.f32 %v625, %v628
  %v630 = vmul.f32 %v629, 1.442695
  %v631 = vpow.pop %v630
  %v632 = vsel %vm439, %v631, 0.0
  %633 = vadd.xlane.f32.xlu0 %v632
  %v634 = vpop.xlane.xlu0 %633
  %v635 = vrcp.pop %v634
  %v636 = vmul.f32 %v634, %v635
  %v637 = vsub.f32 1.0, %v636
  %v638 = vmul.f32 %v635, %v637
  %v639 = vadd.f32 %v635, %v638
  %vm640 = vweird.f32 %v634
  %vm641 = vweird.f32 %v635
  %vm642 = vmor %vm640, %vm641
  %v643 = vsel %vm642, %v635, %v639
  %v644 = vand.u32 2147483647, %v634
  %vm645 = vcmp.eq.f32.partialorder %v644, 8.507059e+37
  %v646 = vand.u32 %v634, 2147483648
  %v647 = vor.u32 1.1754944e-38, %v646
  %v648 = vsel %vm645, %v647, %v643
  %v649 = vmul.f32 %v631, %v648
  %650 = vrot.lane.b32.xlu0 %v434, 48
  %v651 = vpop.permute.xlu0 %650
  %v654 = vsel %vm439, %v649, 0
  %656 = vmatpush.msra.mxu0 0.0
  %657 = vmatpush.msra.mxu0 0.0
  %658 = vmatpush.msra.mxu0 0.0
  %659 = vmatpush.msra.mxu0 0.0
  %660 = vmatpush.msra.mxu0 0.0
  %661 = vmatpush.msra.mxu0 0.0
  %662 = vmatpush.msra.mxu0 0.0
  %663 = vmatpush.msra.mxu0 0.0
  %664 = vmatpush.msra.mxu0 0.0
  %665 = vmatpush.msra.mxu0 0.0
  %666 = vmatpush.msra.mxu0 0.0
  %667 = vmatpush.msra.mxu0 0.0
  %668 = vmatpush.msra.mxu0 0.0
  %669 = vmatpush.msra.mxu0 0.0
  %670 = vmatpush.msra.mxu0 0.0
  %671 = vmatpush.msra.mxu0 %v651
  %672 = vmatmul.f32.gmra.mxu0 %v654
  %v673 = vpop.f32.mrf.mxu0
  %v674 = vadd.f32 0.0, %v673
  %675 = vdwg.mxu0
  %676 = vrot.lane.b32.xlu0 %v434, 104
  %v677 = vpop.permute.xlu0 %676
  %678 = vrot.lane.b32.xlu0 %v434, 72
  %v679 = vpop.permute.xlu0 %678
  %v680 = vsel %vm439, %v677, 0
  %v682 = vsel %vm439, %v679, 0
  %684 = vmatpush.xpose.msra.mxu0 0.0
  %685 = vmatpush.xpose.msra.mxu0 0.0
  %686 = vmatpush.xpose.msra.mxu0 0.0
  %687 = vmatpush.xpose.msra.mxu0 0.0
  %688 = vmatpush.xpose.msra.mxu0 0.0
  %689 = vmatpush.xpose.msra.mxu0 0.0
  %690 = vmatpush.xpose.msra.mxu0 0.0
  %691 = vmatpush.xpose.msra.mxu0 0.0
  %692 = vmatpush.xpose.msra.mxu0 0.0
  %693 = vmatpush.xpose.msra.mxu0 0.0
  %694 = vmatpush.xpose.msra.mxu0 0.0
  %695 = vmatpush.xpose.msra.mxu0 0.0
  %696 = vmatpush.xpose.msra.mxu0 0.0
  %697 = vmatpush.xpose.msra.mxu0 0.0
  %698 = vmatpush.xpose.msra.mxu0 0.0
  %699 = vmatpush.xpose.msra.mxu0 %v682
  %700 = vmatmul.f32.gmra.mxu0 %v680
  %v701 = vpop.f32.mrf.mxu0
  %v702 = vadd.f32 0.0, %v701
  %703 = vdwg.mxu0
  %v704 = vmul.f32 %v702, 0.35355338
  %v705 = vadd.f32 %v704, %v67
  %v706 = vsel %vm439, %v705, -inf
  %707 = vmax.xlane.f32.xlu0 %v706
  %v708 = vpop.xlane.xlu0 %707
  %v709 = vsub.f32 %v705, %v708
  %v710 = vmul.f32 %v709, 1.442695
  %v711 = vpow.pop %v710
  %v712 = vsel %vm439, %v711, 0.0
  %713 = vadd.xlane.f32.xlu0 %v712
  %v714 = vpop.xlane.xlu0 %713
  %v715 = vrcp.pop %v714
  %v716 = vmul.f32 %v714, %v715
  %v717 = vsub.f32 1.0, %v716
  %v718 = vmul.f32 %v715, %v717
  %v719 = vadd.f32 %v715, %v718
  %vm720 = vweird.f32 %v714
  %vm721 = vweird.f32 %v715
  %vm722 = vmor %vm720, %vm721
  %v723 = vsel %vm722, %v715, %v719
  %v724 = vand.u32 2147483647, %v714
  %vm725 = vcmp.eq.f32.partialorder %v724, 8.507059e+37
  %v726 = vand.u32 %v714, 2147483648
  %v727 = vor.u32 1.1754944e-38, %v726
  %v728 = vsel %vm725, %v727, %v723
  %v729 = vmul.f32 %v711, %v728
  %730 = vrot.lane.b32.xlu0 %v434, 40
  %v731 = vpop.permute.xlu0 %730
  %v734 = vsel %vm439, %v729, 0
  %736 = vmatpush.msra.mxu0 0.0
  %737 = vmatpush.msra.mxu0 0.0
  %738 = vmatpush.msra.mxu0 0.0
  %739 = vmatpush.msra.mxu0 0.0
  %740 = vmatpush.msra.mxu0 0.0
  %741 = vmatpush.msra.mxu0 0.0
  %742 = vmatpush.msra.mxu0 0.0
  %743 = vmatpush.msra.mxu0 0.0
  %744 = vmatpush.msra.mxu0 0.0
  %745 = vmatpush.msra.mxu0 0.0
  %746 = vmatpush.msra.mxu0 0.0
  %747 = vmatpush.msra.mxu0 0.0
  %748 = vmatpush.msra.mxu0 0.0
  %749 = vmatpush.msra.mxu0 0.0
  %750 = vmatpush.msra.mxu0 0.0
  %751 = vmatpush.msra.mxu0 %v731
  %752 = vmatmul.f32.gmra.mxu0 %v734
  %v753 = vpop.f32.mrf.mxu0
  %v754 = vadd.f32 0.0, %v753
  %755 = vdwg.mxu0
  %757 = vrot.lane.b32.xlu0 %v594, 8
  %v758 = vpop.permute.xlu0 %757
  %761 = vrot.lane.b32.xlu0 %v674, 16
  %v762 = vpop.permute.xlu0 %761
  %765 = vrot.lane.b32.xlu0 %v754, 24
  %v766 = vpop.permute.xlu0 %765
  %v768 = vsel %vm439, %v514, %v758
  %v769 = vsel %vm350, %v768, %v762
  %vm770 = vcmask 195584
  %v771 = vsel %vm770, %v769, %v766
  %v772 = vld [vmem:[%s10 + $0x2] sm:$0x1]
  %v774 = vperm.slane %v772, 0
  %v777 = vsel %vm412, %v771, 0
  %779 = vmatpush.msra.mxu0 0.0
  %780 = vmatpush.msra.mxu0 0.0
  %781 = vmatpush.msra.mxu0 0.0
  %782 = vmatpush.msra.mxu0 0.0
  %783 = vmatpush.msra.mxu0 0.0
  %784 = vmatpush.msra.mxu0 0.0
  %785 = vmatpush.msra.mxu0 0.0
  %786 = vmatpush.msra.mxu0 0.0
  %787 = vmatpush.msra.mxu0 0.0
  %788 = vmatpush.msra.mxu0 0.0
  %789 = vmatpush.msra.mxu0 0.0
  %790 = vmatpush.msra.mxu0 0.0
  %791 = vmatpush.msra.mxu0 %v407
  %792 = vmatpush.msra.mxu0 %v406
  %793 = vmatpush.msra.mxu0 %v405
  %794 = vmatpush.msra.mxu0 %v404
  %795 = vmatmul.f32.gmra.mxu0 %v777
  %v796 = vpop.f32.mrf.mxu0
  %v797 = vadd.f32 %v774, %v796
  %798 = vdwg.mxu0
  %v799 = vadd.f32 %v398, %v797
  %v800 = vsel %vm412, %v799, 0.0
  %801 = vadd.xlane.f32.xlu0 %v800
  %v802 = vpop.xlane.xlu0 %801
  %v803 = vrcp.pop 32.0
  %v804 = vmul.f32 32.0, %v803
  %v805 = vsub.f32 1.0, %v804
  %v806 = vmul.f32 %v803, %v805
  %v807 = vadd.f32 %v803, %v806
  %vm808 = vweird.f32 %v803
  %v809 = vsel %vm808, %v803, %v807
  %v810 = vmul.f32 %v802, %v809
  %v811 = vsub.f32 %v799, %v810
  %v812 = vmul.f32 %v811, %v811
  %v813 = vsel %vm412, %v812, 0.0
  %814 = vadd.xlane.f32.xlu0 %v813
  %v815 = vpop.xlane.xlu0 %814
  %v816 = vmul.f32 %v815, %v809
  %v817 = vadd.f32 %v816, 1e-05
  %v818 = vrsqrt.pop %v817
  %v819 = vmul.f32 %v818, %v817
  %v820 = vmul.f32 %v819, %v818
  %v821 = vmul.f32 0.5, %v820
  %v822 = vsub.f32 1.5, %v821
  %v823 = vmul.f32 %v818, %v822
  %vm824 = vweird.f32 %v817
  %vm825 = vweird.f32 %v818
  %vm826 = vmor %vm824, %vm825
  %v827 = vsel %vm826, %v818, %v823
  %v828 = vmul.f32 %v811, %v827
  %v829 = vld [vmem:[%s10 + $0x9] sm:$0x1]
  %v831 = vperm.slane %v829, 0
  %v833 = vmul.f32 %v828, %v831
  %v834 = vld [vmem:[%s10 + $0xa] sm:$0x1]
  %v836 = vperm.slane %v834, 0
  %v838 = vadd.f32 %v833, %v836
  %v839 = vld [vmem:[%s4 + $0x20] sm:$0xff]
  %v840 = vld [vmem:[%s4 + $0x28] sm:$0xff]
  %v841 = vld [vmem:[%s4 + $0x30] sm:$0xff]
  %v842 = vld [vmem:[%s4 + $0x38] sm:$0xff]
  %v843 = vld [vmem:[%s5 + $0x20] sm:$0xff]
  %v844 = vld [vmem:[%s5 + $0x28] sm:$0xff]
  %v845 = vld [vmem:[%s5 + $0x30] sm:$0xff]
  %v846 = vld [vmem:[%s5 + $0x38] sm:$0xff]
  %v847 = vld [vmem:[%s10 + $0x3] sm:$0x1]
  %v849 = vperm.slane %v847, 0
  %v852 = vsel %vm412, %v838, 0
  %854 = vmatpush.msra.mxu0 0.0
  %855 = vmatpush.msra.mxu0 0.0
  %856 = vmatpush.msra.mxu0 0.0
  %857 = vmatpush.msra.mxu0 0.0
  %858 = vmatpush.msra.mxu0 0.0
  %859 = vmatpush.msra.mxu0 0.0
  %860 = vmatpush.msra.mxu0 0.0
  %861 = vmatpush.msra.mxu0 0.0
  %862 = vmatpush.msra.mxu0 0.0
  %863 = vmatpush.msra.mxu0 0.0
  %864 = vmatpush.msra.mxu0 0.0
  %865 = vmatpush.msra.mxu0 0.0
  %866 = vmatpush.msra.mxu0 %v842
  %867 = vmatpush.msra.mxu0 %v841
  %868 = vmatpush.msra.mxu0 %v840
  %869 = vmatpush.msra.mxu0 %v839
  %870 = vmatmul.f32.gmra.mxu0 %v852
  %v871 = vpop.f32.mrf.mxu0
  %v872 = vadd.f32 %v849, %v871
  %873 = vdwg.mxu0
  %875 = vrot.lane.b32.xlu0 %v872, 96
  %v876 = vpop.permute.xlu0 %875
  %v877 = vsel %vm439, %v872, 0
  %v879 = vsel %vm439, %v876, 0
  %881 = vmatpush.xpose.msra.mxu0 0.0
  %882 = vmatpush.xpose.msra.mxu0 0.0
  %883 = vmatpush.xpose.msra.mxu0 0.0
  %884 = vmatpush.xpose.msra.mxu0 0.0
  %885 = vmatpush.xpose.msra.mxu0 0.0
  %886 = vmatpush.xpose.msra.mxu0 0.0
  %887 = vmatpush.xpose.msra.mxu0 0.0
  %888 = vmatpush.xpose.msra.mxu0 0.0
  %889 = vmatpush.xpose.msra.mxu0 0.0
  %890 = vmatpush.xpose.msra.mxu0 0.0
  %891 = vmatpush.xpose.msra.mxu0 0.0
  %892 = vmatpush.xpose.msra.mxu0 0.0
  %893 = vmatpush.xpose.msra.mxu0 0.0
  %894 = vmatpush.xpose.msra.mxu0 0.0
  %895 = vmatpush.xpose.msra.mxu0 0.0
  %896 = vmatpush.xpose.msra.mxu0 %v879
  %897 = vmatmul.f32.gmra.mxu0 %v877
  %v898 = vpop.f32.mrf.mxu0
  %v899 = vadd.f32 0.0, %v898
  %900 = vdwg.mxu0
  %v901 = vmul.f32 %v899, 0.35355338
  %v902 = vadd.f32 %v901, %v67
  %v903 = vsel %vm439, %v902, -inf
  %904 = vmax.xlane.f32.xlu0 %v903
  %v905 = vpop.xlane.xlu0 %904
  %v906 = vsub.f32 %v902, %v905
  %v907 = vmul.f32 %v906, 1.442695
  %v908 = vpow.pop %v907
  %v909 = vsel %vm439, %v908, 0.0
  %910 = vadd.xlane.f32.xlu0 %v909
  %v911 = vpop.xlane.xlu0 %910
  %v912 = vrcp.pop %v911
  %v913 = vmul.f32 %v911, %v912
  %v914 = vsub.f32 1.0, %v913
  %v915 = vmul.f32 %v912, %v914
  %v916 = vadd.f32 %v912, %v915
  %vm917 = vweird.f32 %v911
  %vm918 = vweird.f32 %v912
  %vm919 = vmor %vm917, %vm918
  %v920 = vsel %vm919, %v912, %v916
  %v921 = vand.u32 2147483647, %v911
  %vm922 = vcmp.eq.f32.partialorder %v921, 8.507059e+37
  %v923 = vand.u32 %v911, 2147483648
  %v924 = vor.u32 1.1754944e-38, %v923
  %v925 = vsel %vm922, %v924, %v920
  %v926 = vmul.f32 %v908, %v925
  %927 = vrot.lane.b32.xlu0 %v872, 64
  %v928 = vpop.permute.xlu0 %927
  %v931 = vsel %vm439, %v926, 0
  %933 = vmatpush.msra.mxu0 0.0
  %934 = vmatpush.msra.mxu0 0.0
  %935 = vmatpush.msra.mxu0 0.0
  %936 = vmatpush.msra.mxu0 0.0
  %937 = vmatpush.msra.mxu0 0.0
  %938 = vmatpush.msra.mxu0 0.0
  %939 = vmatpush.msra.mxu0 0.0
  %940 = vmatpush.msra.mxu0 0.0
  %941 = vmatpush.msra.mxu0 0.0
  %942 = vmatpush.msra.mxu0 0.0
  %943 = vmatpush.msra.mxu0 0.0
  %944 = vmatpush.msra.mxu0 0.0
  %945 = vmatpush.msra.mxu0 0.0
  %946 = vmatpush.msra.mxu0 0.0
  %947 = vmatpush.msra.mxu0 0.0
  %948 = vmatpush.msra.mxu0 %v928
  %949 = vmatmul.f32.gmra.mxu0 %v931
  %v950 = vpop.f32.mrf.mxu0
  %v951 = vadd.f32 0.0, %v950
  %952 = vdwg.mxu0
  %953 = vrot.lane.b32.xlu0 %v872, 120
  %v954 = vpop.permute.xlu0 %953
  %955 = vrot.lane.b32.xlu0 %v872, 88
  %v956 = vpop.permute.xlu0 %955
  %v957 = vsel %vm439, %v954, 0
  %v959 = vsel %vm439, %v956, 0
  %961 = vmatpush.xpose.msra.mxu0 0.0
  %962 = vmatpush.xpose.msra.mxu0 0.0
  %963 = vmatpush.xpose.msra.mxu0 0.0
  %964 = vmatpush.xpose.msra.mxu0 0.0
  %965 = vmatpush.xpose.msra.mxu0 0.0
  %966 = vmatpush.xpose.msra.mxu0 0.0
  %967 = vmatpush.xpose.msra.mxu0 0.0
  %968 = vmatpush.xpose.msra.mxu0 0.0
  %969 = vmatpush.xpose.msra.mxu0 0.0
  %970 = vmatpush.xpose.msra.mxu0 0.0
  %971 = vmatpush.xpose.msra.mxu0 0.0
  %972 = vmatpush.xpose.msra.mxu0 0.0
  %973 = vmatpush.xpose.msra.mxu0 0.0
  %974 = vmatpush.xpose.msra.mxu0 0.0
  %975 = vmatpush.xpose.msra.mxu0 0.0
  %976 = vmatpush.xpose.msra.mxu0 %v959
  %977 = vmatmul.f32.gmra.mxu0 %v957
  %v978 = vpop.f32.mrf.mxu0
  %v979 = vadd.f32 0.0, %v978
  %980 = vdwg.mxu0
  %v981 = vmul.f32 %v979, 0.35355338
  %v982 = vadd.f32 %v981, %v67
  %v983 = vsel %vm439, %v982, -inf
  %984 = vmax.xlane.f32.xlu0 %v983
  %v985 = vpop.xlane.xlu0 %984
  %v986 = vsub.f32 %v982, %v985
  %v987 = vmul.f32 %v986, 1.442695
  %v988 = vpow.pop %v987
  %v989 = vsel %vm439, %v988, 0.0
  %990 = vadd.xlane.f32.xlu0 %v989
  %v991 = vpop.xlane.xlu0 %990
  %v992 = vrcp.pop %v991
  %v993 = vmul.f32 %v991, %v992
  %v994 = vsub.f32 1.0, %v993
  %v995 = vmul.f32 %v992, %v994
  %v996 = vadd.f32 %v992, %v995
  %vm997 = vweird.f32 %v991
  %vm998 = vweird.f32 %v992
  %vm999 = vmor %vm997, %vm998
  %v1000 = vsel %vm999, %v992, %v996
  %v1001 = vand.u32 2147483647, %v991
  %vm1002 = vcmp.eq.f32.partialorder %v1001, 8.507059e+37
  %v1003 = vand.u32 %v991, 2147483648
  %v1004 = vor.u32 1.1754944e-38, %v1003
  %v1005 = vsel %vm1002, %v1004, %v1000
  %v1006 = vmul.f32 %v988, %v1005
  %1007 = vrot.lane.b32.xlu0 %v872, 56
  %v1008 = vpop.permute.xlu0 %1007
  %v1011 = vsel %vm439, %v1006, 0
  %1013 = vmatpush.msra.mxu0 0.0
  %1014 = vmatpush.msra.mxu0 0.0
  %1015 = vmatpush.msra.mxu0 0.0
  %1016 = vmatpush.msra.mxu0 0.0
  %1017 = vmatpush.msra.mxu0 0.0
  %1018 = vmatpush.msra.mxu0 0.0
  %1019 = vmatpush.msra.mxu0 0.0
  %1020 = vmatpush.msra.mxu0 0.0
  %1021 = vmatpush.msra.mxu0 0.0
  %1022 = vmatpush.msra.mxu0 0.0
  %1023 = vmatpush.msra.mxu0 0.0
  %1024 = vmatpush.msra.mxu0 0.0
  %1025 = vmatpush.msra.mxu0 0.0
  %1026 = vmatpush.msra.mxu0 0.0
  %1027 = vmatpush.msra.mxu0 0.0
  %1028 = vmatpush.msra.mxu0 %v1008
  %1029 = vmatmul.f32.gmra.mxu0 %v1011
  %v1030 = vpop.f32.mrf.mxu0
  %v1031 = vadd.f32 0.0, %v1030
  %1032 = vdwg.mxu0
  %1033 = vrot.lane.b32.xlu0 %v872, 112
  %v1034 = vpop.permute.xlu0 %1033
  %1035 = vrot.lane.b32.xlu0 %v872, 80
  %v1036 = vpop.permute.xlu0 %1035
  %v1037 = vsel %vm439, %v1034, 0
  %v1039 = vsel %vm439, %v1036, 0
  %1041 = vmatpush.xpose.msra.mxu0 0.0
  %1042 = vmatpush.xpose.msra.mxu0 0.0
  %1043 = vmatpush.xpose.msra.mxu0 0.0
  %1044 = vmatpush.xpose.msra.mxu0 0.0
  %1045 = vmatpush.xpose.msra.mxu0 0.0
  %1046 = vmatpush.xpose.msra.mxu0 0.0
  %1047 = vmatpush.xpose.msra.mxu0 0.0
  %1048 = vmatpush.xpose.msra.mxu0 0.0
  %1049 = vmatpush.xpose.msra.mxu0 0.0
  %1050 = vmatpush.xpose.msra.mxu0 0.0
  %1051 = vmatpush.xpose.msra.mxu0 0.0
  %1052 = vmatpush.xpose.msra.mxu0 0.0
  %1053 = vmatpush.xpose.msra.mxu0 0.0
  %1054 = vmatpush.xpose.msra.mxu0 0.0
  %1055 = vmatpush.xpose.msra.mxu0 0.0
  %1056 = vmatpush.xpose.msra.mxu0 %v1039
  %1057 = vmatmul.f32.gmra.mxu0 %v1037
  %v1058 = vpop.f32.mrf.mxu0
  %v1059 = vadd.f32 0.0, %v1058
  %1060 = vdwg.mxu0
  %v1061 = vmul.f32 %v1059, 0.35355338
  %v1062 = vadd.f32 %v1061, %v67
  %v1063 = vsel %vm439, %v1062, -inf
  %1064 = vmax.xlane.f32.xlu0 %v1063
  %v1065 = vpop.xlane.xlu0 %1064
  %v1066 = vsub.f32 %v1062, %v1065
  %v1067 = vmul.f32 %v1066, 1.442695
  %v1068 = vpow.pop %v1067
  %v1069 = vsel %vm439, %v1068, 0.0
  %1070 = vadd.xlane.f32.xlu0 %v1069
  %v1071 = vpop.xlane.xlu0 %1070
  %v1072 = vrcp.pop %v1071
  %v1073 = vmul.f32 %v1071, %v1072
  %v1074 = vsub.f32 1.0, %v1073
  %v1075 = vmul.f32 %v1072, %v1074
  %v1076 = vadd.f32 %v1072, %v1075
  %vm1077 = vweird.f32 %v1071
  %vm1078 = vweird.f32 %v1072
  %vm1079 = vmor %vm1077, %vm1078
  %v1080 = vsel %vm1079, %v1072, %v1076
  %v1081 = vand.u32 2147483647, %v1071
  %vm1082 = vcmp.eq.f32.partialorder %v1081, 8.507059e+37
  %v1083 = vand.u32 %v1071, 2147483648
  %v1084 = vor.u32 1.1754944e-38, %v1083
  %v1085 = vsel %vm1082, %v1084, %v1080
  %v1086 = vmul.f32 %v1068, %v1085
  %1087 = vrot.lane.b32.xlu0 %v872, 48
  %v1088 = vpop.permute.xlu0 %1087
  %v1091 = vsel %vm439, %v1086, 0
  %1093 = vmatpush.msra.mxu0 0.0
  %1094 = vmatpush.msra.mxu0 0.0
  %1095 = vmatpush.msra.mxu0 0.0
  %1096 = vmatpush.msra.mxu0 0.0
  %1097 = vmatpush.msra.mxu0 0.0
  %1098 = vmatpush.msra.mxu0 0.0
  %1099 = vmatpush.msra.mxu0 0.0
  %1100 = vmatpush.msra.mxu0 0.0
  %1101 = vmatpush.msra.mxu0 0.0
  %1102 = vmatpush.msra.mxu0 0.0
  %1103 = vmatpush.msra.mxu0 0.0
  %1104 = vmatpush.msra.mxu0 0.0
  %1105 = vmatpush.msra.mxu0 0.0
  %1106 = vmatpush.msra.mxu0 0.0
  %1107 = vmatpush.msra.mxu0 0.0
  %1108 = vmatpush.msra.mxu0 %v1088
  %1109 = vmatmul.f32.gmra.mxu0 %v1091
  %v1110 = vpop.f32.mrf.mxu0
  %v1111 = vadd.f32 0.0, %v1110
  %1112 = vdwg.mxu0
  %1113 = vrot.lane.b32.xlu0 %v872, 104
  %v1114 = vpop.permute.xlu0 %1113
  %1115 = vrot.lane.b32.xlu0 %v872, 72
  %v1116 = vpop.permute.xlu0 %1115
  %v1117 = vsel %vm439, %v1114, 0
  %v1119 = vsel %vm439, %v1116, 0
  %1121 = vmatpush.xpose.msra.mxu0 0.0
  %1122 = vmatpush.xpose.msra.mxu0 0.0
  %1123 = vmatpush.xpose.msra.mxu0 0.0
  %1124 = vmatpush.xpose.msra.mxu0 0.0
  %1125 = vmatpush.xpose.msra.mxu0 0.0
  %1126 = vmatpush.xpose.msra.mxu0 0.0
  %1127 = vmatpush.xpose.msra.mxu0 0.0
  %1128 = vmatpush.xpose.msra.mxu0 0.0
  %1129 = vmatpush.xpose.msra.mxu0 0.0
  %1130 = vmatpush.xpose.msra.mxu0 0.0
  %1131 = vmatpush.xpose.msra.mxu0 0.0
  %1132 = vmatpush.xpose.msra.mxu0 0.0
  %1133 = vmatpush.xpose.msra.mxu0 0.0
  %1134 = vmatpush.xpose.msra.mxu0 0.0
  %1135 = vmatpush.xpose.msra.mxu0 0.0
  %1136 = vmatpush.xpose.msra.mxu0 %v1119
  %1137 = vmatmul.f32.gmra.mxu0 %v1117
  %v1138 = vpop.f32.mrf.mxu0
  %v1139 = vadd.f32 0.0, %v1138
  %1140 = vdwg.mxu0
  %v1141 = vmul.f32 %v1139, 0.35355338
  %v1142 = vadd.f32 %v1141, %v67
  %v1143 = vsel %vm439, %v1142, -inf
  %1144 = vmax.xlane.f32.xlu0 %v1143
  %v1145 = vpop.xlane.xlu0 %1144
  %v1146 = vsub.f32 %v1142, %v1145
  %v1147 = vmul.f32 %v1146, 1.442695
  %v1148 = vpow.pop %v1147
  %v1149 = vsel %vm439, %v1148, 0.0
  %1150 = vadd.xlane.f32.xlu0 %v1149
  %v1151 = vpop.xlane.xlu0 %1150
  %v1152 = vrcp.pop %v1151
  %v1153 = vmul.f32 %v1151, %v1152
  %v1154 = vsub.f32 1.0, %v1153
  %v1155 = vmul.f32 %v1152, %v1154
  %v1156 = vadd.f32 %v1152, %v1155
  %vm1157 = vweird.f32 %v1151
  %vm1158 = vweird.f32 %v1152
  %vm1159 = vmor %vm1157, %vm1158
  %v1160 = vsel %vm1159, %v1152, %v1156
  %v1161 = vand.u32 2147483647, %v1151
  %vm1162 = vcmp.eq.f32.partialorder %v1161, 8.507059e+37
  %v1163 = vand.u32 %v1151, 2147483648
  %v1164 = vor.u32 1.1754944e-38, %v1163
  %v1165 = vsel %vm1162, %v1164, %v1160
  %v1166 = vmul.f32 %v1148, %v1165
  %1167 = vrot.lane.b32.xlu0 %v872, 40
  %v1168 = vpop.permute.xlu0 %1167
  %v1171 = vsel %vm439, %v1166, 0
  %1173 = vmatpush.msra.mxu0 0.0
  %1174 = vmatpush.msra.mxu0 0.0
  %1175 = vmatpush.msra.mxu0 0.0
  %1176 = vmatpush.msra.mxu0 0.0
  %1177 = vmatpush.msra.mxu0 0.0
  %1178 = vmatpush.msra.mxu0 0.0
  %1179 = vmatpush.msra.mxu0 0.0
  %1180 = vmatpush.msra.mxu0 0.0
  %1181 = vmatpush.msra.mxu0 0.0
  %1182 = vmatpush.msra.mxu0 0.0
  %1183 = vmatpush.msra.mxu0 0.0
  %1184 = vmatpush.msra.mxu0 0.0
  %1185 = vmatpush.msra.mxu0 0.0
  %1186 = vmatpush.msra.mxu0 0.0
  %1187 = vmatpush.msra.mxu0 0.0
  %1188 = vmatpush.msra.mxu0 %v1168
  %1189 = vmatmul.f32.gmra.mxu0 %v1171
  %v1190 = vpop.f32.mrf.mxu0
  %v1191 = vadd.f32 0.0, %v1190
  %1192 = vdwg.mxu0
  %1194 = vrot.lane.b32.xlu0 %v1031, 8
  %v1195 = vpop.permute.xlu0 %1194
  %1198 = vrot.lane.b32.xlu0 %v1111, 16
  %v1199 = vpop.permute.xlu0 %1198
  %1202 = vrot.lane.b32.xlu0 %v1191, 24
  %v1203 = vpop.permute.xlu0 %1202
  %v1205 = vsel %vm439, %v951, %v1195
  %v1206 = vsel %vm350, %v1205, %v1199
  %v1207 = vsel %vm770, %v1206, %v1203
  %v1208 = vld [vmem:[%s10 + $0x4] sm:$0x1]
  %v1210 = vperm.slane %v1208, 0
  %v1213 = vsel %vm412, %v1207, 0
  %1215 = vmatpush.msra.mxu0 0.0
  %1216 = vmatpush.msra.mxu0 0.0
  %1217 = vmatpush.msra.mxu0 0.0
  %1218 = vmatpush.msra.mxu0 0.0
  %1219 = vmatpush.msra.mxu0 0.0
  %1220 = vmatpush.msra.mxu0 0.0
  %1221 = vmatpush.msra.mxu0 0.0
  %1222 = vmatpush.msra.mxu0 0.0
  %1223 = vmatpush.msra.mxu0 0.0
  %1224 = vmatpush.msra.mxu0 0.0
  %1225 = vmatpush.msra.mxu0 0.0
  %1226 = vmatpush.msra.mxu0 0.0
  %1227 = vmatpush.msra.mxu0 %v846
  %1228 = vmatpush.msra.mxu0 %v845
  %1229 = vmatpush.msra.mxu0 %v844
  %1230 = vmatpush.msra.mxu0 %v843
  %1231 = vmatmul.f32.gmra.mxu0 %v1213
  %v1232 = vpop.f32.mrf.mxu0
  %v1233 = vadd.f32 %v1210, %v1232
  %1234 = vdwg.mxu0
  %v1235 = vadd.f32 %v838, %v1233
  %v1236 = vsel %vm412, %v1235, 0.0
  %1237 = vadd.xlane.f32.xlu0 %v1236
  %v1238 = vpop.xlane.xlu0 %1237
  %v1239 = vmul.f32 %v1238, %v809
  %v1240 = vsub.f32 %v1235, %v1239
  %v1241 = vmul.f32 %v1240, %v1240
  %v1242 = vsel %vm412, %v1241, 0.0
  %1243 = vadd.xlane.f32.xlu0 %v1242
  %v1244 = vpop.xlane.xlu0 %1243
  %v1245 = vmul.f32 %v1244, %v809
  %v1246 = vadd.f32 %v1245, 1e-05
  %v1247 = vrsqrt.pop %v1246
  %v1248 = vmul.f32 %v1247, %v1246
  %v1249 = vmul.f32 %v1248, %v1247
  %v1250 = vmul.f32 0.5, %v1249
  %v1251 = vsub.f32 1.5, %v1250
  %v1252 = vmul.f32 %v1247, %v1251
  %vm1253 = vweird.f32 %v1246
  %vm1254 = vweird.f32 %v1247
  %vm1255 = vmor %vm1253, %vm1254
  %v1256 = vsel %vm1255, %v1247, %v1252
  %v1257 = vmul.f32 %v1240, %v1256
  %v1258 = vld [vmem:[%s10 + $0xb] sm:$0x1]
  %v1260 = vperm.slane %v1258, 0
  %v1262 = vmul.f32 %v1257, %v1260
  %v1263 = vld [vmem:[%s10 + $0xc] sm:$0x1]
  %v1265 = vperm.slane %v1263, 0
  %v1267 = vadd.f32 %v1262, %v1265
  %v1268 = vld [vmem:[%s4 + $0x40] sm:$0xff]
  %v1269 = vld [vmem:[%s4 + $0x48] sm:$0xff]
  %v1270 = vld [vmem:[%s4 + $0x50] sm:$0xff]
  %v1271 = vld [vmem:[%s4 + $0x58] sm:$0xff]
  %v1272 = vld [vmem:[%s5 + $0x40] sm:$0xff]
  %v1273 = vld [vmem:[%s5 + $0x48] sm:$0xff]
  %v1274 = vld [vmem:[%s5 + $0x50] sm:$0xff]
  %v1275 = vld [vmem:[%s5 + $0x58] sm:$0xff]
  %v1276 = vld [vmem:[%s10 + $0x5] sm:$0x1]
  %v1278 = vperm.slane %v1276, 0
  %v1281 = vsel %vm412, %v1267, 0
  %1283 = vmatpush.msra.mxu0 0.0
  %1284 = vmatpush.msra.mxu0 0.0
  %1285 = vmatpush.msra.mxu0 0.0
  %1286 = vmatpush.msra.mxu0 0.0
  %1287 = vmatpush.msra.mxu0 0.0
  %1288 = vmatpush.msra.mxu0 0.0
  %1289 = vmatpush.msra.mxu0 0.0
  %1290 = vmatpush.msra.mxu0 0.0
  %1291 = vmatpush.msra.mxu0 0.0
  %1292 = vmatpush.msra.mxu0 0.0
  %1293 = vmatpush.msra.mxu0 0.0
  %1294 = vmatpush.msra.mxu0 0.0
  %1295 = vmatpush.msra.mxu0 %v1271
  %1296 = vmatpush.msra.mxu0 %v1270
  %1297 = vmatpush.msra.mxu0 %v1269
  %1298 = vmatpush.msra.mxu0 %v1268
  %1299 = vmatmul.f32.gmra.mxu0 %v1281
  %v1300 = vpop.f32.mrf.mxu0
  %v1301 = vadd.f32 %v1278, %v1300
  %1302 = vdwg.mxu0
  %1304 = vrot.lane.b32.xlu0 %v1301, 96
  %v1305 = vpop.permute.xlu0 %1304
  %v1306 = vsel %vm439, %v1301, 0
  %v1308 = vsel %vm439, %v1305, 0
  %1310 = vmatpush.xpose.msra.mxu0 0.0
  %1311 = vmatpush.xpose.msra.mxu0 0.0
  %1312 = vmatpush.xpose.msra.mxu0 0.0
  %1313 = vmatpush.xpose.msra.mxu0 0.0
  %1314 = vmatpush.xpose.msra.mxu0 0.0
  %1315 = vmatpush.xpose.msra.mxu0 0.0
  %1316 = vmatpush.xpose.msra.mxu0 0.0
  %1317 = vmatpush.xpose.msra.mxu0 0.0
  %1318 = vmatpush.xpose.msra.mxu0 0.0
  %1319 = vmatpush.xpose.msra.mxu0 0.0
  %1320 = vmatpush.xpose.msra.mxu0 0.0
  %1321 = vmatpush.xpose.msra.mxu0 0.0
  %1322 = vmatpush.xpose.msra.mxu0 0.0
  %1323 = vmatpush.xpose.msra.mxu0 0.0
  %1324 = vmatpush.xpose.msra.mxu0 0.0
  %1325 = vmatpush.xpose.msra.mxu0 %v1308
  %1326 = vmatmul.f32.gmra.mxu0 %v1306
  %v1327 = vpop.f32.mrf.mxu0
  %v1328 = vadd.f32 0.0, %v1327
  %1329 = vdwg.mxu0
  %v1330 = vmul.f32 %v1328, 0.35355338
  %v1331 = vadd.f32 %v1330, %v67
  %v1332 = vsel %vm439, %v1331, -inf
  %1333 = vmax.xlane.f32.xlu0 %v1332
  %v1334 = vpop.xlane.xlu0 %1333
  %v1335 = vsub.f32 %v1331, %v1334
  %v1336 = vmul.f32 %v1335, 1.442695
  %v1337 = vpow.pop %v1336
  %v1338 = vsel %vm439, %v1337, 0.0
  %1339 = vadd.xlane.f32.xlu0 %v1338
  %v1340 = vpop.xlane.xlu0 %1339
  %v1341 = vrcp.pop %v1340
  %v1342 = vmul.f32 %v1340, %v1341
  %v1343 = vsub.f32 1.0, %v1342
  %v1344 = vmul.f32 %v1341, %v1343
  %v1345 = vadd.f32 %v1341, %v1344
  %vm1346 = vweird.f32 %v1340
  %vm1347 = vweird.f32 %v1341
  %vm1348 = vmor %vm1346, %vm1347
  %v1349 = vsel %vm1348, %v1341, %v1345
  %v1350 = vand.u32 2147483647, %v1340
  %vm1351 = vcmp.eq.f32.partialorder %v1350, 8.507059e+37
  %v1352 = vand.u32 %v1340, 2147483648
  %v1353 = vor.u32 1.1754944e-38, %v1352
  %v1354 = vsel %vm1351, %v1353, %v1349
  %v1355 = vmul.f32 %v1337, %v1354
  %1356 = vrot.lane.b32.xlu0 %v1301, 64
  %v1357 = vpop.permute.xlu0 %1356
  %v1360 = vsel %vm439, %v1355, 0
  %1362 = vmatpush.msra.mxu0 0.0
  %1363 = vmatpush.msra.mxu0 0.0
  %1364 = vmatpush.msra.mxu0 0.0
  %1365 = vmatpush.msra.mxu0 0.0
  %1366 = vmatpush.msra.mxu0 0.0
  %1367 = vmatpush.msra.mxu0 0.0
  %1368 = vmatpush.msra.mxu0 0.0
  %1369 = vmatpush.msra.mxu0 0.0
  %1370 = vmatpush.msra.mxu0 0.0
  %1371 = vmatpush.msra.mxu0 0.0
  %1372 = vmatpush.msra.mxu0 0.0
  %1373 = vmatpush.msra.mxu0 0.0
  %1374 = vmatpush.msra.mxu0 0.0
  %1375 = vmatpush.msra.mxu0 0.0
  %1376 = vmatpush.msra.mxu0 0.0
  %1377 = vmatpush.msra.mxu0 %v1357
  %1378 = vmatmul.f32.gmra.mxu0 %v1360
  %v1379 = vpop.f32.mrf.mxu0
  %v1380 = vadd.f32 0.0, %v1379
  %1381 = vdwg.mxu0
  %1382 = vrot.lane.b32.xlu0 %v1301, 120
  %v1383 = vpop.permute.xlu0 %1382
  %1384 = vrot.lane.b32.xlu0 %v1301, 88
  %v1385 = vpop.permute.xlu0 %1384
  %v1386 = vsel %vm439, %v1383, 0
  %v1388 = vsel %vm439, %v1385, 0
  %1390 = vmatpush.xpose.msra.mxu0 0.0
  %1391 = vmatpush.xpose.msra.mxu0 0.0
  %1392 = vmatpush.xpose.msra.mxu0 0.0
  %1393 = vmatpush.xpose.msra.mxu0 0.0
  %1394 = vmatpush.xpose.msra.mxu0 0.0
  %1395 = vmatpush.xpose.msra.mxu0 0.0
  %1396 = vmatpush.xpose.msra.mxu0 0.0
  %1397 = vmatpush.xpose.msra.mxu0 0.0
  %1398 = vmatpush.xpose.msra.mxu0 0.0
  %1399 = vmatpush.xpose.msra.mxu0 0.0
  %1400 = vmatpush.xpose.msra.mxu0 0.0
  %1401 = vmatpush.xpose.msra.mxu0 0.0
  %1402 = vmatpush.xpose.msra.mxu0 0.0
  %1403 = vmatpush.xpose.msra.mxu0 0.0
  %1404 = vmatpush.xpose.msra.mxu0 0.0
  %1405 = vmatpush.xpose.msra.mxu0 %v1388
  %1406 = vmatmul.f32.gmra.mxu0 %v1386
  %v1407 = vpop.f32.mrf.mxu0
  %v1408 = vadd.f32 0.0, %v1407
  %1409 = vdwg.mxu0
  %v1410 = vmul.f32 %v1408, 0.35355338
  %v1411 = vadd.f32 %v1410, %v67
  %v1412 = vsel %vm439, %v1411, -inf
  %1413 = vmax.xlane.f32.xlu0 %v1412
  %v1414 = vpop.xlane.xlu0 %1413
  %v1415 = vsub.f32 %v1411, %v1414
  %v1416 = vmul.f32 %v1415, 1.442695
  %v1417 = vpow.pop %v1416
  %v1418 = vsel %vm439, %v1417, 0.0
  %1419 = vadd.xlane.f32.xlu0 %v1418
  %v1420 = vpop.xlane.xlu0 %1419
  %v1421 = vrcp.pop %v1420
  %v1422 = vmul.f32 %v1420, %v1421
  %v1423 = vsub.f32 1.0, %v1422
  %v1424 = vmul.f32 %v1421, %v1423
  %v1425 = vadd.f32 %v1421, %v1424
  %vm1426 = vweird.f32 %v1420
  %vm1427 = vweird.f32 %v1421
  %vm1428 = vmor %vm1426, %vm1427
  %v1429 = vsel %vm1428, %v1421, %v1425
  %v1430 = vand.u32 2147483647, %v1420
  %vm1431 = vcmp.eq.f32.partialorder %v1430, 8.507059e+37
  %v1432 = vand.u32 %v1420, 2147483648
  %v1433 = vor.u32 1.1754944e-38, %v1432
  %v1434 = vsel %vm1431, %v1433, %v1429
  %v1435 = vmul.f32 %v1417, %v1434
  %1436 = vrot.lane.b32.xlu0 %v1301, 56
  %v1437 = vpop.permute.xlu0 %1436
  %v1440 = vsel %vm439, %v1435, 0
  %1442 = vmatpush.msra.mxu0 0.0
  %1443 = vmatpush.msra.mxu0 0.0
  %1444 = vmatpush.msra.mxu0 0.0
  %1445 = vmatpush.msra.mxu0 0.0
  %1446 = vmatpush.msra.mxu0 0.0
  %1447 = vmatpush.msra.mxu0 0.0
  %1448 = vmatpush.msra.mxu0 0.0
  %1449 = vmatpush.msra.mxu0 0.0
  %1450 = vmatpush.msra.mxu0 0.0
  %1451 = vmatpush.msra.mxu0 0.0
  %1452 = vmatpush.msra.mxu0 0.0
  %1453 = vmatpush.msra.mxu0 0.0
  %1454 = vmatpush.msra.mxu0 0.0
  %1455 = vmatpush.msra.mxu0 0.0
  %1456 = vmatpush.msra.mxu0 0.0
  %1457 = vmatpush.msra.mxu0 %v1437
  %1458 = vmatmul.f32.gmra.mxu0 %v1440
  %v1459 = vpop.f32.mrf.mxu0
  %v1460 = vadd.f32 0.0, %v1459
  %1461 = vdwg.mxu0
  %1462 = vrot.lane.b32.xlu0 %v1301, 112
  %v1463 = vpop.permute.xlu0 %1462
  %1464 = vrot.lane.b32.xlu0 %v1301, 80
  %v1465 = vpop.permute.xlu0 %1464
  %v1466 = vsel %vm439, %v1463, 0
  %v1468 = vsel %vm439, %v1465, 0
  %1470 = vmatpush.xpose.msra.mxu0 0.0
  %1471 = vmatpush.xpose.msra.mxu0 0.0
  %1472 = vmatpush.xpose.msra.mxu0 0.0
  %1473 = vmatpush.xpose.msra.mxu0 0.0
  %1474 = vmatpush.xpose.msra.mxu0 0.0
  %1475 = vmatpush.xpose.msra.mxu0 0.0
  %1476 = vmatpush.xpose.msra.mxu0 0.0
  %1477 = vmatpush.xpose.msra.mxu0 0.0
  %1478 = vmatpush.xpose.msra.mxu0 0.0
  %1479 = vmatpush.xpose.msra.mxu0 0.0
  %1480 = vmatpush.xpose.msra.mxu0 0.0
  %1481 = vmatpush.xpose.msra.mxu0 0.0
  %1482 = vmatpush.xpose.msra.mxu0 0.0
  %1483 = vmatpush.xpose.msra.mxu0 0.0
  %1484 = vmatpush.xpose.msra.mxu0 0.0
  %1485 = vmatpush.xpose.msra.mxu0 %v1468
  %1486 = vmatmul.f32.gmra.mxu0 %v1466
  %v1487 = vpop.f32.mrf.mxu0
  %v1488 = vadd.f32 0.0, %v1487
  %1489 = vdwg.mxu0
  %v1490 = vmul.f32 %v1488, 0.35355338
  %v1491 = vadd.f32 %v1490, %v67
  %v1492 = vsel %vm439, %v1491, -inf
  %1493 = vmax.xlane.f32.xlu0 %v1492
  %v1494 = vpop.xlane.xlu0 %1493
  %v1495 = vsub.f32 %v1491, %v1494
  %v1496 = vmul.f32 %v1495, 1.442695
  %v1497 = vpow.pop %v1496
  %v1498 = vsel %vm439, %v1497, 0.0
  %1499 = vadd.xlane.f32.xlu0 %v1498
  %v1500 = vpop.xlane.xlu0 %1499
  %v1501 = vrcp.pop %v1500
  %v1502 = vmul.f32 %v1500, %v1501
  %v1503 = vsub.f32 1.0, %v1502
  %v1504 = vmul.f32 %v1501, %v1503
  %v1505 = vadd.f32 %v1501, %v1504
  %vm1506 = vweird.f32 %v1500
  %vm1507 = vweird.f32 %v1501
  %vm1508 = vmor %vm1506, %vm1507
  %v1509 = vsel %vm1508, %v1501, %v1505
  %v1510 = vand.u32 2147483647, %v1500
  %vm1511 = vcmp.eq.f32.partialorder %v1510, 8.507059e+37
  %v1512 = vand.u32 %v1500, 2147483648
  %v1513 = vor.u32 1.1754944e-38, %v1512
  %v1514 = vsel %vm1511, %v1513, %v1509
  %v1515 = vmul.f32 %v1497, %v1514
  %1516 = vrot.lane.b32.xlu0 %v1301, 48
  %v1517 = vpop.permute.xlu0 %1516
  %v1520 = vsel %vm439, %v1515, 0
  %1522 = vmatpush.msra.mxu0 0.0
  %1523 = vmatpush.msra.mxu0 0.0
  %1524 = vmatpush.msra.mxu0 0.0
  %1525 = vmatpush.msra.mxu0 0.0
  %1526 = vmatpush.msra.mxu0 0.0
  %1527 = vmatpush.msra.mxu0 0.0
  %1528 = vmatpush.msra.mxu0 0.0
  %1529 = vmatpush.msra.mxu0 0.0
  %1530 = vmatpush.msra.mxu0 0.0
  %1531 = vmatpush.msra.mxu0 0.0
  %1532 = vmatpush.msra.mxu0 0.0
  %1533 = vmatpush.msra.mxu0 0.0
  %1534 = vmatpush.msra.mxu0 0.0
  %1535 = vmatpush.msra.mxu0 0.0
  %1536 = vmatpush.msra.mxu0 0.0
  %1537 = vmatpush.msra.mxu0 %v1517
  %1538 = vmatmul.f32.gmra.mxu0 %v1520
  %v1539 = vpop.f32.mrf.mxu0
  %v1540 = vadd.f32 0.0, %v1539
  %1541 = vdwg.mxu0
  %1542 = vrot.lane.b32.xlu0 %v1301, 104
  %v1543 = vpop.permute.xlu0 %1542
  %1544 = vrot.lane.b32.xlu0 %v1301, 72
  %v1545 = vpop.permute.xlu0 %1544
  %v1546 = vsel %vm439, %v1543, 0
  %v1548 = vsel %vm439, %v1545, 0
  %1550 = vmatpush.xpose.msra.mxu0 0.0
  %1551 = vmatpush.xpose.msra.mxu0 0.0
  %1552 = vmatpush.xpose.msra.mxu0 0.0
  %1553 = vmatpush.xpose.msra.mxu0 0.0
  %1554 = vmatpush.xpose.msra.mxu0 0.0
  %1555 = vmatpush.xpose.msra.mxu0 0.0
  %1556 = vmatpush.xpose.msra.mxu0 0.0
  %1557 = vmatpush.xpose.msra.mxu0 0.0
  %1558 = vmatpush.xpose.msra.mxu0 0.0
  %1559 = vmatpush.xpose.msra.mxu0 0.0
  %1560 = vmatpush.xpose.msra.mxu0 0.0
  %1561 = vmatpush.xpose.msra.mxu0 0.0
  %1562 = vmatpush.xpose.msra.mxu0 0.0
  %1563 = vmatpush.xpose.msra.mxu0 0.0
  %1564 = vmatpush.xpose.msra.mxu0 0.0
  %1565 = vmatpush.xpose.msra.mxu0 %v1548
  %1566 = vmatmul.f32.gmra.mxu0 %v1546
  %v1567 = vpop.f32.mrf.mxu0
  %v1568 = vadd.f32 0.0, %v1567
  %1569 = vdwg.mxu0
  %v1570 = vmul.f32 %v1568, 0.35355338
  %v1571 = vadd.f32 %v1570, %v67
  %v1572 = vsel %vm439, %v1571, -inf
  %1573 = vmax.xlane.f32.xlu0 %v1572
  %v1574 = vpop.xlane.xlu0 %1573
  %v1575 = vsub.f32 %v1571, %v1574
  %v1576 = vmul.f32 %v1575, 1.442695
  %v1577 = vpow.pop %v1576
  %v1578 = vsel %vm439, %v1577, 0.0
  %1579 = vadd.xlane.f32.xlu0 %v1578
  %v1580 = vpop.xlane.xlu0 %1579
  %v1581 = vrcp.pop %v1580
  %v1582 = vmul.f32 %v1580, %v1581
  %v1583 = vsub.f32 1.0, %v1582
  %v1584 = vmul.f32 %v1581, %v1583
  %v1585 = vadd.f32 %v1581, %v1584
  %vm1586 = vweird.f32 %v1580
  %vm1587 = vweird.f32 %v1581
  %vm1588 = vmor %vm1586, %vm1587
  %v1589 = vsel %vm1588, %v1581, %v1585
  %v1590 = vand.u32 2147483647, %v1580
  %vm1591 = vcmp.eq.f32.partialorder %v1590, 8.507059e+37
  %v1592 = vand.u32 %v1580, 2147483648
  %v1593 = vor.u32 1.1754944e-38, %v1592
  %v1594 = vsel %vm1591, %v1593, %v1589
  %v1595 = vmul.f32 %v1577, %v1594
  %1596 = vrot.lane.b32.xlu0 %v1301, 40
  %v1597 = vpop.permute.xlu0 %1596
  %v1600 = vsel %vm439, %v1595, 0
  %1602 = vmatpush.msra.mxu0 0.0
  %1603 = vmatpush.msra.mxu0 0.0
  %1604 = vmatpush.msra.mxu0 0.0
  %1605 = vmatpush.msra.mxu0 0.0
  %1606 = vmatpush.msra.mxu0 0.0
  %1607 = vmatpush.msra.mxu0 0.0
  %1608 = vmatpush.msra.mxu0 0.0
  %1609 = vmatpush.msra.mxu0 0.0
  %1610 = vmatpush.msra.mxu0 0.0
  %1611 = vmatpush.msra.mxu0 0.0
  %1612 = vmatpush.msra.mxu0 0.0
  %1613 = vmatpush.msra.mxu0 0.0
  %1614 = vmatpush.msra.mxu0 0.0
  %1615 = vmatpush.msra.mxu0 0.0
  %1616 = vmatpush.msra.mxu0 0.0
  %1617 = vmatpush.msra.mxu0 %v1597
  %1618 = vmatmul.f32.gmra.mxu0 %v1600
  %v1619 = vpop.f32.mrf.mxu0
  %v1620 = vadd.f32 0.0, %v1619
  %1621 = vdwg.mxu0
  %1623 = vrot.lane.b32.xlu0 %v1460, 8
  %v1624 = vpop.permute.xlu0 %1623
  %1627 = vrot.lane.b32.xlu0 %v1540, 16
  %v1628 = vpop.permute.xlu0 %1627
  %1631 = vrot.lane.b32.xlu0 %v1620, 24
  %v1632 = vpop.permute.xlu0 %1631
  %v1634 = vsel %vm439, %v1380, %v1624
  %v1635 = vsel %vm350, %v1634, %v1628
  %v1636 = vsel %vm770, %v1635, %v1632
  %v1637 = vld [vmem:[%s10 + $0x6] sm:$0x1]
  %v1639 = vperm.slane %v1637, 0
  %v1642 = vsel %vm412, %v1636, 0
  %1644 = vmatpush.msra.mxu0 0.0
  %1645 = vmatpush.msra.mxu0 0.0
  %1646 = vmatpush.msra.mxu0 0.0
  %1647 = vmatpush.msra.mxu0 0.0
  %1648 = vmatpush.msra.mxu0 0.0
  %1649 = vmatpush.msra.mxu0 0.0
  %1650 = vmatpush.msra.mxu0 0.0
  %1651 = vmatpush.msra.mxu0 0.0
  %1652 = vmatpush.msra.mxu0 0.0
  %1653 = vmatpush.msra.mxu0 0.0
  %1654 = vmatpush.msra.mxu0 0.0
  %1655 = vmatpush.msra.mxu0 0.0
  %1656 = vmatpush.msra.mxu0 %v1275
  %1657 = vmatpush.msra.mxu0 %v1274
  %1658 = vmatpush.msra.mxu0 %v1273
  %1659 = vmatpush.msra.mxu0 %v1272
  %1660 = vmatmul.f32.gmra.mxu0 %v1642
  %v1661 = vpop.f32.mrf.mxu0
  %v1662 = vadd.f32 %v1639, %v1661
  %1663 = vdwg.mxu0
  %v1664 = vadd.f32 %v1267, %v1662
  %v1665 = vsel %vm412, %v1664, 0.0
  %1666 = vadd.xlane.f32.xlu0 %v1665
  %v1667 = vpop.xlane.xlu0 %1666
  %v1668 = vmul.f32 %v1667, %v809
  %v1669 = vsub.f32 %v1664, %v1668
  %v1670 = vmul.f32 %v1669, %v1669
  %v1671 = vsel %vm412, %v1670, 0.0
  %1672 = vadd.xlane.f32.xlu0 %v1671
  %v1673 = vpop.xlane.xlu0 %1672
  %v1674 = vmul.f32 %v1673, %v809
  %v1675 = vadd.f32 %v1674, 1e-05
  %v1676 = vrsqrt.pop %v1675
  %v1677 = vmul.f32 %v1676, %v1675
  %v1678 = vmul.f32 %v1677, %v1676
  %v1679 = vmul.f32 0.5, %v1678
  %v1680 = vsub.f32 1.5, %v1679
  %v1681 = vmul.f32 %v1676, %v1680
  %vm1682 = vweird.f32 %v1675
  %vm1683 = vweird.f32 %v1676
  %vm1684 = vmor %vm1682, %vm1683
  %v1685 = vsel %vm1684, %v1676, %v1681
  %v1686 = vmul.f32 %v1669, %v1685
  %v1687 = vld [vmem:[%s10 + $0xd] sm:$0x1]
  %v1689 = vperm.slane %v1687, 0
  %v1691 = vmul.f32 %v1686, %v1689
  %v1692 = vld [vmem:[%s10 + $0xe] sm:$0x1]
  %v1694 = vperm.slane %v1692, 0
  %v1696 = vadd.f32 %v1691, %v1694
  %v1697 = vld [vmem:[%s6] sm:$0xff]
  %v1698 = vld [vmem:[%s6 + $0x8] sm:$0xff]
  %v1699 = vld [vmem:[%s6 + $0x10] sm:$0xff]
  %v1700 = vld [vmem:[%s6 + $0x18] sm:$0xff]
  %v1701 = vld [vmem:[%s6 + $0x20] sm:$0xff]
  %v1702 = vld [vmem:[%s6 + $0x28] sm:$0xff]
  %v1703 = vld [vmem:[%s6 + $0x30] sm:$0xff]
  %v1704 = vld [vmem:[%s6 + $0x38] sm:$0xff]
  %v1705 = vld [vmem:[%s6 + $0x40] sm:$0xff]
  %v1706 = vld [vmem:[%s6 + $0x48] sm:$0xff]
  %v1707 = vld [vmem:[%s6 + $0x50] sm:$0xff]
  %v1708 = vld [vmem:[%s6 + $0x58] sm:$0xff]
  %v1709 = vld [vmem:[%s6 + $0x60] sm:$0xff]
  %v1710 = vld [vmem:[%s6 + $0x68] sm:$0xff]
  %v1711 = vld [vmem:[%s6 + $0x70] sm:$0xff]
  %v1712 = vld [vmem:[%s6 + $0x78] sm:$0xff]
  %v1713 = vld [vmem:[%s6 + $0x100] sm:$0xff]
  %v1714 = vld [vmem:[%s6 + $0x108] sm:$0xff]
  %v1715 = vld [vmem:[%s6 + $0x110] sm:$0xff]
  %v1716 = vld [vmem:[%s6 + $0x118] sm:$0xff]
  %v1717 = vld [vmem:[%s6 + $0x120] sm:$0xff]
  %v1718 = vld [vmem:[%s6 + $0x128] sm:$0xff]
  %v1719 = vld [vmem:[%s6 + $0x130] sm:$0xff]
  %v1720 = vld [vmem:[%s6 + $0x138] sm:$0xff]
  %v1721 = vld [vmem:[%s6 + $0x140] sm:$0xff]
  %v1722 = vld [vmem:[%s6 + $0x148] sm:$0xff]
  %v1723 = vld [vmem:[%s6 + $0x150] sm:$0xff]
  %v1724 = vld [vmem:[%s6 + $0x158] sm:$0xff]
  %v1725 = vld [vmem:[%s6 + $0x160] sm:$0xff]
  %v1726 = vld [vmem:[%s6 + $0x168] sm:$0xff]
  %v1727 = vld [vmem:[%s6 + $0x170] sm:$0xff]
  %v1728 = vld [vmem:[%s6 + $0x178] sm:$0xff]
  %v1729 = vld [vmem:[%s6 + $0x200] sm:$0xff]
  %v1730 = vld [vmem:[%s6 + $0x208] sm:$0xff]
  %v1731 = vld [vmem:[%s6 + $0x210] sm:$0xff]
  %v1732 = vld [vmem:[%s6 + $0x218] sm:$0xff]
  %v1733 = vld [vmem:[%s6 + $0x220] sm:$0xff]
  %v1734 = vld [vmem:[%s6 + $0x228] sm:$0xff]
  %v1735 = vld [vmem:[%s6 + $0x230] sm:$0xff]
  %v1736 = vld [vmem:[%s6 + $0x238] sm:$0xff]
  %v1737 = vld [vmem:[%s6 + $0x240] sm:$0xff]
  %v1738 = vld [vmem:[%s6 + $0x248] sm:$0xff]
  %v1739 = vld [vmem:[%s6 + $0x250] sm:$0xff]
  %v1740 = vld [vmem:[%s6 + $0x258] sm:$0xff]
  %v1741 = vld [vmem:[%s6 + $0x260] sm:$0xff]
  %v1742 = vld [vmem:[%s6 + $0x268] sm:$0xff]
  %v1743 = vld [vmem:[%s6 + $0x270] sm:$0xff]
  %v1744 = vld [vmem:[%s6 + $0x278] sm:$0xff]
  %v1745 = vld [vmem:[%s6 + $0x300] sm:$0xff]
  %v1746 = vld [vmem:[%s6 + $0x308] sm:$0xff]
  %v1747 = vld [vmem:[%s6 + $0x310] sm:$0xff]
  %v1748 = vld [vmem:[%s6 + $0x318] sm:$0xff]
  %v1749 = vld [vmem:[%s6 + $0x320] sm:$0xff]
  %v1750 = vld [vmem:[%s6 + $0x328] sm:$0xff]
  %v1751 = vld [vmem:[%s6 + $0x330] sm:$0xff]
  %v1752 = vld [vmem:[%s6 + $0x338] sm:$0xff]
  %v1753 = vld [vmem:[%s6 + $0x340] sm:$0xff]
  %v1754 = vld [vmem:[%s6 + $0x348] sm:$0xff]
  %v1755 = vld [vmem:[%s6 + $0x350] sm:$0xff]
  %v1756 = vld [vmem:[%s6 + $0x358] sm:$0xff]
  %v1757 = vld [vmem:[%s6 + $0x360] sm:$0xff]
  %v1758 = vld [vmem:[%s6 + $0x368] sm:$0xff]
  %v1759 = vld [vmem:[%s6 + $0x370] sm:$0xff]
  %v1760 = vld [vmem:[%s6 + $0x378] sm:$0xff]
  %v1761 = vld [vmem:[%s10 + $0x15] sm:$0xff]
  %v1762 = vld [vmem:[%s10 + $0x1d] sm:$0xff]
  %v1765 = vperm.slane %v1761, 0
  %v1766 = vperm.slane %v1761, 1
  %v1767 = vperm.slane %v1761, 2
  %v1768 = vperm.slane %v1761, 3
  %v1769 = vperm.slane %v1761, 4
  %v1770 = vperm.slane %v1761, 5
  %v1771 = vperm.slane %v1761, 6
  %v1772 = vperm.slane %v1761, 7
  %v1773 = vperm.slane %v1762, 0
  %v1774 = vperm.slane %v1762, 1
  %v1775 = vperm.slane %v1762, 2
  %v1776 = vperm.slane %v1762, 3
  %v1777 = vperm.slane %v1762, 4
  %v1778 = vperm.slane %v1762, 5
  %v1779 = vperm.slane %v1762, 6
  %v1780 = vperm.slane %v1762, 7
  %v1798 = vsel %vm412, %v1696, 0
  %1800 = vmatpush.msra.mxu0 0.0
  %1801 = vmatpush.msra.mxu0 0.0
  %1802 = vmatpush.msra.mxu0 0.0
  %1803 = vmatpush.msra.mxu0 0.0
  %1804 = vmatpush.msra.mxu0 0.0
  %1805 = vmatpush.msra.mxu0 0.0
  %1806 = vmatpush.msra.mxu0 0.0
  %1807 = vmatpush.msra.mxu0 0.0
  %1808 = vmatpush.msra.mxu0 0.0
  %1809 = vmatpush.msra.mxu0 0.0
  %1810 = vmatpush.msra.mxu0 0.0
  %1811 = vmatpush.msra.mxu0 0.0
  %1812 = vmatpush.msra.mxu0 %v1745
  %1813 = vmatpush.msra.mxu0 %v1729
  %1814 = vmatpush.msra.mxu0 %v1713
  %1815 = vmatpush.msra.mxu0 %v1697
  %1816 = vmatmul.f32.gmra.mxu0 %v1798
  %v1817 = vpop.f32.mrf.mxu0
  %v1818 = vadd.f32 %v1765, %v1817
  %1819 = vdwg.mxu0
  %1820 = vmatpush.msra.mxu0 0.0
  %1821 = vmatpush.msra.mxu0 0.0
  %1822 = vmatpush.msra.mxu0 0.0
  %1823 = vmatpush.msra.mxu0 0.0
  %1824 = vmatpush.msra.mxu0 0.0
  %1825 = vmatpush.msra.mxu0 0.0
  %1826 = vmatpush.msra.mxu0 0.0
  %1827 = vmatpush.msra.mxu0 0.0
  %1828 = vmatpush.msra.mxu0 0.0
  %1829 = vmatpush.msra.mxu0 0.0
  %1830 = vmatpush.msra.mxu0 0.0
  %1831 = vmatpush.msra.mxu0 0.0
  %1832 = vmatpush.msra.mxu0 %v1746
  %1833 = vmatpush.msra.mxu0 %v1730
  %1834 = vmatpush.msra.mxu0 %v1714
  %1835 = vmatpush.msra.mxu0 %v1698
  %1836 = vmatmul.f32.gmra.mxu0 %v1798
  %v1837 = vpop.f32.mrf.mxu0
  %v1838 = vadd.f32 %v1766, %v1837
  %1839 = vdwg.mxu0
  %1840 = vmatpush.msra.mxu0 0.0
  %1841 = vmatpush.msra.mxu0 0.0
  %1842 = vmatpush.msra.mxu0 0.0
  %1843 = vmatpush.msra.mxu0 0.0
  %1844 = vmatpush.msra.mxu0 0.0
  %1845 = vmatpush.msra.mxu0 0.0
  %1846 = vmatpush.msra.mxu0 0.0
  %1847 = vmatpush.msra.mxu0 0.0
  %1848 = vmatpush.msra.mxu0 0.0
  %1849 = vmatpush.msra.mxu0 0.0
  %1850 = vmatpush.msra.mxu0 0.0
  %1851 = vmatpush.msra.mxu0 0.0
  %1852 = vmatpush.msra.mxu0 %v1747
  %1853 = vmatpush.msra.mxu0 %v1731
  %1854 = vmatpush.msra.mxu0 %v1715
  %1855 = vmatpush.msra.mxu0 %v1699
  %1856 = vmatmul.f32.gmra.mxu0 %v1798
  %v1857 = vpop.f32.mrf.mxu0
  %v1858 = vadd.f32 %v1767, %v1857
  %1859 = vdwg.mxu0
  %1860 = vmatpush.msra.mxu0 0.0
  %1861 = vmatpush.msra.mxu0 0.0
  %1862 = vmatpush.msra.mxu0 0.0
  %1863 = vmatpush.msra.mxu0 0.0
  %1864 = vmatpush.msra.mxu0 0.0
  %1865 = vmatpush.msra.mxu0 0.0
  %1866 = vmatpush.msra.mxu0 0.0
  %1867 = vmatpush.msra.mxu0 0.0
  %1868 = vmatpush.msra.mxu0 0.0
  %1869 = vmatpush.msra.mxu0 0.0
  %1870 = vmatpush.msra.mxu0 0.0
  %1871 = vmatpush.msra.mxu0 0.0
  %1872 = vmatpush.msra.mxu0 %v1748
  %1873 = vmatpush.msra.mxu0 %v1732
  %1874 = vmatpush.msra.mxu0 %v1716
  %1875 = vmatpush.msra.mxu0 %v1700
  %1876 = vmatmul.f32.gmra.mxu0 %v1798
  %v1877 = vpop.f32.mrf.mxu0
  %v1878 = vadd.f32 %v1768, %v1877
  %1879 = vdwg.mxu0
  %1880 = vmatpush.msra.mxu0 0.0
  %1881 = vmatpush.msra.mxu0 0.0
  %1882 = vmatpush.msra.mxu0 0.0
  %1883 = vmatpush.msra.mxu0 0.0
  %1884 = vmatpush.msra.mxu0 0.0
  %1885 = vmatpush.msra.mxu0 0.0
  %1886 = vmatpush.msra.mxu0 0.0
  %1887 = vmatpush.msra.mxu0 0.0
  %1888 = vmatpush.msra.mxu0 0.0
  %1889 = vmatpush.msra.mxu0 0.0
  %1890 = vmatpush.msra.mxu0 0.0
  %1891 = vmatpush.msra.mxu0 0.0
  %1892 = vmatpush.msra.mxu0 %v1749
  %1893 = vmatpush.msra.mxu0 %v1733
  %1894 = vmatpush.msra.mxu0 %v1717
  %1895 = vmatpush.msra.mxu0 %v1701
  %1896 = vmatmul.f32.gmra.mxu0 %v1798
  %v1897 = vpop.f32.mrf.mxu0
  %v1898 = vadd.f32 %v1769, %v1897
  %1899 = vdwg.mxu0
  %1900 = vmatpush.msra.mxu0 0.0
  %1901 = vmatpush.msra.mxu0 0.0
  %1902 = vmatpush.msra.mxu0 0.0
  %1903 = vmatpush.msra.mxu0 0.0
  %1904 = vmatpush.msra.mxu0 0.0
  %1905 = vmatpush.msra.mxu0 0.0
  %1906 = vmatpush.msra.mxu0 0.0
  %1907 = vmatpush.msra.mxu0 0.0
  %1908 = vmatpush.msra.mxu0 0.0
  %1909 = vmatpush.msra.mxu0 0.0
  %1910 = vmatpush.msra.mxu0 0.0
  %1911 = vmatpush.msra.mxu0 0.0
  %1912 = vmatpush.msra.mxu0 %v1750
  %1913 = vmatpush.msra.mxu0 %v1734
  %1914 = vmatpush.msra.mxu0 %v1718
  %1915 = vmatpush.msra.mxu0 %v1702
  %1916 = vmatmul.f32.gmra.mxu0 %v1798
  %v1917 = vpop.f32.mrf.mxu0
  %v1918 = vadd.f32 %v1770, %v1917
  %1919 = vdwg.mxu0
  %1920 = vmatpush.msra.mxu0 0.0
  %1921 = vmatpush.msra.mxu0 0.0
  %1922 = vmatpush.msra.mxu0 0.0
  %1923 = vmatpush.msra.mxu0 0.0
  %1924 = vmatpush.msra.mxu0 0.0
  %1925 = vmatpush.msra.mxu0 0.0
  %1926 = vmatpush.msra.mxu0 0.0
  %1927 = vmatpush.msra.mxu0 0.0
  %1928 = vmatpush.msra.mxu0 0.0
  %1929 = vmatpush.msra.mxu0 0.0
  %1930 = vmatpush.msra.mxu0 0.0
  %1931 = vmatpush.msra.mxu0 0.0
  %1932 = vmatpush.msra.mxu0 %v1751
  %1933 = vmatpush.msra.mxu0 %v1735
  %1934 = vmatpush.msra.mxu0 %v1719
  %1935 = vmatpush.msra.mxu0 %v1703
  %1936 = vmatmul.f32.gmra.mxu0 %v1798
  %v1937 = vpop.f32.mrf.mxu0
  %v1938 = vadd.f32 %v1771, %v1937
  %1939 = vdwg.mxu0
  %1940 = vmatpush.msra.mxu0 0.0
  %1941 = vmatpush.msra.mxu0 0.0
  %1942 = vmatpush.msra.mxu0 0.0
  %1943 = vmatpush.msra.mxu0 0.0
  %1944 = vmatpush.msra.mxu0 0.0
  %1945 = vmatpush.msra.mxu0 0.0
  %1946 = vmatpush.msra.mxu0 0.0
  %1947 = vmatpush.msra.mxu0 0.0
  %1948 = vmatpush.msra.mxu0 0.0
  %1949 = vmatpush.msra.mxu0 0.0
  %1950 = vmatpush.msra.mxu0 0.0
  %1951 = vmatpush.msra.mxu0 0.0
  %1952 = vmatpush.msra.mxu0 %v1752
  %1953 = vmatpush.msra.mxu0 %v1736
  %1954 = vmatpush.msra.mxu0 %v1720
  %1955 = vmatpush.msra.mxu0 %v1704
  %1956 = vmatmul.f32.gmra.mxu0 %v1798
  %v1957 = vpop.f32.mrf.mxu0
  %v1958 = vadd.f32 %v1772, %v1957
  %1959 = vdwg.mxu0
  %1960 = vmatpush.msra.mxu0 0.0
  %1961 = vmatpush.msra.mxu0 0.0
  %1962 = vmatpush.msra.mxu0 0.0
  %1963 = vmatpush.msra.mxu0 0.0
  %1964 = vmatpush.msra.mxu0 0.0
  %1965 = vmatpush.msra.mxu0 0.0
  %1966 = vmatpush.msra.mxu0 0.0
  %1967 = vmatpush.msra.mxu0 0.0
  %1968 = vmatpush.msra.mxu0 0.0
  %1969 = vmatpush.msra.mxu0 0.0
  %1970 = vmatpush.msra.mxu0 0.0
  %1971 = vmatpush.msra.mxu0 0.0
  %1972 = vmatpush.msra.mxu0 %v1753
  %1973 = vmatpush.msra.mxu0 %v1737
  %1974 = vmatpush.msra.mxu0 %v1721
  %1975 = vmatpush.msra.mxu0 %v1705
  %1976 = vmatmul.f32.gmra.mxu0 %v1798
  %v1977 = vpop.f32.mrf.mxu0
  %v1978 = vadd.f32 %v1773, %v1977
  %1979 = vdwg.mxu0
  %1980 = vmatpush.msra.mxu0 0.0
  %1981 = vmatpush.msra.mxu0 0.0
  %1982 = vmatpush.msra.mxu0 0.0
  %1983 = vmatpush.msra.mxu0 0.0
  %1984 = vmatpush.msra.mxu0 0.0
  %1985 = vmatpush.msra.mxu0 0.0
  %1986 = vmatpush.msra.mxu0 0.0
  %1987 = vmatpush.msra.mxu0 0.0
  %1988 = vmatpush.msra.mxu0 0.0
  %1989 = vmatpush.msra.mxu0 0.0
  %1990 = vmatpush.msra.mxu0 0.0
  %1991 = vmatpush.msra.mxu0 0.0
  %1992 = vmatpush.msra.mxu0 %v1754
  %1993 = vmatpush.msra.mxu0 %v1738
  %1994 = vmatpush.msra.mxu0 %v1722
  %1995 = vmatpush.msra.mxu0 %v1706
  %1996 = vmatmul.f32.gmra.mxu0 %v1798
  %v1997 = vpop.f32.mrf.mxu0
  %v1998 = vadd.f32 %v1774, %v1997
  %1999 = vdwg.mxu0
  %2000 = vmatpush.msra.mxu0 0.0
  %2001 = vmatpush.msra.mxu0 0.0
  %2002 = vmatpush.msra.mxu0 0.0
  %2003 = vmatpush.msra.mxu0 0.0
  %2004 = vmatpush.msra.mxu0 0.0
  %2005 = vmatpush.msra.mxu0 0.0
  %2006 = vmatpush.msra.mxu0 0.0
  %2007 = vmatpush.msra.mxu0 0.0
  %2008 = vmatpush.msra.mxu0 0.0
  %2009 = vmatpush.msra.mxu0 0.0
  %2010 = vmatpush.msra.mxu0 0.0
  %2011 = vmatpush.msra.mxu0 0.0
  %2012 = vmatpush.msra.mxu0 %v1755
  %2013 = vmatpush.msra.mxu0 %v1739
  %2014 = vmatpush.msra.mxu0 %v1723
  %2015 = vmatpush.msra.mxu0 %v1707
  %2016 = vmatmul.f32.gmra.mxu0 %v1798
  %v2017 = vpop.f32.mrf.mxu0
  %v2018 = vadd.f32 %v1775, %v2017
  %2019 = vdwg.mxu0
  %2020 = vmatpush.msra.mxu0 0.0
  %2021 = vmatpush.msra.mxu0 0.0
  %2022 = vmatpush.msra.mxu0 0.0
  %2023 = vmatpush.msra.mxu0 0.0
  %2024 = vmatpush.msra.mxu0 0.0
  %2025 = vmatpush.msra.mxu0 0.0
  %2026 = vmatpush.msra.mxu0 0.0
  %2027 = vmatpush.msra.mxu0 0.0
  %2028 = vmatpush.msra.mxu0 0.0
  %2029 = vmatpush.msra.mxu0 0.0
  %2030 = vmatpush.msra.mxu0 0.0
  %2031 = vmatpush.msra.mxu0 0.0
  %2032 = vmatpush.msra.mxu0 %v1756
  %2033 = vmatpush.msra.mxu0 %v1740
  %2034 = vmatpush.msra.mxu0 %v1724
  %2035 = vmatpush.msra.mxu0 %v1708
  %2036 = vmatmul.f32.gmra.mxu0 %v1798
  %v2037 = vpop.f32.mrf.mxu0
  %v2038 = vadd.f32 %v1776, %v2037
  %2039 = vdwg.mxu0
  %2040 = vmatpush.msra.mxu0 0.0
  %2041 = vmatpush.msra.mxu0 0.0
  %2042 = vmatpush.msra.mxu0 0.0
  %2043 = vmatpush.msra.mxu0 0.0
  %2044 = vmatpush.msra.mxu0 0.0
  %2045 = vmatpush.msra.mxu0 0.0
  %2046 = vmatpush.msra.mxu0 0.0
  %2047 = vmatpush.msra.mxu0 0.0
  %2048 = vmatpush.msra.mxu0 0.0
  %2049 = vmatpush.msra.mxu0 0.0
  %2050 = vmatpush.msra.mxu0 0.0
  %2051 = vmatpush.msra.mxu0 0.0
  %2052 = vmatpush.msra.mxu0 %v1757
  %2053 = vmatpush.msra.mxu0 %v1741
  %2054 = vmatpush.msra.mxu0 %v1725
  %2055 = vmatpush.msra.mxu0 %v1709
  %2056 = vmatmul.f32.gmra.mxu0 %v1798
  %v2057 = vpop.f32.mrf.mxu0
  %v2058 = vadd.f32 %v1777, %v2057
  %2059 = vdwg.mxu0
  %2060 = vmatpush.msra.mxu0 0.0
  %2061 = vmatpush.msra.mxu0 0.0
  %2062 = vmatpush.msra.mxu0 0.0
  %2063 = vmatpush.msra.mxu0 0.0
  %2064 = vmatpush.msra.mxu0 0.0
  %2065 = vmatpush.msra.mxu0 0.0
  %2066 = vmatpush.msra.mxu0 0.0
  %2067 = vmatpush.msra.mxu0 0.0
  %2068 = vmatpush.msra.mxu0 0.0
  %2069 = vmatpush.msra.mxu0 0.0
  %2070 = vmatpush.msra.mxu0 0.0
  %2071 = vmatpush.msra.mxu0 0.0
  %2072 = vmatpush.msra.mxu0 %v1758
  %2073 = vmatpush.msra.mxu0 %v1742
  %2074 = vmatpush.msra.mxu0 %v1726
  %2075 = vmatpush.msra.mxu0 %v1710
  %2076 = vmatmul.f32.gmra.mxu0 %v1798
  %v2077 = vpop.f32.mrf.mxu0
  %v2078 = vadd.f32 %v1778, %v2077
  %2079 = vdwg.mxu0
  %2080 = vmatpush.msra.mxu0 0.0
  %2081 = vmatpush.msra.mxu0 0.0
  %2082 = vmatpush.msra.mxu0 0.0
  %2083 = vmatpush.msra.mxu0 0.0
  %2084 = vmatpush.msra.mxu0 0.0
  %2085 = vmatpush.msra.mxu0 0.0
  %2086 = vmatpush.msra.mxu0 0.0
  %2087 = vmatpush.msra.mxu0 0.0
  %2088 = vmatpush.msra.mxu0 0.0
  %2089 = vmatpush.msra.mxu0 0.0
  %2090 = vmatpush.msra.mxu0 0.0
  %2091 = vmatpush.msra.mxu0 0.0
  %2092 = vmatpush.msra.mxu0 %v1759
  %2093 = vmatpush.msra.mxu0 %v1743
  %2094 = vmatpush.msra.mxu0 %v1727
  %2095 = vmatpush.msra.mxu0 %v1711
  %2096 = vmatmul.f32.gmra.mxu0 %v1798
  %v2097 = vpop.f32.mrf.mxu0
  %v2098 = vadd.f32 %v1779, %v2097
  %2099 = vdwg.mxu0
  %2100 = vmatpush.msra.mxu0 0.0
  %2101 = vmatpush.msra.mxu0 0.0
  %2102 = vmatpush.msra.mxu0 0.0
  %2103 = vmatpush.msra.mxu0 0.0
  %2104 = vmatpush.msra.mxu0 0.0
  %2105 = vmatpush.msra.mxu0 0.0
  %2106 = vmatpush.msra.mxu0 0.0
  %2107 = vmatpush.msra.mxu0 0.0
  %2108 = vmatpush.msra.mxu0 0.0
  %2109 = vmatpush.msra.mxu0 0.0
  %2110 = vmatpush.msra.mxu0 0.0
  %2111 = vmatpush.msra.mxu0 0.0
  %2112 = vmatpush.msra.mxu0 %v1760
  %2113 = vmatpush.msra.mxu0 %v1744
  %2114 = vmatpush.msra.mxu0 %v1728
  %2115 = vmatpush.msra.mxu0 %v1712
  %2116 = vmatmul.f32.gmra.mxu0 %v1798
  %v2117 = vpop.f32.mrf.mxu0
  %v2118 = vadd.f32 %v1780, %v2117
  %2119 = vdwg.mxu0
  %v2120 = vmax.f32 %v1818, 0.0
  %v2121 = vmax.f32 %v1838, 0.0
  %v2122 = vmax.f32 %v1858, 0.0
  %v2123 = vmax.f32 %v1878, 0.0
  %v2124 = vmax.f32 %v1898, 0.0
  %v2125 = vmax.f32 %v1918, 0.0
  %v2126 = vmax.f32 %v1938, 0.0
  %v2127 = vmax.f32 %v1958, 0.0
  %v2128 = vmax.f32 %v1978, 0.0
  %v2129 = vmax.f32 %v1998, 0.0
  %v2130 = vmax.f32 %v2018, 0.0
  %v2131 = vmax.f32 %v2038, 0.0
  %v2132 = vmax.f32 %v2058, 0.0
  %v2133 = vmax.f32 %v2078, 0.0
  %v2134 = vmax.f32 %v2098, 0.0
  %v2135 = vmax.f32 %v2118, 0.0
  %v2136 = vld [vmem:[%s7] sm:$0xff]
  %v2137 = vld [vmem:[%s7 + $0x8] sm:$0xff]
  %v2138 = vld [vmem:[%s7 + $0x10] sm:$0xff]
  %v2139 = vld [vmem:[%s7 + $0x18] sm:$0xff]
  %v2140 = vld [vmem:[%s7 + $0x20] sm:$0xff]
  %v2141 = vld [vmem:[%s7 + $0x28] sm:$0xff]
  %v2142 = vld [vmem:[%s7 + $0x30] sm:$0xff]
  %v2143 = vld [vmem:[%s7 + $0x38] sm:$0xff]
  %v2144 = vld [vmem:[%s7 + $0x40] sm:$0xff]
  %v2145 = vld [vmem:[%s7 + $0x48] sm:$0xff]
  %v2146 = vld [vmem:[%s7 + $0x50] sm:$0xff]
  %v2147 = vld [vmem:[%s7 + $0x58] sm:$0xff]
  %v2148 = vld [vmem:[%s7 + $0x60] sm:$0xff]
  %v2149 = vld [vmem:[%s7 + $0x68] sm:$0xff]
  %v2150 = vld [vmem:[%s7 + $0x70] sm:$0xff]
  %v2151 = vld [vmem:[%s7 + $0x78] sm:$0xff]
  %v2152 = vld [vmem:[%s7 + $0x80] sm:$0xff]
  %v2153 = vld [vmem:[%s7 + $0x88] sm:$0xff]
  %v2154 = vld [vmem:[%s7 + $0x90] sm:$0xff]
  %v2155 = vld [vmem:[%s7 + $0x98] sm:$0xff]
  %v2156 = vld [vmem:[%s7 + $0xa0] sm:$0xff]
  %v2157 = vld [vmem:[%s7 + $0xa8] sm:$0xff]
  %v2158 = vld [vmem:[%s7 + $0xb0] sm:$0xff]
  %v2159 = vld [vmem:[%s7 + $0xb8] sm:$0xff]
  %v2160 = vld [vmem:[%s7 + $0xc0] sm:$0xff]
  %v2161 = vld [vmem:[%s7 + $0xc8] sm:$0xff]
  %v2162 = vld [vmem:[%s7 + $0xd0] sm:$0xff]
  %v2163 = vld [vmem:[%s7 + $0xd8] sm:$0xff]
  %v2164 = vld [vmem:[%s7 + $0xe0] sm:$0xff]
  %v2165 = vld [vmem:[%s7 + $0xe8] sm:$0xff]
  %v2166 = vld [vmem:[%s7 + $0xf0] sm:$0xff]
  %v2167 = vld [vmem:[%s7 + $0xf8] sm:$0xff]
  %v2168 = vld [vmem:[%s7 + $0x100] sm:$0xff]
  %v2169 = vld [vmem:[%s7 + $0x108] sm:$0xff]
  %v2170 = vld [vmem:[%s7 + $0x110] sm:$0xff]
  %v2171 = vld [vmem:[%s7 + $0x118] sm:$0xff]
  %v2172 = vld [vmem:[%s7 + $0x120] sm:$0xff]
  %v2173 = vld [vmem:[%s7 + $0x128] sm:$0xff]
  %v2174 = vld [vmem:[%s7 + $0x130] sm:$0xff]
  %v2175 = vld [vmem:[%s7 + $0x138] sm:$0xff]
  %v2176 = vld [vmem:[%s7 + $0x140] sm:$0xff]
  %v2177 = vld [vmem:[%s7 + $0x148] sm:$0xff]
  %v2178 = vld [vmem:[%s7 + $0x150] sm:$0xff]
  %v2179 = vld [vmem:[%s7 + $0x158] sm:$0xff]
  %v2180 = vld [vmem:[%s7 + $0x160] sm:$0xff]
  %v2181 = vld [vmem:[%s7 + $0x168] sm:$0xff]
  %v2182 = vld [vmem:[%s7 + $0x170] sm:$0xff]
  %v2183 = vld [vmem:[%s7 + $0x178] sm:$0xff]
  %v2184 = vld [vmem:[%s7 + $0x180] sm:$0xff]
  %v2185 = vld [vmem:[%s7 + $0x188] sm:$0xff]
  %v2186 = vld [vmem:[%s7 + $0x190] sm:$0xff]
  %v2187 = vld [vmem:[%s7 + $0x198] sm:$0xff]
  %v2188 = vld [vmem:[%s7 + $0x1a0] sm:$0xff]
  %v2189 = vld [vmem:[%s7 + $0x1a8] sm:$0xff]
  %v2190 = vld [vmem:[%s7 + $0x1b0] sm:$0xff]
  %v2191 = vld [vmem:[%s7 + $0x1b8] sm:$0xff]
  %v2192 = vld [vmem:[%s7 + $0x1c0] sm:$0xff]
  %v2193 = vld [vmem:[%s7 + $0x1c8] sm:$0xff]
  %v2194 = vld [vmem:[%s7 + $0x1d0] sm:$0xff]
  %v2195 = vld [vmem:[%s7 + $0x1d8] sm:$0xff]
  %v2196 = vld [vmem:[%s7 + $0x1e0] sm:$0xff]
  %v2197 = vld [vmem:[%s7 + $0x1e8] sm:$0xff]
  %v2198 = vld [vmem:[%s7 + $0x1f0] sm:$0xff]
  %v2199 = vld [vmem:[%s7 + $0x1f8] sm:$0xff]
  %v2200 = vld [vmem:[%s7 + $0x200] sm:$0xff]
  %v2201 = vld [vmem:[%s7 + $0x208] sm:$0xff]
  %v2202 = vld [vmem:[%s7 + $0x210] sm:$0xff]
  %v2203 = vld [vmem:[%s7 + $0x218] sm:$0xff]
  %v2204 = vld [vmem:[%s7 + $0x220] sm:$0xff]
  %v2205 = vld [vmem:[%s7 + $0x228] sm:$0xff]
  %v2206 = vld [vmem:[%s7 + $0x230] sm:$0xff]
  %v2207 = vld [vmem:[%s7 + $0x238] sm:$0xff]
  %v2208 = vld [vmem:[%s7 + $0x240] sm:$0xff]
  %v2209 = vld [vmem:[%s7 + $0x248] sm:$0xff]
  %v2210 = vld [vmem:[%s7 + $0x250] sm:$0xff]
  %v2211 = vld [vmem:[%s7 + $0x258] sm:$0xff]
  %v2212 = vld [vmem:[%s7 + $0x260] sm:$0xff]
  %v2213 = vld [vmem:[%s7 + $0x268] sm:$0xff]
  %v2214 = vld [vmem:[%s7 + $0x270] sm:$0xff]
  %v2215 = vld [vmem:[%s7 + $0x278] sm:$0xff]
  %v2216 = vld [vmem:[%s7 + $0x280] sm:$0xff]
  %v2217 = vld [vmem:[%s7 + $0x288] sm:$0xff]
  %v2218 = vld [vmem:[%s7 + $0x290] sm:$0xff]
  %v2219 = vld [vmem:[%s7 + $0x298] sm:$0xff]
  %v2220 = vld [vmem:[%s7 + $0x2a0] sm:$0xff]
  %v2221 = vld [vmem:[%s7 + $0x2a8] sm:$0xff]
  %v2222 = vld [vmem:[%s7 + $0x2b0] sm:$0xff]
  %v2223 = vld [vmem:[%s7 + $0x2b8] sm:$0xff]
  %v2224 = vld [vmem:[%s7 + $0x2c0] sm:$0xff]
  %v2225 = vld [vmem:[%s7 + $0x2c8] sm:$0xff]
  %v2226 = vld [vmem:[%s7 + $0x2d0] sm:$0xff]
  %v2227 = vld [vmem:[%s7 + $0x2d8] sm:$0xff]
  %v2228 = vld [vmem:[%s7 + $0x2e0] sm:$0xff]
  %v2229 = vld [vmem:[%s7 + $0x2e8] sm:$0xff]
  %v2230 = vld [vmem:[%s7 + $0x2f0] sm:$0xff]
  %v2231 = vld [vmem:[%s7 + $0x2f8] sm:$0xff]
  %v2232 = vld [vmem:[%s7 + $0x300] sm:$0xff]
  %v2233 = vld [vmem:[%s7 + $0x308] sm:$0xff]
  %v2234 = vld [vmem:[%s7 + $0x310] sm:$0xff]
  %v2235 = vld [vmem:[%s7 + $0x318] sm:$0xff]
  %v2236 = vld [vmem:[%s7 + $0x320] sm:$0xff]
  %v2237 = vld [vmem:[%s7 + $0x328] sm:$0xff]
  %v2238 = vld [vmem:[%s7 + $0x330] sm:$0xff]
  %v2239 = vld [vmem:[%s7 + $0x338] sm:$0xff]
  %v2240 = vld [vmem:[%s7 + $0x340] sm:$0xff]
  %v2241 = vld [vmem:[%s7 + $0x348] sm:$0xff]
  %v2242 = vld [vmem:[%s7 + $0x350] sm:$0xff]
  %v2243 = vld [vmem:[%s7 + $0x358] sm:$0xff]
  %v2244 = vld [vmem:[%s7 + $0x360] sm:$0xff]
  %v2245 = vld [vmem:[%s7 + $0x368] sm:$0xff]
  %v2246 = vld [vmem:[%s7 + $0x370] sm:$0xff]
  %v2247 = vld [vmem:[%s7 + $0x378] sm:$0xff]
  %v2248 = vld [vmem:[%s7 + $0x380] sm:$0xff]
  %v2249 = vld [vmem:[%s7 + $0x388] sm:$0xff]
  %v2250 = vld [vmem:[%s7 + $0x390] sm:$0xff]
  %v2251 = vld [vmem:[%s7 + $0x398] sm:$0xff]
  %v2252 = vld [vmem:[%s7 + $0x3a0] sm:$0xff]
  %v2253 = vld [vmem:[%s7 + $0x3a8] sm:$0xff]
  %v2254 = vld [vmem:[%s7 + $0x3b0] sm:$0xff]
  %v2255 = vld [vmem:[%s7 + $0x3b8] sm:$0xff]
  %v2256 = vld [vmem:[%s7 + $0x3c0] sm:$0xff]
  %v2257 = vld [vmem:[%s7 + $0x3c8] sm:$0xff]
  %v2258 = vld [vmem:[%s7 + $0x3d0] sm:$0xff]
  %v2259 = vld [vmem:[%s7 + $0x3d8] sm:$0xff]
  %v2260 = vld [vmem:[%s7 + $0x3e0] sm:$0xff]
  %v2261 = vld [vmem:[%s7 + $0x3e8] sm:$0xff]
  %v2262 = vld [vmem:[%s7 + $0x3f0] sm:$0xff]
  %v2263 = vld [vmem:[%s7 + $0x3f8] sm:$0xff]
  %v2264 = vld [vmem:[%s7 + $0x400] sm:$0xff]
  %v2265 = vld [vmem:[%s7 + $0x408] sm:$0xff]
  %v2266 = vld [vmem:[%s7 + $0x410] sm:$0xff]
  %v2267 = vld [vmem:[%s7 + $0x418] sm:$0xff]
  %v2268 = vld [vmem:[%s7 + $0x420] sm:$0xff]
  %v2269 = vld [vmem:[%s7 + $0x428] sm:$0xff]
  %v2270 = vld [vmem:[%s7 + $0x430] sm:$0xff]
  %v2271 = vld [vmem:[%s7 + $0x438] sm:$0xff]
  %v2272 = vld [vmem:[%s7 + $0x440] sm:$0xff]
  %v2273 = vld [vmem:[%s7 + $0x448] sm:$0xff]
  %v2274 = vld [vmem:[%s7 + $0x450] sm:$0xff]
  %v2275 = vld [vmem:[%s7 + $0x458] sm:$0xff]
  %v2276 = vld [vmem:[%s7 + $0x460] sm:$0xff]
  %v2277 = vld [vmem:[%s7 + $0x468] sm:$0xff]
  %v2278 = vld [vmem:[%s7 + $0x470] sm:$0xff]
  %v2279 = vld [vmem:[%s7 + $0x478] sm:$0xff]
  %v2280 = vld [vmem:[%s7 + $0x480] sm:$0xff]
  %v2281 = vld [vmem:[%s7 + $0x488] sm:$0xff]
  %v2282 = vld [vmem:[%s7 + $0x490] sm:$0xff]
  %v2283 = vld [vmem:[%s7 + $0x498] sm:$0xff]
  %v2284 = vld [vmem:[%s7 + $0x4a0] sm:$0xff]
  %v2285 = vld [vmem:[%s7 + $0x4a8] sm:$0xff]
  %v2286 = vld [vmem:[%s7 + $0x4b0] sm:$0xff]
  %v2287 = vld [vmem:[%s7 + $0x4b8] sm:$0xff]
  %v2288 = vld [vmem:[%s7 + $0x4c0] sm:$0xff]
  %v2289 = vld [vmem:[%s7 + $0x4c8] sm:$0xff]
  %v2290 = vld [vmem:[%s7 + $0x4d0] sm:$0xff]
  %v2291 = vld [vmem:[%s7 + $0x4d8] sm:$0xff]
  %v2292 = vld [vmem:[%s7 + $0x4e0] sm:$0xff]
  %v2293 = vld [vmem:[%s7 + $0x4e8] sm:$0xff]
  %v2294 = vld [vmem:[%s7 + $0x4f0] sm:$0xff]
  %v2295 = vld [vmem:[%s7 + $0x4f8] sm:$0xff]
  %v2296 = vld [vmem:[%s7 + $0x500] sm:$0xff]
  %v2297 = vld [vmem:[%s7 + $0x508] sm:$0xff]
  %v2298 = vld [vmem:[%s7 + $0x510] sm:$0xff]
  %v2299 = vld [vmem:[%s7 + $0x518] sm:$0xff]
  %v2300 = vld [vmem:[%s7 + $0x520] sm:$0xff]
  %v2301 = vld [vmem:[%s7 + $0x528] sm:$0xff]
  %v2302 = vld [vmem:[%s7 + $0x530] sm:$0xff]
  %v2303 = vld [vmem:[%s7 + $0x538] sm:$0xff]
  %v2304 = vld [vmem:[%s7 + $0x540] sm:$0xff]
  %v2305 = vld [vmem:[%s7 + $0x548] sm:$0xff]
  %v2306 = vld [vmem:[%s7 + $0x550] sm:$0xff]
  %v2307 = vld [vmem:[%s7 + $0x558] sm:$0xff]
  %v2308 = vld [vmem:[%s7 + $0x560] sm:$0xff]
  %v2309 = vld [vmem:[%s7 + $0x568] sm:$0xff]
  %v2310 = vld [vmem:[%s7 + $0x570] sm:$0xff]
  %v2311 = vld [vmem:[%s7 + $0x578] sm:$0xff]
  %v2312 = vld [vmem:[%s7 + $0x580] sm:$0xff]
  %v2313 = vld [vmem:[%s7 + $0x588] sm:$0xff]
  %v2314 = vld [vmem:[%s7 + $0x590] sm:$0xff]
  %v2315 = vld [vmem:[%s7 + $0x598] sm:$0xff]
  %v2316 = vld [vmem:[%s7 + $0x5a0] sm:$0xff]
  %v2317 = vld [vmem:[%s7 + $0x5a8] sm:$0xff]
  %v2318 = vld [vmem:[%s7 + $0x5b0] sm:$0xff]
  %v2319 = vld [vmem:[%s7 + $0x5b8] sm:$0xff]
  %v2320 = vld [vmem:[%s7 + $0x5c0] sm:$0xff]
  %v2321 = vld [vmem:[%s7 + $0x5c8] sm:$0xff]
  %v2322 = vld [vmem:[%s7 + $0x5d0] sm:$0xff]
  %v2323 = vld [vmem:[%s7 + $0x5d8] sm:$0xff]
  %v2324 = vld [vmem:[%s7 + $0x5e0] sm:$0xff]
  %v2325 = vld [vmem:[%s7 + $0x5e8] sm:$0xff]
  %v2326 = vld [vmem:[%s7 + $0x5f0] sm:$0xff]
  %v2327 = vld [vmem:[%s7 + $0x5f8] sm:$0xff]
  %v2328 = vld [vmem:[%s7 + $0x600] sm:$0xff]
  %v2329 = vld [vmem:[%s7 + $0x608] sm:$0xff]
  %v2330 = vld [vmem:[%s7 + $0x610] sm:$0xff]
  %v2331 = vld [vmem:[%s7 + $0x618] sm:$0xff]
  %v2332 = vld [vmem:[%s7 + $0x620] sm:$0xff]
  %v2333 = vld [vmem:[%s7 + $0x628] sm:$0xff]
  %v2334 = vld [vmem:[%s7 + $0x630] sm:$0xff]
  %v2335 = vld [vmem:[%s7 + $0x638] sm:$0xff]
  %v2336 = vld [vmem:[%s7 + $0x640] sm:$0xff]
  %v2337 = vld [vmem:[%s7 + $0x648] sm:$0xff]
  %v2338 = vld [vmem:[%s7 + $0x650] sm:$0xff]
  %v2339 = vld [vmem:[%s7 + $0x658] sm:$0xff]
  %v2340 = vld [vmem:[%s7 + $0x660] sm:$0xff]
  %v2341 = vld [vmem:[%s7 + $0x668] sm:$0xff]
  %v2342 = vld [vmem:[%s7 + $0x670] sm:$0xff]
  %v2343 = vld [vmem:[%s7 + $0x678] sm:$0xff]
  %v2344 = vld [vmem:[%s7 + $0x680] sm:$0xff]
  %v2345 = vld [vmem:[%s7 + $0x688] sm:$0xff]
  %v2346 = vld [vmem:[%s7 + $0x690] sm:$0xff]
  %v2347 = vld [vmem:[%s7 + $0x698] sm:$0xff]
  %v2348 = vld [vmem:[%s7 + $0x6a0] sm:$0xff]
  %v2349 = vld [vmem:[%s7 + $0x6a8] sm:$0xff]
  %v2350 = vld [vmem:[%s7 + $0x6b0] sm:$0xff]
  %v2351 = vld [vmem:[%s7 + $0x6b8] sm:$0xff]
  %v2352 = vld [vmem:[%s7 + $0x6c0] sm:$0xff]
  %v2353 = vld [vmem:[%s7 + $0x6c8] sm:$0xff]
  %v2354 = vld [vmem:[%s7 + $0x6d0] sm:$0xff]
  %v2355 = vld [vmem:[%s7 + $0x6d8] sm:$0xff]
  %v2356 = vld [vmem:[%s7 + $0x6e0] sm:$0xff]
  %v2357 = vld [vmem:[%s7 + $0x6e8] sm:$0xff]
  %v2358 = vld [vmem:[%s7 + $0x6f0] sm:$0xff]
  %v2359 = vld [vmem:[%s7 + $0x6f8] sm:$0xff]
  %v2360 = vld [vmem:[%s7 + $0x700] sm:$0xff]
  %v2361 = vld [vmem:[%s7 + $0x708] sm:$0xff]
  %v2362 = vld [vmem:[%s7 + $0x710] sm:$0xff]
  %v2363 = vld [vmem:[%s7 + $0x718] sm:$0xff]
  %v2364 = vld [vmem:[%s7 + $0x720] sm:$0xff]
  %v2365 = vld [vmem:[%s7 + $0x728] sm:$0xff]
  %v2366 = vld [vmem:[%s7 + $0x730] sm:$0xff]
  %v2367 = vld [vmem:[%s7 + $0x738] sm:$0xff]
  %v2368 = vld [vmem:[%s7 + $0x740] sm:$0xff]
  %v2369 = vld [vmem:[%s7 + $0x748] sm:$0xff]
  %v2370 = vld [vmem:[%s7 + $0x750] sm:$0xff]
  %v2371 = vld [vmem:[%s7 + $0x758] sm:$0xff]
  %v2372 = vld [vmem:[%s7 + $0x760] sm:$0xff]
  %v2373 = vld [vmem:[%s7 + $0x768] sm:$0xff]
  %v2374 = vld [vmem:[%s7 + $0x770] sm:$0xff]
  %v2375 = vld [vmem:[%s7 + $0x778] sm:$0xff]
  %v2376 = vld [vmem:[%s7 + $0x780] sm:$0xff]
  %v2377 = vld [vmem:[%s7 + $0x788] sm:$0xff]
  %v2378 = vld [vmem:[%s7 + $0x790] sm:$0xff]
  %v2379 = vld [vmem:[%s7 + $0x798] sm:$0xff]
  %v2380 = vld [vmem:[%s7 + $0x7a0] sm:$0xff]
  %v2381 = vld [vmem:[%s7 + $0x7a8] sm:$0xff]
  %v2382 = vld [vmem:[%s7 + $0x7b0] sm:$0xff]
  %v2383 = vld [vmem:[%s7 + $0x7b8] sm:$0xff]
  %v2384 = vld [vmem:[%s7 + $0x7c0] sm:$0xff]
  %v2385 = vld [vmem:[%s7 + $0x7c8] sm:$0xff]
  %v2386 = vld [vmem:[%s7 + $0x7d0] sm:$0xff]
  %v2387 = vld [vmem:[%s7 + $0x7d8] sm:$0xff]
  %v2388 = vld [vmem:[%s7 + $0x7e0] sm:$0xff]
  %v2389 = vld [vmem:[%s7 + $0x7e8] sm:$0xff]
  %v2390 = vld [vmem:[%s7 + $0x7f0] sm:$0xff]
  %v2391 = vld [vmem:[%s7 + $0x7f8] sm:$0xff]
  %2392 = vmatpush.msra.mxu0 %v2151
  %2393 = vmatpush.msra.mxu0 %v2150
  %2394 = vmatpush.msra.mxu0 %v2149
  %2395 = vmatpush.msra.mxu0 %v2148
  %2396 = vmatpush.msra.mxu0 %v2147
  %2397 = vmatpush.msra.mxu0 %v2146
  %2398 = vmatpush.msra.mxu0 %v2145
  %2399 = vmatpush.msra.mxu0 %v2144
  %2400 = vmatpush.msra.mxu0 %v2143
  %2401 = vmatpush.msra.mxu0 %v2142
  %2402 = vmatpush.msra.mxu0 %v2141
  %2403 = vmatpush.msra.mxu0 %v2140
  %2404 = vmatpush.msra.mxu0 %v2139
  %2405 = vmatpush.msra.mxu0 %v2138
  %2406 = vmatpush.msra.mxu0 %v2137
  %2407 = vmatpush.msra.mxu0 %v2136
  %2408 = vmatmul.f32.gmra.mxu0 %v2120
  %v2409 = vpop.f32.mrf.mxu0
  %v2410 = vadd.f32 0.0, %v2409
  %2411 = vdwg.mxu0
  %2412 = vmatpush.msra.mxu0 %v2167
  %2413 = vmatpush.msra.mxu0 %v2166
  %2414 = vmatpush.msra.mxu0 %v2165
  %2415 = vmatpush.msra.mxu0 %v2164
  %2416 = vmatpush.msra.mxu0 %v2163
  %2417 = vmatpush.msra.mxu0 %v2162
  %2418 = vmatpush.msra.mxu0 %v2161
  %2419 = vmatpush.msra.mxu0 %v2160
  %2420 = vmatpush.msra.mxu0 %v2159
  %2421 = vmatpush.msra.mxu0 %v2158
  %2422 = vmatpush.msra.mxu0 %v2157
  %2423 = vmatpush.msra.mxu0 %v2156
  %2424 = vmatpush.msra.mxu0 %v2155
  %2425 = vmatpush.msra.mxu0 %v2154
  %2426 = vmatpush.msra.mxu0 %v2153
  %2427 = vmatpush.msra.mxu0 %v2152
  %2428 = vmatmul.f32.gmra.mxu0 %v2121
  %v2429 = vpop.f32.mrf.mxu0
  %v2430 = vadd.f32 %v2410, %v2429
  %2431 = vdwg.mxu0
  %2432 = vmatpush.msra.mxu0 %v2183
  %2433 = vmatpush.msra.mxu0 %v2182
  %2434 = vmatpush.msra.mxu0 %v2181
  %2435 = vmatpush.msra.mxu0 %v2180
  %2436 = vmatpush.msra.mxu0 %v2179
  %2437 = vmatpush.msra.mxu0 %v2178
  %2438 = vmatpush.msra.mxu0 %v2177
  %2439 = vmatpush.msra.mxu0 %v2176
  %2440 = vmatpush.msra.mxu0 %v2175
  %2441 = vmatpush.msra.mxu0 %v2174
  %2442 = vmatpush.msra.mxu0 %v2173
  %2443 = vmatpush.msra.mxu0 %v2172
  %2444 = vmatpush.msra.mxu0 %v2171
  %2445 = vmatpush.msra.mxu0 %v2170
  %2446 = vmatpush.msra.mxu0 %v2169
  %2447 = vmatpush.msra.mxu0 %v2168
  %2448 = vmatmul.f32.gmra.mxu0 %v2122
  %v2449 = vpop.f32.mrf.mxu0
  %v2450 = vadd.f32 %v2430, %v2449
  %2451 = vdwg.mxu0
  %2452 = vmatpush.msra.mxu0 %v2199
  %2453 = vmatpush.msra.mxu0 %v2198
  %2454 = vmatpush.msra.mxu0 %v2197
  %2455 = vmatpush.msra.mxu0 %v2196
  %2456 = vmatpush.msra.mxu0 %v2195
  %2457 = vmatpush.msra.mxu0 %v2194
  %2458 = vmatpush.msra.mxu0 %v2193
  %2459 = vmatpush.msra.mxu0 %v2192
  %2460 = vmatpush.msra.mxu0 %v2191
  %2461 = vmatpush.msra.mxu0 %v2190
  %2462 = vmatpush.msra.mxu0 %v2189
  %2463 = vmatpush.msra.mxu0 %v2188
  %2464 = vmatpush.msra.mxu0 %v2187
  %2465 = vmatpush.msra.mxu0 %v2186
  %2466 = vmatpush.msra.mxu0 %v2185
  %2467 = vmatpush.msra.mxu0 %v2184
  %2468 = vmatmul.f32.gmra.mxu0 %v2123
  %v2469 = vpop.f32.mrf.mxu0
  %v2470 = vadd.f32 %v2450, %v2469
  %2471 = vdwg.mxu0
  %2472 = vmatpush.msra.mxu0 %v2215
  %2473 = vmatpush.msra.mxu0 %v2214
  %2474 = vmatpush.msra.mxu0 %v2213
  %2475 = vmatpush.msra.mxu0 %v2212
  %2476 = vmatpush.msra.mxu0 %v2211
  %2477 = vmatpush.msra.mxu0 %v2210
  %2478 = vmatpush.msra.mxu0 %v2209
  %2479 = vmatpush.msra.mxu0 %v2208
  %2480 = vmatpush.msra.mxu0 %v2207
  %2481 = vmatpush.msra.mxu0 %v2206
  %2482 = vmatpush.msra.mxu0 %v2205
  %2483 = vmatpush.msra.mxu0 %v2204
  %2484 = vmatpush.msra.mxu0 %v2203
  %2485 = vmatpush.msra.mxu0 %v2202
  %2486 = vmatpush.msra.mxu0 %v2201
  %2487 = vmatpush.msra.mxu0 %v2200
  %2488 = vmatmul.f32.gmra.mxu0 %v2124
  %v2489 = vpop.f32.mrf.mxu0
  %v2490 = vadd.f32 %v2470, %v2489
  %2491 = vdwg.mxu0
  %2492 = vmatpush.msra.mxu0 %v2231
  %2493 = vmatpush.msra.mxu0 %v2230
  %2494 = vmatpush.msra.mxu0 %v2229
  %2495 = vmatpush.msra.mxu0 %v2228
  %2496 = vmatpush.msra.mxu0 %v2227
  %2497 = vmatpush.msra.mxu0 %v2226
  %2498 = vmatpush.msra.mxu0 %v2225
  %2499 = vmatpush.msra.mxu0 %v2224
  %2500 = vmatpush.msra.mxu0 %v2223
  %2501 = vmatpush.msra.mxu0 %v2222
  %2502 = vmatpush.msra.mxu0 %v2221
  %2503 = vmatpush.msra.mxu0 %v2220
  %2504 = vmatpush.msra.mxu0 %v2219
  %2505 = vmatpush.msra.mxu0 %v2218
  %2506 = vmatpush.msra.mxu0 %v2217
  %2507 = vmatpush.msra.mxu0 %v2216
  %2508 = vmatmul.f32.gmra.mxu0 %v2125
  %v2509 = vpop.f32.mrf.mxu0
  %v2510 = vadd.f32 %v2490, %v2509
  %2511 = vdwg.mxu0
  %2512 = vmatpush.msra.mxu0 %v2247
  %2513 = vmatpush.msra.mxu0 %v2246
  %2514 = vmatpush.msra.mxu0 %v2245
  %2515 = vmatpush.msra.mxu0 %v2244
  %2516 = vmatpush.msra.mxu0 %v2243
  %2517 = vmatpush.msra.mxu0 %v2242
  %2518 = vmatpush.msra.mxu0 %v2241
  %2519 = vmatpush.msra.mxu0 %v2240
  %2520 = vmatpush.msra.mxu0 %v2239
  %2521 = vmatpush.msra.mxu0 %v2238
  %2522 = vmatpush.msra.mxu0 %v2237
  %2523 = vmatpush.msra.mxu0 %v2236
  %2524 = vmatpush.msra.mxu0 %v2235
  %2525 = vmatpush.msra.mxu0 %v2234
  %2526 = vmatpush.msra.mxu0 %v2233
  %2527 = vmatpush.msra.mxu0 %v2232
  %2528 = vmatmul.f32.gmra.mxu0 %v2126
  %v2529 = vpop.f32.mrf.mxu0
  %v2530 = vadd.f32 %v2510, %v2529
  %2531 = vdwg.mxu0
  %2532 = vmatpush.msra.mxu0 %v2263
  %2533 = vmatpush.msra.mxu0 %v2262
  %2534 = vmatpush.msra.mxu0 %v2261
  %2535 = vmatpush.msra.mxu0 %v2260
  %2536 = vmatpush.msra.mxu0 %v2259
  %2537 = vmatpush.msra.mxu0 %v2258
  %2538 = vmatpush.msra.mxu0 %v2257
  %2539 = vmatpush.msra.mxu0 %v2256
  %2540 = vmatpush.msra.mxu0 %v2255
  %2541 = vmatpush.msra.mxu0 %v2254
  %2542 = vmatpush.msra.mxu0 %v2253
  %2543 = vmatpush.msra.mxu0 %v2252
  %2544 = vmatpush.msra.mxu0 %v2251
  %2545 = vmatpush.msra.mxu0 %v2250
  %2546 = vmatpush.msra.mxu0 %v2249
  %2547 = vmatpush.msra.mxu0 %v2248
  %2548 = vmatmul.f32.gmra.mxu0 %v2127
  %v2549 = vpop.f32.mrf.mxu0
  %v2550 = vadd.f32 %v2530, %v2549
  %2551 = vdwg.mxu0
  %2552 = vmatpush.msra.mxu0 %v2279
  %2553 = vmatpush.msra.mxu0 %v2278
  %2554 = vmatpush.msra.mxu0 %v2277
  %2555 = vmatpush.msra.mxu0 %v2276
  %2556 = vmatpush.msra.mxu0 %v2275
  %2557 = vmatpush.msra.mxu0 %v2274
  %2558 = vmatpush.msra.mxu0 %v2273
  %2559 = vmatpush.msra.mxu0 %v2272
  %2560 = vmatpush.msra.mxu0 %v2271
  %2561 = vmatpush.msra.mxu0 %v2270
  %2562 = vmatpush.msra.mxu0 %v2269
  %2563 = vmatpush.msra.mxu0 %v2268
  %2564 = vmatpush.msra.mxu0 %v2267
  %2565 = vmatpush.msra.mxu0 %v2266
  %2566 = vmatpush.msra.mxu0 %v2265
  %2567 = vmatpush.msra.mxu0 %v2264
  %2568 = vmatmul.f32.gmra.mxu0 %v2128
  %v2569 = vpop.f32.mrf.mxu0
  %v2570 = vadd.f32 %v2550, %v2569
  %2571 = vdwg.mxu0
  %2572 = vmatpush.msra.mxu0 %v2295
  %2573 = vmatpush.msra.mxu0 %v2294
  %2574 = vmatpush.msra.mxu0 %v2293
  %2575 = vmatpush.msra.mxu0 %v2292
  %2576 = vmatpush.msra.mxu0 %v2291
  %2577 = vmatpush.msra.mxu0 %v2290
  %2578 = vmatpush.msra.mxu0 %v2289
  %2579 = vmatpush.msra.mxu0 %v2288
  %2580 = vmatpush.msra.mxu0 %v2287
  %2581 = vmatpush.msra.mxu0 %v2286
  %2582 = vmatpush.msra.mxu0 %v2285
  %2583 = vmatpush.msra.mxu0 %v2284
  %2584 = vmatpush.msra.mxu0 %v2283
  %2585 = vmatpush.msra.mxu0 %v2282
  %2586 = vmatpush.msra.mxu0 %v2281
  %2587 = vmatpush.msra.mxu0 %v2280
  %2588 = vmatmul.f32.gmra.mxu0 %v2129
  %v2589 = vpop.f32.mrf.mxu0
  %v2590 = vadd.f32 %v2570, %v2589
  %2591 = vdwg.mxu0
  %2592 = vmatpush.msra.mxu0 %v2311
  %2593 = vmatpush.msra.mxu0 %v2310
  %2594 = vmatpush.msra.mxu0 %v2309
  %2595 = vmatpush.msra.mxu0 %v2308
  %2596 = vmatpush.msra.mxu0 %v2307
  %2597 = vmatpush.msra.mxu0 %v2306
  %2598 = vmatpush.msra.mxu0 %v2305
  %2599 = vmatpush.msra.mxu0 %v2304
  %2600 = vmatpush.msra.mxu0 %v2303
  %2601 = vmatpush.msra.mxu0 %v2302
  %2602 = vmatpush.msra.mxu0 %v2301
  %2603 = vmatpush.msra.mxu0 %v2300
  %2604 = vmatpush.msra.mxu0 %v2299
  %2605 = vmatpush.msra.mxu0 %v2298
  %2606 = vmatpush.msra.mxu0 %v2297
  %2607 = vmatpush.msra.mxu0 %v2296
  %2608 = vmatmul.f32.gmra.mxu0 %v2130
  %v2609 = vpop.f32.mrf.mxu0
  %v2610 = vadd.f32 %v2590, %v2609
  %2611 = vdwg.mxu0
  %2612 = vmatpush.msra.mxu0 %v2327
  %2613 = vmatpush.msra.mxu0 %v2326
  %2614 = vmatpush.msra.mxu0 %v2325
  %2615 = vmatpush.msra.mxu0 %v2324
  %2616 = vmatpush.msra.mxu0 %v2323
  %2617 = vmatpush.msra.mxu0 %v2322
  %2618 = vmatpush.msra.mxu0 %v2321
  %2619 = vmatpush.msra.mxu0 %v2320
  %2620 = vmatpush.msra.mxu0 %v2319
  %2621 = vmatpush.msra.mxu0 %v2318
  %2622 = vmatpush.msra.mxu0 %v2317
  %2623 = vmatpush.msra.mxu0 %v2316
  %2624 = vmatpush.msra.mxu0 %v2315
  %2625 = vmatpush.msra.mxu0 %v2314
  %2626 = vmatpush.msra.mxu0 %v2313
  %2627 = vmatpush.msra.mxu0 %v2312
  %2628 = vmatmul.f32.gmra.mxu0 %v2131
  %v2629 = vpop.f32.mrf.mxu0
  %v2630 = vadd.f32 %v2610, %v2629
  %2631 = vdwg.mxu0
  %2632 = vmatpush.msra.mxu0 %v2343
  %2633 = vmatpush.msra.mxu0 %v2342
  %2634 = vmatpush.msra.mxu0 %v2341
  %2635 = vmatpush.msra.mxu0 %v2340
  %2636 = vmatpush.msra.mxu0 %v2339
  %2637 = vmatpush.msra.mxu0 %v2338
  %2638 = vmatpush.msra.mxu0 %v2337
  %2639 = vmatpush.msra.mxu0 %v2336
  %2640 = vmatpush.msra.mxu0 %v2335
  %2641 = vmatpush.msra.mxu0 %v2334
  %2642 = vmatpush.msra.mxu0 %v2333
  %2643 = vmatpush.msra.mxu0 %v2332
  %2644 = vmatpush.msra.mxu0 %v2331
  %2645 = vmatpush.msra.mxu0 %v2330
  %2646 = vmatpush.msra.mxu0 %v2329
  %2647 = vmatpush.msra.mxu0 %v2328
  %2648 = vmatmul.f32.gmra.mxu0 %v2132
  %v2649 = vpop.f32.mrf.mxu0
  %v2650 = vadd.f32 %v2630, %v2649
  %2651 = vdwg.mxu0
  %2652 = vmatpush.msra.mxu0 %v2359
  %2653 = vmatpush.msra.mxu0 %v2358
  %2654 = vmatpush.msra.mxu0 %v2357
  %2655 = vmatpush.msra.mxu0 %v2356
  %2656 = vmatpush.msra.mxu0 %v2355
  %2657 = vmatpush.msra.mxu0 %v2354
  %2658 = vmatpush.msra.mxu0 %v2353
  %2659 = vmatpush.msra.mxu0 %v2352
  %2660 = vmatpush.msra.mxu0 %v2351
  %2661 = vmatpush.msra.mxu0 %v2350
  %2662 = vmatpush.msra.mxu0 %v2349
  %2663 = vmatpush.msra.mxu0 %v2348
  %2664 = vmatpush.msra.mxu0 %v2347
  %2665 = vmatpush.msra.mxu0 %v2346
  %2666 = vmatpush.msra.mxu0 %v2345
  %2667 = vmatpush.msra.mxu0 %v2344
  %2668 = vmatmul.f32.gmra.mxu0 %v2133
  %v2669 = vpop.f32.mrf.mxu0
  %v2670 = vadd.f32 %v2650, %v2669
  %2671 = vdwg.mxu0
  %2672 = vmatpush.msra.mxu0 %v2375
  %2673 = vmatpush.msra.mxu0 %v2374
  %2674 = vmatpush.msra.mxu0 %v2373
  %2675 = vmatpush.msra.mxu0 %v2372
  %2676 = vmatpush.msra.mxu0 %v2371
  %2677 = vmatpush.msra.mxu0 %v2370
  %2678 = vmatpush.msra.mxu0 %v2369
  %2679 = vmatpush.msra.mxu0 %v2368
  %2680 = vmatpush.msra.mxu0 %v2367
  %2681 = vmatpush.msra.mxu0 %v2366
  %2682 = vmatpush.msra.mxu0 %v2365
  %2683 = vmatpush.msra.mxu0 %v2364
  %2684 = vmatpush.msra.mxu0 %v2363
  %2685 = vmatpush.msra.mxu0 %v2362
  %2686 = vmatpush.msra.mxu0 %v2361
  %2687 = vmatpush.msra.mxu0 %v2360
  %2688 = vmatmul.f32.gmra.mxu0 %v2134
  %v2689 = vpop.f32.mrf.mxu0
  %v2690 = vadd.f32 %v2670, %v2689
  %2691 = vdwg.mxu0
  %2692 = vmatpush.msra.mxu0 %v2391
  %2693 = vmatpush.msra.mxu0 %v2390
  %2694 = vmatpush.msra.mxu0 %v2389
  %2695 = vmatpush.msra.mxu0 %v2388
  %2696 = vmatpush.msra.mxu0 %v2387
  %2697 = vmatpush.msra.mxu0 %v2386
  %2698 = vmatpush.msra.mxu0 %v2385
  %2699 = vmatpush.msra.mxu0 %v2384
  %2700 = vmatpush.msra.mxu0 %v2383
  %2701 = vmatpush.msra.mxu0 %v2382
  %2702 = vmatpush.msra.mxu0 %v2381
  %2703 = vmatpush.msra.mxu0 %v2380
  %2704 = vmatpush.msra.mxu0 %v2379
  %2705 = vmatpush.msra.mxu0 %v2378
  %2706 = vmatpush.msra.mxu0 %v2377
  %2707 = vmatpush.msra.mxu0 %v2376
  %2708 = vmatmul.f32.gmra.mxu0 %v2135
  %v2709 = vpop.f32.mrf.mxu0
  %v2710 = vadd.f32 %v2690, %v2709
  %2711 = vdwg.mxu0
  %v2712 = vld [vmem:[%s10 + $0x25] sm:$0x1]
  %v2714 = vperm.slane %v2712, 0
  %v2716 = vadd.f32 %v2710, %v2714
  %v2717 = vadd.f32 %v1696, %v2716
  %v2718 = vsel %vm412, %v2717, 0.0
  %2719 = vadd.xlane.f32.xlu0 %v2718
  %v2720 = vpop.xlane.xlu0 %2719
  %v2721 = vmul.f32 %v2720, %v809
  %v2722 = vsub.f32 %v2717, %v2721
  %v2723 = vmul.f32 %v2722, %v2722
  %v2724 = vsel %vm412, %v2723, 0.0
  %2725 = vadd.xlane.f32.xlu0 %v2724
  %v2726 = vpop.xlane.xlu0 %2725
  %v2727 = vmul.f32 %v2726, %v809
  %v2728 = vadd.f32 %v2727, 1e-05
  %v2729 = vrsqrt.pop %v2728
  %v2730 = vmul.f32 %v2729, %v2728
  %v2731 = vmul.f32 %v2730, %v2729
  %v2732 = vmul.f32 0.5, %v2731
  %v2733 = vsub.f32 1.5, %v2732
  %v2734 = vmul.f32 %v2729, %v2733
  %vm2735 = vweird.f32 %v2728
  %vm2736 = vweird.f32 %v2729
  %vm2737 = vmor %vm2735, %vm2736
  %v2738 = vsel %vm2737, %v2729, %v2734
  %v2739 = vmul.f32 %v2722, %v2738
  %v2740 = vld [vmem:[%s10 + $0xf] sm:$0x1]
  %v2742 = vperm.slane %v2740, 0
  %v2744 = vmul.f32 %v2739, %v2742
  %v2745 = vld [vmem:[%s10 + $0x10] sm:$0x1]
  %v2747 = vperm.slane %v2745, 0
  %v2749 = vadd.f32 %v2744, %v2747
  %v2750 = vld [vmem:[%s4 + $0x60] sm:$0xff]
  %v2751 = vld [vmem:[%s4 + $0x68] sm:$0xff]
  %v2752 = vld [vmem:[%s4 + $0x70] sm:$0xff]
  %v2753 = vld [vmem:[%s4 + $0x78] sm:$0xff]
  %v2754 = vld [vmem:[%s5 + $0x60] sm:$0xff]
  %v2755 = vld [vmem:[%s5 + $0x68] sm:$0xff]
  %v2756 = vld [vmem:[%s5 + $0x70] sm:$0xff]
  %v2757 = vld [vmem:[%s5 + $0x78] sm:$0xff]
  %v2758 = vld [vmem:[%s10 + $0x7] sm:$0x1]
  %v2760 = vperm.slane %v2758, 0
  %v2763 = vsel %vm412, %v2749, 0
  %2765 = vmatpush.msra.mxu0 0.0
  %2766 = vmatpush.msra.mxu0 0.0
  %2767 = vmatpush.msra.mxu0 0.0
  %2768 = vmatpush.msra.mxu0 0.0
  %2769 = vmatpush.msra.mxu0 0.0
  %2770 = vmatpush.msra.mxu0 0.0
  %2771 = vmatpush.msra.mxu0 0.0
  %2772 = vmatpush.msra.mxu0 0.0
  %2773 = vmatpush.msra.mxu0 0.0
  %2774 = vmatpush.msra.mxu0 0.0
  %2775 = vmatpush.msra.mxu0 0.0
  %2776 = vmatpush.msra.mxu0 0.0
  %2777 = vmatpush.msra.mxu0 %v2753
  %2778 = vmatpush.msra.mxu0 %v2752
  %2779 = vmatpush.msra.mxu0 %v2751
  %2780 = vmatpush.msra.mxu0 %v2750
  %2781 = vmatmul.f32.gmra.mxu0 %v2763
  %v2782 = vpop.f32.mrf.mxu0
  %v2783 = vadd.f32 %v2760, %v2782
  %2784 = vdwg.mxu0
  %2786 = vrot.lane.b32.xlu0 %v2783, 96
  %v2787 = vpop.permute.xlu0 %2786
  %v2788 = vsel %vm439, %v2783, 0
  %v2790 = vsel %vm439, %v2787, 0
  %2792 = vmatpush.xpose.msra.mxu0 0.0
  %2793 = vmatpush.xpose.msra.mxu0 0.0
  %2794 = vmatpush.xpose.msra.mxu0 0.0
  %2795 = vmatpush.xpose.msra.mxu0 0.0
  %2796 = vmatpush.xpose.msra.mxu0 0.0
  %2797 = vmatpush.xpose.msra.mxu0 0.0
  %2798 = vmatpush.xpose.msra.mxu0 0.0
  %2799 = vmatpush.xpose.msra.mxu0 0.0
  %2800 = vmatpush.xpose.msra.mxu0 0.0
  %2801 = vmatpush.xpose.msra.mxu0 0.0
  %2802 = vmatpush.xpose.msra.mxu0 0.0
  %2803 = vmatpush.xpose.msra.mxu0 0.0
  %2804 = vmatpush.xpose.msra.mxu0 0.0
  %2805 = vmatpush.xpose.msra.mxu0 0.0
  %2806 = vmatpush.xpose.msra.mxu0 0.0
  %2807 = vmatpush.xpose.msra.mxu0 %v2790
  %2808 = vmatmul.f32.gmra.mxu0 %v2788
  %v2809 = vpop.f32.mrf.mxu0
  %v2810 = vadd.f32 0.0, %v2809
  %2811 = vdwg.mxu0
  %v2812 = vmul.f32 %v2810, 0.35355338
  %v2813 = vadd.f32 %v2812, %v67
  %v2814 = vsel %vm439, %v2813, -inf
  %2815 = vmax.xlane.f32.xlu0 %v2814
  %v2816 = vpop.xlane.xlu0 %2815
  %v2817 = vsub.f32 %v2813, %v2816
  %v2818 = vmul.f32 %v2817, 1.442695
  %v2819 = vpow.pop %v2818
  %v2820 = vsel %vm439, %v2819, 0.0
  %2821 = vadd.xlane.f32.xlu0 %v2820
  %v2822 = vpop.xlane.xlu0 %2821
  %v2823 = vrcp.pop %v2822
  %v2824 = vmul.f32 %v2822, %v2823
  %v2825 = vsub.f32 1.0, %v2824
  %v2826 = vmul.f32 %v2823, %v2825
  %v2827 = vadd.f32 %v2823, %v2826
  %vm2828 = vweird.f32 %v2822
  %vm2829 = vweird.f32 %v2823
  %vm2830 = vmor %vm2828, %vm2829
  %v2831 = vsel %vm2830, %v2823, %v2827
  %v2832 = vand.u32 2147483647, %v2822
  %vm2833 = vcmp.eq.f32.partialorder %v2832, 8.507059e+37
  %v2834 = vand.u32 %v2822, 2147483648
  %v2835 = vor.u32 1.1754944e-38, %v2834
  %v2836 = vsel %vm2833, %v2835, %v2831
  %v2837 = vmul.f32 %v2819, %v2836
  %2838 = vrot.lane.b32.xlu0 %v2783, 64
  %v2839 = vpop.permute.xlu0 %2838
  %v2842 = vsel %vm439, %v2837, 0
  %2844 = vmatpush.msra.mxu0 0.0
  %2845 = vmatpush.msra.mxu0 0.0
  %2846 = vmatpush.msra.mxu0 0.0
  %2847 = vmatpush.msra.mxu0 0.0
  %2848 = vmatpush.msra.mxu0 0.0
  %2849 = vmatpush.msra.mxu0 0.0
  %2850 = vmatpush.msra.mxu0 0.0
  %2851 = vmatpush.msra.mxu0 0.0
  %2852 = vmatpush.msra.mxu0 0.0
  %2853 = vmatpush.msra.mxu0 0.0
  %2854 = vmatpush.msra.mxu0 0.0
  %2855 = vmatpush.msra.mxu0 0.0
  %2856 = vmatpush.msra.mxu0 0.0
  %2857 = vmatpush.msra.mxu0 0.0
  %2858 = vmatpush.msra.mxu0 0.0
  %2859 = vmatpush.msra.mxu0 %v2839
  %2860 = vmatmul.f32.gmra.mxu0 %v2842
  %v2861 = vpop.f32.mrf.mxu0
  %v2862 = vadd.f32 0.0, %v2861
  %2863 = vdwg.mxu0
  %2864 = vrot.lane.b32.xlu0 %v2783, 120
  %v2865 = vpop.permute.xlu0 %2864
  %2866 = vrot.lane.b32.xlu0 %v2783, 88
  %v2867 = vpop.permute.xlu0 %2866
  %v2868 = vsel %vm439, %v2865, 0
  %v2870 = vsel %vm439, %v2867, 0
  %2872 = vmatpush.xpose.msra.mxu0 0.0
  %2873 = vmatpush.xpose.msra.mxu0 0.0
  %2874 = vmatpush.xpose.msra.mxu0 0.0
  %2875 = vmatpush.xpose.msra.mxu0 0.0
  %2876 = vmatpush.xpose.msra.mxu0 0.0
  %2877 = vmatpush.xpose.msra.mxu0 0.0
  %2878 = vmatpush.xpose.msra.mxu0 0.0
  %2879 = vmatpush.xpose.msra.mxu0 0.0
  %2880 = vmatpush.xpose.msra.mxu0 0.0
  %2881 = vmatpush.xpose.msra.mxu0 0.0
  %2882 = vmatpush.xpose.msra.mxu0 0.0
  %2883 = vmatpush.xpose.msra.mxu0 0.0
  %2884 = vmatpush.xpose.msra.mxu0 0.0
  %2885 = vmatpush.xpose.msra.mxu0 0.0
  %2886 = vmatpush.xpose.msra.mxu0 0.0
  %2887 = vmatpush.xpose.msra.mxu0 %v2870
  %2888 = vmatmul.f32.gmra.mxu0 %v2868
  %v2889 = vpop.f32.mrf.mxu0
  %v2890 = vadd.f32 0.0, %v2889
  %2891 = vdwg.mxu0
  %v2892 = vmul.f32 %v2890, 0.35355338
  %v2893 = vadd.f32 %v2892, %v67
  %v2894 = vsel %vm439, %v2893, -inf
  %2895 = vmax.xlane.f32.xlu0 %v2894
  %v2896 = vpop.xlane.xlu0 %2895
  %v2897 = vsub.f32 %v2893, %v2896
  %v2898 = vmul.f32 %v2897, 1.442695
  %v2899 = vpow.pop %v2898
  %v2900 = vsel %vm439, %v2899, 0.0
  %2901 = vadd.xlane.f32.xlu0 %v2900
  %v2902 = vpop.xlane.xlu0 %2901
  %v2903 = vrcp.pop %v2902
  %v2904 = vmul.f32 %v2902, %v2903
  %v2905 = vsub.f32 1.0, %v2904
  %v2906 = vmul.f32 %v2903, %v2905
  %v2907 = vadd.f32 %v2903, %v2906
  %vm2908 = vweird.f32 %v2902
  %vm2909 = vweird.f32 %v2903
  %vm2910 = vmor %vm2908, %vm2909
  %v2911 = vsel %vm2910, %v2903, %v2907
  %v2912 = vand.u32 2147483647, %v2902
  %vm2913 = vcmp.eq.f32.partialorder %v2912, 8.507059e+37
  %v2914 = vand.u32 %v2902, 2147483648
  %v2915 = vor.u32 1.1754944e-38, %v2914
  %v2916 = vsel %vm2913, %v2915, %v2911
  %v2917 = vmul.f32 %v2899, %v2916
  %2918 = vrot.lane.b32.xlu0 %v2783, 56
  %v2919 = vpop.permute.xlu0 %2918
  %v2922 = vsel %vm439, %v2917, 0
  %2924 = vmatpush.msra.mxu0 0.0
  %2925 = vmatpush.msra.mxu0 0.0
  %2926 = vmatpush.msra.mxu0 0.0
  %2927 = vmatpush.msra.mxu0 0.0
  %2928 = vmatpush.msra.mxu0 0.0
  %2929 = vmatpush.msra.mxu0 0.0
  %2930 = vmatpush.msra.mxu0 0.0
  %2931 = vmatpush.msra.mxu0 0.0
  %2932 = vmatpush.msra.mxu0 0.0
  %2933 = vmatpush.msra.mxu0 0.0
  %2934 = vmatpush.msra.mxu0 0.0
  %2935 = vmatpush.msra.mxu0 0.0
  %2936 = vmatpush.msra.mxu0 0.0
  %2937 = vmatpush.msra.mxu0 0.0
  %2938 = vmatpush.msra.mxu0 0.0
  %2939 = vmatpush.msra.mxu0 %v2919
  %2940 = vmatmul.f32.gmra.mxu0 %v2922
  %v2941 = vpop.f32.mrf.mxu0
  %v2942 = vadd.f32 0.0, %v2941
  %2943 = vdwg.mxu0
  %2944 = vrot.lane.b32.xlu0 %v2783, 112
  %v2945 = vpop.permute.xlu0 %2944
  %2946 = vrot.lane.b32.xlu0 %v2783, 80
  %v2947 = vpop.permute.xlu0 %2946
  %v2948 = vsel %vm439, %v2945, 0
  %v2950 = vsel %vm439, %v2947, 0
  %2952 = vmatpush.xpose.msra.mxu0 0.0
  %2953 = vmatpush.xpose.msra.mxu0 0.0
  %2954 = vmatpush.xpose.msra.mxu0 0.0
  %2955 = vmatpush.xpose.msra.mxu0 0.0
  %2956 = vmatpush.xpose.msra.mxu0 0.0
  %2957 = vmatpush.xpose.msra.mxu0 0.0
  %2958 = vmatpush.xpose.msra.mxu0 0.0
  %2959 = vmatpush.xpose.msra.mxu0 0.0
  %2960 = vmatpush.xpose.msra.mxu0 0.0
  %2961 = vmatpush.xpose.msra.mxu0 0.0
  %2962 = vmatpush.xpose.msra.mxu0 0.0
  %2963 = vmatpush.xpose.msra.mxu0 0.0
  %2964 = vmatpush.xpose.msra.mxu0 0.0
  %2965 = vmatpush.xpose.msra.mxu0 0.0
  %2966 = vmatpush.xpose.msra.mxu0 0.0
  %2967 = vmatpush.xpose.msra.mxu0 %v2950
  %2968 = vmatmul.f32.gmra.mxu0 %v2948
  %v2969 = vpop.f32.mrf.mxu0
  %v2970 = vadd.f32 0.0, %v2969
  %2971 = vdwg.mxu0
  %v2972 = vmul.f32 %v2970, 0.35355338
  %v2973 = vadd.f32 %v2972, %v67
  %v2974 = vsel %vm439, %v2973, -inf
  %2975 = vmax.xlane.f32.xlu0 %v2974
  %v2976 = vpop.xlane.xlu0 %2975
  %v2977 = vsub.f32 %v2973, %v2976
  %v2978 = vmul.f32 %v2977, 1.442695
  %v2979 = vpow.pop %v2978
  %v2980 = vsel %vm439, %v2979, 0.0
  %2981 = vadd.xlane.f32.xlu0 %v2980
  %v2982 = vpop.xlane.xlu0 %2981
  %v2983 = vrcp.pop %v2982
  %v2984 = vmul.f32 %v2982, %v2983
  %v2985 = vsub.f32 1.0, %v2984
  %v2986 = vmul.f32 %v2983, %v2985
  %v2987 = vadd.f32 %v2983, %v2986
  %vm2988 = vweird.f32 %v2982
  %vm2989 = vweird.f32 %v2983
  %vm2990 = vmor %vm2988, %vm2989
  %v2991 = vsel %vm2990, %v2983, %v2987
  %v2992 = vand.u32 2147483647, %v2982
  %vm2993 = vcmp.eq.f32.partialorder %v2992, 8.507059e+37
  %v2994 = vand.u32 %v2982, 2147483648
  %v2995 = vor.u32 1.1754944e-38, %v2994
  %v2996 = vsel %vm2993, %v2995, %v2991
  %v2997 = vmul.f32 %v2979, %v2996
  %2998 = vrot.lane.b32.xlu0 %v2783, 48
  %v2999 = vpop.permute.xlu0 %2998
  %v3002 = vsel %vm439, %v2997, 0
  %3004 = vmatpush.msra.mxu0 0.0
  %3005 = vmatpush.msra.mxu0 0.0
  %3006 = vmatpush.msra.mxu0 0.0
  %3007 = vmatpush.msra.mxu0 0.0
  %3008 = vmatpush.msra.mxu0 0.0
  %3009 = vmatpush.msra.mxu0 0.0
  %3010 = vmatpush.msra.mxu0 0.0
  %3011 = vmatpush.msra.mxu0 0.0
  %3012 = vmatpush.msra.mxu0 0.0
  %3013 = vmatpush.msra.mxu0 0.0
  %3014 = vmatpush.msra.mxu0 0.0
  %3015 = vmatpush.msra.mxu0 0.0
  %3016 = vmatpush.msra.mxu0 0.0
  %3017 = vmatpush.msra.mxu0 0.0
  %3018 = vmatpush.msra.mxu0 0.0
  %3019 = vmatpush.msra.mxu0 %v2999
  %3020 = vmatmul.f32.gmra.mxu0 %v3002
  %v3021 = vpop.f32.mrf.mxu0
  %v3022 = vadd.f32 0.0, %v3021
  %3023 = vdwg.mxu0
  %3024 = vrot.lane.b32.xlu0 %v2783, 104
  %v3025 = vpop.permute.xlu0 %3024
  %3026 = vrot.lane.b32.xlu0 %v2783, 72
  %v3027 = vpop.permute.xlu0 %3026
  %v3028 = vsel %vm439, %v3025, 0
  %v3030 = vsel %vm439, %v3027, 0
  %3032 = vmatpush.xpose.msra.mxu0 0.0
  %3033 = vmatpush.xpose.msra.mxu0 0.0
  %3034 = vmatpush.xpose.msra.mxu0 0.0
  %3035 = vmatpush.xpose.msra.mxu0 0.0
  %3036 = vmatpush.xpose.msra.mxu0 0.0
  %3037 = vmatpush.xpose.msra.mxu0 0.0
  %3038 = vmatpush.xpose.msra.mxu0 0.0
  %3039 = vmatpush.xpose.msra.mxu0 0.0
  %3040 = vmatpush.xpose.msra.mxu0 0.0
  %3041 = vmatpush.xpose.msra.mxu0 0.0
  %3042 = vmatpush.xpose.msra.mxu0 0.0
  %3043 = vmatpush.xpose.msra.mxu0 0.0
  %3044 = vmatpush.xpose.msra.mxu0 0.0
  %3045 = vmatpush.xpose.msra.mxu0 0.0
  %3046 = vmatpush.xpose.msra.mxu0 0.0
  %3047 = vmatpush.xpose.msra.mxu0 %v3030
  %3048 = vmatmul.f32.gmra.mxu0 %v3028
  %v3049 = vpop.f32.mrf.mxu0
  %v3050 = vadd.f32 0.0, %v3049
  %3051 = vdwg.mxu0
  %v3052 = vmul.f32 %v3050, 0.35355338
  %v3053 = vadd.f32 %v3052, %v67
  %v3054 = vsel %vm439, %v3053, -inf
  %3055 = vmax.xlane.f32.xlu0 %v3054
  %v3056 = vpop.xlane.xlu0 %3055
  %v3057 = vsub.f32 %v3053, %v3056
  %v3058 = vmul.f32 %v3057, 1.442695
  %v3059 = vpow.pop %v3058
  %v3060 = vsel %vm439, %v3059, 0.0
  %3061 = vadd.xlane.f32.xlu0 %v3060
  %v3062 = vpop.xlane.xlu0 %3061
  %v3063 = vrcp.pop %v3062
  %v3064 = vmul.f32 %v3062, %v3063
  %v3065 = vsub.f32 1.0, %v3064
  %v3066 = vmul.f32 %v3063, %v3065
  %v3067 = vadd.f32 %v3063, %v3066
  %vm3068 = vweird.f32 %v3062
  %vm3069 = vweird.f32 %v3063
  %vm3070 = vmor %vm3068, %vm3069
  %v3071 = vsel %vm3070, %v3063, %v3067
  %v3072 = vand.u32 2147483647, %v3062
  %vm3073 = vcmp.eq.f32.partialorder %v3072, 8.507059e+37
  %v3074 = vand.u32 %v3062, 2147483648
  %v3075 = vor.u32 1.1754944e-38, %v3074
  %v3076 = vsel %vm3073, %v3075, %v3071
  %v3077 = vmul.f32 %v3059, %v3076
  %3078 = vrot.lane.b32.xlu0 %v2783, 40
  %v3079 = vpop.permute.xlu0 %3078
  %v3082 = vsel %vm439, %v3077, 0
  %3084 = vmatpush.msra.mxu0 0.0
  %3085 = vmatpush.msra.mxu0 0.0
  %3086 = vmatpush.msra.mxu0 0.0
  %3087 = vmatpush.msra.mxu0 0.0
  %3088 = vmatpush.msra.mxu0 0.0
  %3089 = vmatpush.msra.mxu0 0.0
  %3090 = vmatpush.msra.mxu0 0.0
  %3091 = vmatpush.msra.mxu0 0.0
  %3092 = vmatpush.msra.mxu0 0.0
  %3093 = vmatpush.msra.mxu0 0.0
  %3094 = vmatpush.msra.mxu0 0.0
  %3095 = vmatpush.msra.mxu0 0.0
  %3096 = vmatpush.msra.mxu0 0.0
  %3097 = vmatpush.msra.mxu0 0.0
  %3098 = vmatpush.msra.mxu0 0.0
  %3099 = vmatpush.msra.mxu0 %v3079
  %3100 = vmatmul.f32.gmra.mxu0 %v3082
  %v3101 = vpop.f32.mrf.mxu0
  %v3102 = vadd.f32 0.0, %v3101
  %3103 = vdwg.mxu0
  %3105 = vrot.lane.b32.xlu0 %v2942, 8
  %v3106 = vpop.permute.xlu0 %3105
  %3109 = vrot.lane.b32.xlu0 %v3022, 16
  %v3110 = vpop.permute.xlu0 %3109
  %3113 = vrot.lane.b32.xlu0 %v3102, 24
  %v3114 = vpop.permute.xlu0 %3113
  %v3116 = vsel %vm439, %v2862, %v3106
  %v3117 = vsel %vm350, %v3116, %v3110
  %v3118 = vsel %vm770, %v3117, %v3114
  %v3119 = vld [vmem:[%s10 + $0x8] sm:$0x1]
  %v3121 = vperm.slane %v3119, 0
  %v3124 = vsel %vm412, %v3118, 0
  %3126 = vmatpush.msra.mxu0 0.0
  %3127 = vmatpush.msra.mxu0 0.0
  %3128 = vmatpush.msra.mxu0 0.0
  %3129 = vmatpush.msra.mxu0 0.0
  %3130 = vmatpush.msra.mxu0 0.0
  %3131 = vmatpush.msra.mxu0 0.0
  %3132 = vmatpush.msra.mxu0 0.0
  %3133 = vmatpush.msra.mxu0 0.0
  %3134 = vmatpush.msra.mxu0 0.0
  %3135 = vmatpush.msra.mxu0 0.0
  %3136 = vmatpush.msra.mxu0 0.0
  %3137 = vmatpush.msra.mxu0 0.0
  %3138 = vmatpush.msra.mxu0 %v2757
  %3139 = vmatpush.msra.mxu0 %v2756
  %3140 = vmatpush.msra.mxu0 %v2755
  %3141 = vmatpush.msra.mxu0 %v2754
  %3142 = vmatmul.f32.gmra.mxu0 %v3124
  %v3143 = vpop.f32.mrf.mxu0
  %v3144 = vadd.f32 %v3121, %v3143
  %3145 = vdwg.mxu0
  %v3146 = vadd.f32 %v2749, %v3144
  %v3147 = vsel %vm412, %v3146, 0.0
  %3148 = vadd.xlane.f32.xlu0 %v3147
  %v3149 = vpop.xlane.xlu0 %3148
  %v3150 = vmul.f32 %v3149, %v809
  %v3151 = vsub.f32 %v3146, %v3150
  %v3152 = vmul.f32 %v3151, %v3151
  %v3153 = vsel %vm412, %v3152, 0.0
  %3154 = vadd.xlane.f32.xlu0 %v3153
  %v3155 = vpop.xlane.xlu0 %3154
  %v3156 = vmul.f32 %v3155, %v809
  %v3157 = vadd.f32 %v3156, 1e-05
  %v3158 = vrsqrt.pop %v3157
  %v3159 = vmul.f32 %v3158, %v3157
  %v3160 = vmul.f32 %v3159, %v3158
  %v3161 = vmul.f32 0.5, %v3160
  %v3162 = vsub.f32 1.5, %v3161
  %v3163 = vmul.f32 %v3158, %v3162
  %vm3164 = vweird.f32 %v3157
  %vm3165 = vweird.f32 %v3158
  %vm3166 = vmor %vm3164, %vm3165
  %v3167 = vsel %vm3166, %v3158, %v3163
  %v3168 = vmul.f32 %v3151, %v3167
  %v3169 = vld [vmem:[%s10 + $0x11] sm:$0x1]
  %v3171 = vperm.slane %v3169, 0
  %v3173 = vmul.f32 %v3168, %v3171
  %v3174 = vld [vmem:[%s10 + $0x12] sm:$0x1]
  %v3176 = vperm.slane %v3174, 0
  %v3178 = vadd.f32 %v3173, %v3176
  %v3179 = vld [vmem:[%s6 + $0x80] sm:$0xff]
  %v3180 = vld [vmem:[%s6 + $0x88] sm:$0xff]
  %v3181 = vld [vmem:[%s6 + $0x90] sm:$0xff]
  %v3182 = vld [vmem:[%s6 + $0x98] sm:$0xff]
  %v3183 = vld [vmem:[%s6 + $0xa0] sm:$0xff]
  %v3184 = vld [vmem:[%s6 + $0xa8] sm:$0xff]
  %v3185 = vld [vmem:[%s6 + $0xb0] sm:$0xff]
  %v3186 = vld [vmem:[%s6 + $0xb8] sm:$0xff]
  %v3187 = vld [vmem:[%s6 + $0xc0] sm:$0xff]
  %v3188 = vld [vmem:[%s6 + $0xc8] sm:$0xff]
  %v3189 = vld [vmem:[%s6 + $0xd0] sm:$0xff]
  %v3190 = vld [vmem:[%s6 + $0xd8] sm:$0xff]
  %v3191 = vld [vmem:[%s6 + $0xe0] sm:$0xff]
  %v3192 = vld [vmem:[%s6 + $0xe8] sm:$0xff]
  %v3193 = vld [vmem:[%s6 + $0xf0] sm:$0xff]
  %v3194 = vld [vmem:[%s6 + $0xf8] sm:$0xff]
  %v3195 = vld [vmem:[%s6 + $0x180] sm:$0xff]
  %v3196 = vld [vmem:[%s6 + $0x188] sm:$0xff]
  %v3197 = vld [vmem:[%s6 + $0x190] sm:$0xff]
  %v3198 = vld [vmem:[%s6 + $0x198] sm:$0xff]
  %v3199 = vld [vmem:[%s6 + $0x1a0] sm:$0xff]
  %v3200 = vld [vmem:[%s6 + $0x1a8] sm:$0xff]
  %v3201 = vld [vmem:[%s6 + $0x1b0] sm:$0xff]
  %v3202 = vld [vmem:[%s6 + $0x1b8] sm:$0xff]
  %v3203 = vld [vmem:[%s6 + $0x1c0] sm:$0xff]
  %v3204 = vld [vmem:[%s6 + $0x1c8] sm:$0xff]
  %v3205 = vld [vmem:[%s6 + $0x1d0] sm:$0xff]
  %v3206 = vld [vmem:[%s6 + $0x1d8] sm:$0xff]
  %v3207 = vld [vmem:[%s6 + $0x1e0] sm:$0xff]
  %v3208 = vld [vmem:[%s6 + $0x1e8] sm:$0xff]
  %v3209 = vld [vmem:[%s6 + $0x1f0] sm:$0xff]
  %v3210 = vld [vmem:[%s6 + $0x1f8] sm:$0xff]
  %v3211 = vld [vmem:[%s6 + $0x280] sm:$0xff]
  %v3212 = vld [vmem:[%s6 + $0x288] sm:$0xff]
  %v3213 = vld [vmem:[%s6 + $0x290] sm:$0xff]
  %v3214 = vld [vmem:[%s6 + $0x298] sm:$0xff]
  %v3215 = vld [vmem:[%s6 + $0x2a0] sm:$0xff]
  %v3216 = vld [vmem:[%s6 + $0x2a8] sm:$0xff]
  %v3217 = vld [vmem:[%s6 + $0x2b0] sm:$0xff]
  %v3218 = vld [vmem:[%s6 + $0x2b8] sm:$0xff]
  %v3219 = vld [vmem:[%s6 + $0x2c0] sm:$0xff]
  %v3220 = vld [vmem:[%s6 + $0x2c8] sm:$0xff]
  %v3221 = vld [vmem:[%s6 + $0x2d0] sm:$0xff]
  %v3222 = vld [vmem:[%s6 + $0x2d8] sm:$0xff]
  %v3223 = vld [vmem:[%s6 + $0x2e0] sm:$0xff]
  %v3224 = vld [vmem:[%s6 + $0x2e8] sm:$0xff]
  %v3225 = vld [vmem:[%s6 + $0x2f0] sm:$0xff]
  %v3226 = vld [vmem:[%s6 + $0x2f8] sm:$0xff]
  %v3227 = vld [vmem:[%s6 + $0x380] sm:$0xff]
  %v3228 = vld [vmem:[%s6 + $0x388] sm:$0xff]
  %v3229 = vld [vmem:[%s6 + $0x390] sm:$0xff]
  %v3230 = vld [vmem:[%s6 + $0x398] sm:$0xff]
  %v3231 = vld [vmem:[%s6 + $0x3a0] sm:$0xff]
  %v3232 = vld [vmem:[%s6 + $0x3a8] sm:$0xff]
  %v3233 = vld [vmem:[%s6 + $0x3b0] sm:$0xff]
  %v3234 = vld [vmem:[%s6 + $0x3b8] sm:$0xff]
  %v3235 = vld [vmem:[%s6 + $0x3c0] sm:$0xff]
  %v3236 = vld [vmem:[%s6 + $0x3c8] sm:$0xff]
  %v3237 = vld [vmem:[%s6 + $0x3d0] sm:$0xff]
  %v3238 = vld [vmem:[%s6 + $0x3d8] sm:$0xff]
  %v3239 = vld [vmem:[%s6 + $0x3e0] sm:$0xff]
  %v3240 = vld [vmem:[%s6 + $0x3e8] sm:$0xff]
  %v3241 = vld [vmem:[%s6 + $0x3f0] sm:$0xff]
  %v3242 = vld [vmem:[%s6 + $0x3f8] sm:$0xff]
  %v3243 = vld [vmem:[%s10 + $0x26] sm:$0xff]
  %v3244 = vld [vmem:[%s10 + $0x2e] sm:$0xff]
  %v3247 = vperm.slane %v3243, 0
  %v3248 = vperm.slane %v3243, 1
  %v3249 = vperm.slane %v3243, 2
  %v3250 = vperm.slane %v3243, 3
  %v3251 = vperm.slane %v3243, 4
  %v3252 = vperm.slane %v3243, 5
  %v3253 = vperm.slane %v3243, 6
  %v3254 = vperm.slane %v3243, 7
  %v3255 = vperm.slane %v3244, 0
  %v3256 = vperm.slane %v3244, 1
  %v3257 = vperm.slane %v3244, 2
  %v3258 = vperm.slane %v3244, 3
  %v3259 = vperm.slane %v3244, 4
  %v3260 = vperm.slane %v3244, 5
  %v3261 = vperm.slane %v3244, 6
  %v3262 = vperm.slane %v3244, 7
  %v3280 = vsel %vm412, %v3178, 0
  %3282 = vmatpush.msra.mxu0 0.0
  %3283 = vmatpush.msra.mxu0 0.0
  %3284 = vmatpush.msra.mxu0 0.0
  %3285 = vmatpush.msra.mxu0 0.0
  %3286 = vmatpush.msra.mxu0 0.0
  %3287 = vmatpush.msra.mxu0 0.0
  %3288 = vmatpush.msra.mxu0 0.0
  %3289 = vmatpush.msra.mxu0 0.0
  %3290 = vmatpush.msra.mxu0 0.0
  %3291 = vmatpush.msra.mxu0 0.0
  %3292 = vmatpush.msra.mxu0 0.0
  %3293 = vmatpush.msra.mxu0 0.0
  %3294 = vmatpush.msra.mxu0 %v3227
  %3295 = vmatpush.msra.mxu0 %v3211
  %3296 = vmatpush.msra.mxu0 %v3195
  %3297 = vmatpush.msra.mxu0 %v3179
  %3298 = vmatmul.f32.gmra.mxu0 %v3280
  %v3299 = vpop.f32.mrf.mxu0
  %v3300 = vadd.f32 %v3247, %v3299
  %3301 = vdwg.mxu0
  %3302 = vmatpush.msra.mxu0 0.0
  %3303 = vmatpush.msra.mxu0 0.0
  %3304 = vmatpush.msra.mxu0 0.0
  %3305 = vmatpush.msra.mxu0 0.0
  %3306 = vmatpush.msra.mxu0 0.0
  %3307 = vmatpush.msra.mxu0 0.0
  %3308 = vmatpush.msra.mxu0 0.0
  %3309 = vmatpush.msra.mxu0 0.0
  %3310 = vmatpush.msra.mxu0 0.0
  %3311 = vmatpush.msra.mxu0 0.0
  %3312 = vmatpush.msra.mxu0 0.0
  %3313 = vmatpush.msra.mxu0 0.0
  %3314 = vmatpush.msra.mxu0 %v3228
  %3315 = vmatpush.msra.mxu0 %v3212
  %3316 = vmatpush.msra.mxu0 %v3196
  %3317 = vmatpush.msra.mxu0 %v3180
  %3318 = vmatmul.f32.gmra.mxu0 %v3280
  %v3319 = vpop.f32.mrf.mxu0
  %v3320 = vadd.f32 %v3248, %v3319
  %3321 = vdwg.mxu0
  %3322 = vmatpush.msra.mxu0 0.0
  %3323 = vmatpush.msra.mxu0 0.0
  %3324 = vmatpush.msra.mxu0 0.0
  %3325 = vmatpush.msra.mxu0 0.0
  %3326 = vmatpush.msra.mxu0 0.0
  %3327 = vmatpush.msra.mxu0 0.0
  %3328 = vmatpush.msra.mxu0 0.0
  %3329 = vmatpush.msra.mxu0 0.0
  %3330 = vmatpush.msra.mxu0 0.0
  %3331 = vmatpush.msra.mxu0 0.0
  %3332 = vmatpush.msra.mxu0 0.0
  %3333 = vmatpush.msra.mxu0 0.0
  %3334 = vmatpush.msra.mxu0 %v3229
  %3335 = vmatpush.msra.mxu0 %v3213
  %3336 = vmatpush.msra.mxu0 %v3197
  %3337 = vmatpush.msra.mxu0 %v3181
  %3338 = vmatmul.f32.gmra.mxu0 %v3280
  %v3339 = vpop.f32.mrf.mxu0
  %v3340 = vadd.f32 %v3249, %v3339
  %3341 = vdwg.mxu0
  %3342 = vmatpush.msra.mxu0 0.0
  %3343 = vmatpush.msra.mxu0 0.0
  %3344 = vmatpush.msra.mxu0 0.0
  %3345 = vmatpush.msra.mxu0 0.0
  %3346 = vmatpush.msra.mxu0 0.0
  %3347 = vmatpush.msra.mxu0 0.0
  %3348 = vmatpush.msra.mxu0 0.0
  %3349 = vmatpush.msra.mxu0 0.0
  %3350 = vmatpush.msra.mxu0 0.0
  %3351 = vmatpush.msra.mxu0 0.0
  %3352 = vmatpush.msra.mxu0 0.0
  %3353 = vmatpush.msra.mxu0 0.0
  %3354 = vmatpush.msra.mxu0 %v3230
  %3355 = vmatpush.msra.mxu0 %v3214
  %3356 = vmatpush.msra.mxu0 %v3198
  %3357 = vmatpush.msra.mxu0 %v3182
  %3358 = vmatmul.f32.gmra.mxu0 %v3280
  %v3359 = vpop.f32.mrf.mxu0
  %v3360 = vadd.f32 %v3250, %v3359
  %3361 = vdwg.mxu0
  %3362 = vmatpush.msra.mxu0 0.0
  %3363 = vmatpush.msra.mxu0 0.0
  %3364 = vmatpush.msra.mxu0 0.0
  %3365 = vmatpush.msra.mxu0 0.0
  %3366 = vmatpush.msra.mxu0 0.0
  %3367 = vmatpush.msra.mxu0 0.0
  %3368 = vmatpush.msra.mxu0 0.0
  %3369 = vmatpush.msra.mxu0 0.0
  %3370 = vmatpush.msra.mxu0 0.0
  %3371 = vmatpush.msra.mxu0 0.0
  %3372 = vmatpush.msra.mxu0 0.0
  %3373 = vmatpush.msra.mxu0 0.0
  %3374 = vmatpush.msra.mxu0 %v3231
  %3375 = vmatpush.msra.mxu0 %v3215
  %3376 = vmatpush.msra.mxu0 %v3199
  %3377 = vmatpush.msra.mxu0 %v3183
  %3378 = vmatmul.f32.gmra.mxu0 %v3280
  %v3379 = vpop.f32.mrf.mxu0
  %v3380 = vadd.f32 %v3251, %v3379
  %3381 = vdwg.mxu0
  %3382 = vmatpush.msra.mxu0 0.0
  %3383 = vmatpush.msra.mxu0 0.0
  %3384 = vmatpush.msra.mxu0 0.0
  %3385 = vmatpush.msra.mxu0 0.0
  %3386 = vmatpush.msra.mxu0 0.0
  %3387 = vmatpush.msra.mxu0 0.0
  %3388 = vmatpush.msra.mxu0 0.0
  %3389 = vmatpush.msra.mxu0 0.0
  %3390 = vmatpush.msra.mxu0 0.0
  %3391 = vmatpush.msra.mxu0 0.0
  %3392 = vmatpush.msra.mxu0 0.0
  %3393 = vmatpush.msra.mxu0 0.0
  %3394 = vmatpush.msra.mxu0 %v3232
  %3395 = vmatpush.msra.mxu0 %v3216
  %3396 = vmatpush.msra.mxu0 %v3200
  %3397 = vmatpush.msra.mxu0 %v3184
  %3398 = vmatmul.f32.gmra.mxu0 %v3280
  %v3399 = vpop.f32.mrf.mxu0
  %v3400 = vadd.f32 %v3252, %v3399
  %3401 = vdwg.mxu0
  %3402 = vmatpush.msra.mxu0 0.0
  %3403 = vmatpush.msra.mxu0 0.0
  %3404 = vmatpush.msra.mxu0 0.0
  %3405 = vmatpush.msra.mxu0 0.0
  %3406 = vmatpush.msra.mxu0 0.0
  %3407 = vmatpush.msra.mxu0 0.0
  %3408 = vmatpush.msra.mxu0 0.0
  %3409 = vmatpush.msra.mxu0 0.0
  %3410 = vmatpush.msra.mxu0 0.0
  %3411 = vmatpush.msra.mxu0 0.0
  %3412 = vmatpush.msra.mxu0 0.0
  %3413 = vmatpush.msra.mxu0 0.0
  %3414 = vmatpush.msra.mxu0 %v3233
  %3415 = vmatpush.msra.mxu0 %v3217
  %3416 = vmatpush.msra.mxu0 %v3201
  %3417 = vmatpush.msra.mxu0 %v3185
  %3418 = vmatmul.f32.gmra.mxu0 %v3280
  %v3419 = vpop.f32.mrf.mxu0
  %v3420 = vadd.f32 %v3253, %v3419
  %3421 = vdwg.mxu0
  %3422 = vmatpush.msra.mxu0 0.0
  %3423 = vmatpush.msra.mxu0 0.0
  %3424 = vmatpush.msra.mxu0 0.0
  %3425 = vmatpush.msra.mxu0 0.0
  %3426 = vmatpush.msra.mxu0 0.0
  %3427 = vmatpush.msra.mxu0 0.0
  %3428 = vmatpush.msra.mxu0 0.0
  %3429 = vmatpush.msra.mxu0 0.0
  %3430 = vmatpush.msra.mxu0 0.0
  %3431 = vmatpush.msra.mxu0 0.0
  %3432 = vmatpush.msra.mxu0 0.0
  %3433 = vmatpush.msra.mxu0 0.0
  %3434 = vmatpush.msra.mxu0 %v3234
  %3435 = vmatpush.msra.mxu0 %v3218
  %3436 = vmatpush.msra.mxu0 %v3202
  %3437 = vmatpush.msra.mxu0 %v3186
  %3438 = vmatmul.f32.gmra.mxu0 %v3280
  %v3439 = vpop.f32.mrf.mxu0
  %v3440 = vadd.f32 %v3254, %v3439
  %3441 = vdwg.mxu0
  %3442 = vmatpush.msra.mxu0 0.0
  %3443 = vmatpush.msra.mxu0 0.0
  %3444 = vmatpush.msra.mxu0 0.0
  %3445 = vmatpush.msra.mxu0 0.0
  %3446 = vmatpush.msra.mxu0 0.0
  %3447 = vmatpush.msra.mxu0 0.0
  %3448 = vmatpush.msra.mxu0 0.0
  %3449 = vmatpush.msra.mxu0 0.0
  %3450 = vmatpush.msra.mxu0 0.0
  %3451 = vmatpush.msra.mxu0 0.0
  %3452 = vmatpush.msra.mxu0 0.0
  %3453 = vmatpush.msra.mxu0 0.0
  %3454 = vmatpush.msra.mxu0 %v3235
  %3455 = vmatpush.msra.mxu0 %v3219
  %3456 = vmatpush.msra.mxu0 %v3203
  %3457 = vmatpush.msra.mxu0 %v3187
  %3458 = vmatmul.f32.gmra.mxu0 %v3280
  %v3459 = vpop.f32.mrf.mxu0
  %v3460 = vadd.f32 %v3255, %v3459
  %3461 = vdwg.mxu0
  %3462 = vmatpush.msra.mxu0 0.0
  %3463 = vmatpush.msra.mxu0 0.0
  %3464 = vmatpush.msra.mxu0 0.0
  %3465 = vmatpush.msra.mxu0 0.0
  %3466 = vmatpush.msra.mxu0 0.0
  %3467 = vmatpush.msra.mxu0 0.0
  %3468 = vmatpush.msra.mxu0 0.0
  %3469 = vmatpush.msra.mxu0 0.0
  %3470 = vmatpush.msra.mxu0 0.0
  %3471 = vmatpush.msra.mxu0 0.0
  %3472 = vmatpush.msra.mxu0 0.0
  %3473 = vmatpush.msra.mxu0 0.0
  %3474 = vmatpush.msra.mxu0 %v3236
  %3475 = vmatpush.msra.mxu0 %v3220
  %3476 = vmatpush.msra.mxu0 %v3204
  %3477 = vmatpush.msra.mxu0 %v3188
  %3478 = vmatmul.f32.gmra.mxu0 %v3280
  %v3479 = vpop.f32.mrf.mxu0
  %v3480 = vadd.f32 %v3256, %v3479
  %3481 = vdwg.mxu0
  %3482 = vmatpush.msra.mxu0 0.0
  %3483 = vmatpush.msra.mxu0 0.0
  %3484 = vmatpush.msra.mxu0 0.0
  %3485 = vmatpush.msra.mxu0 0.0
  %3486 = vmatpush.msra.mxu0 0.0
  %3487 = vmatpush.msra.mxu0 0.0
  %3488 = vmatpush.msra.mxu0 0.0
  %3489 = vmatpush.msra.mxu0 0.0
  %3490 = vmatpush.msra.mxu0 0.0
  %3491 = vmatpush.msra.mxu0 0.0
  %3492 = vmatpush.msra.mxu0 0.0
  %3493 = vmatpush.msra.mxu0 0.0
  %3494 = vmatpush.msra.mxu0 %v3237
  %3495 = vmatpush.msra.mxu0 %v3221
  %3496 = vmatpush.msra.mxu0 %v3205
  %3497 = vmatpush.msra.mxu0 %v3189
  %3498 = vmatmul.f32.gmra.mxu0 %v3280
  %v3499 = vpop.f32.mrf.mxu0
  %v3500 = vadd.f32 %v3257, %v3499
  %3501 = vdwg.mxu0
  %3502 = vmatpush.msra.mxu0 0.0
  %3503 = vmatpush.msra.mxu0 0.0
  %3504 = vmatpush.msra.mxu0 0.0
  %3505 = vmatpush.msra.mxu0 0.0
  %3506 = vmatpush.msra.mxu0 0.0
  %3507 = vmatpush.msra.mxu0 0.0
  %3508 = vmatpush.msra.mxu0 0.0
  %3509 = vmatpush.msra.mxu0 0.0
  %3510 = vmatpush.msra.mxu0 0.0
  %3511 = vmatpush.msra.mxu0 0.0
  %3512 = vmatpush.msra.mxu0 0.0
  %3513 = vmatpush.msra.mxu0 0.0
  %3514 = vmatpush.msra.mxu0 %v3238
  %3515 = vmatpush.msra.mxu0 %v3222
  %3516 = vmatpush.msra.mxu0 %v3206
  %3517 = vmatpush.msra.mxu0 %v3190
  %3518 = vmatmul.f32.gmra.mxu0 %v3280
  %v3519 = vpop.f32.mrf.mxu0
  %v3520 = vadd.f32 %v3258, %v3519
  %3521 = vdwg.mxu0
  %3522 = vmatpush.msra.mxu0 0.0
  %3523 = vmatpush.msra.mxu0 0.0
  %3524 = vmatpush.msra.mxu0 0.0
  %3525 = vmatpush.msra.mxu0 0.0
  %3526 = vmatpush.msra.mxu0 0.0
  %3527 = vmatpush.msra.mxu0 0.0
  %3528 = vmatpush.msra.mxu0 0.0
  %3529 = vmatpush.msra.mxu0 0.0
  %3530 = vmatpush.msra.mxu0 0.0
  %3531 = vmatpush.msra.mxu0 0.0
  %3532 = vmatpush.msra.mxu0 0.0
  %3533 = vmatpush.msra.mxu0 0.0
  %3534 = vmatpush.msra.mxu0 %v3239
  %3535 = vmatpush.msra.mxu0 %v3223
  %3536 = vmatpush.msra.mxu0 %v3207
  %3537 = vmatpush.msra.mxu0 %v3191
  %3538 = vmatmul.f32.gmra.mxu0 %v3280
  %v3539 = vpop.f32.mrf.mxu0
  %v3540 = vadd.f32 %v3259, %v3539
  %3541 = vdwg.mxu0
  %3542 = vmatpush.msra.mxu0 0.0
  %3543 = vmatpush.msra.mxu0 0.0
  %3544 = vmatpush.msra.mxu0 0.0
  %3545 = vmatpush.msra.mxu0 0.0
  %3546 = vmatpush.msra.mxu0 0.0
  %3547 = vmatpush.msra.mxu0 0.0
  %3548 = vmatpush.msra.mxu0 0.0
  %3549 = vmatpush.msra.mxu0 0.0
  %3550 = vmatpush.msra.mxu0 0.0
  %3551 = vmatpush.msra.mxu0 0.0
  %3552 = vmatpush.msra.mxu0 0.0
  %3553 = vmatpush.msra.mxu0 0.0
  %3554 = vmatpush.msra.mxu0 %v3240
  %3555 = vmatpush.msra.mxu0 %v3224
  %3556 = vmatpush.msra.mxu0 %v3208
  %3557 = vmatpush.msra.mxu0 %v3192
  %3558 = vmatmul.f32.gmra.mxu0 %v3280
  %v3559 = vpop.f32.mrf.mxu0
  %v3560 = vadd.f32 %v3260, %v3559
  %3561 = vdwg.mxu0
  %3562 = vmatpush.msra.mxu0 0.0
  %3563 = vmatpush.msra.mxu0 0.0
  %3564 = vmatpush.msra.mxu0 0.0
  %3565 = vmatpush.msra.mxu0 0.0
  %3566 = vmatpush.msra.mxu0 0.0
  %3567 = vmatpush.msra.mxu0 0.0
  %3568 = vmatpush.msra.mxu0 0.0
  %3569 = vmatpush.msra.mxu0 0.0
  %3570 = vmatpush.msra.mxu0 0.0
  %3571 = vmatpush.msra.mxu0 0.0
  %3572 = vmatpush.msra.mxu0 0.0
  %3573 = vmatpush.msra.mxu0 0.0
  %3574 = vmatpush.msra.mxu0 %v3241
  %3575 = vmatpush.msra.mxu0 %v3225
  %3576 = vmatpush.msra.mxu0 %v3209
  %3577 = vmatpush.msra.mxu0 %v3193
  %3578 = vmatmul.f32.gmra.mxu0 %v3280
  %v3579 = vpop.f32.mrf.mxu0
  %v3580 = vadd.f32 %v3261, %v3579
  %3581 = vdwg.mxu0
  %3582 = vmatpush.msra.mxu0 0.0
  %3583 = vmatpush.msra.mxu0 0.0
  %3584 = vmatpush.msra.mxu0 0.0
  %3585 = vmatpush.msra.mxu0 0.0
  %3586 = vmatpush.msra.mxu0 0.0
  %3587 = vmatpush.msra.mxu0 0.0
  %3588 = vmatpush.msra.mxu0 0.0
  %3589 = vmatpush.msra.mxu0 0.0
  %3590 = vmatpush.msra.mxu0 0.0
  %3591 = vmatpush.msra.mxu0 0.0
  %3592 = vmatpush.msra.mxu0 0.0
  %3593 = vmatpush.msra.mxu0 0.0
  %3594 = vmatpush.msra.mxu0 %v3242
  %3595 = vmatpush.msra.mxu0 %v3226
  %3596 = vmatpush.msra.mxu0 %v3210
  %3597 = vmatpush.msra.mxu0 %v3194
  %3598 = vmatmul.f32.gmra.mxu0 %v3280
  %v3599 = vpop.f32.mrf.mxu0
  %v3600 = vadd.f32 %v3262, %v3599
  %3601 = vdwg.mxu0
  %v3602 = vmax.f32 %v3300, 0.0
  %v3603 = vmax.f32 %v3320, 0.0
  %v3604 = vmax.f32 %v3340, 0.0
  %v3605 = vmax.f32 %v3360, 0.0
  %v3606 = vmax.f32 %v3380, 0.0
  %v3607 = vmax.f32 %v3400, 0.0
  %v3608 = vmax.f32 %v3420, 0.0
  %v3609 = vmax.f32 %v3440, 0.0
  %v3610 = vmax.f32 %v3460, 0.0
  %v3611 = vmax.f32 %v3480, 0.0
  %v3612 = vmax.f32 %v3500, 0.0
  %v3613 = vmax.f32 %v3520, 0.0
  %v3614 = vmax.f32 %v3540, 0.0
  %v3615 = vmax.f32 %v3560, 0.0
  %v3616 = vmax.f32 %v3580, 0.0
  %v3617 = vmax.f32 %v3600, 0.0
  %3618 = vmatpush.msra.mxu0 %v2151
  %3619 = vmatpush.msra.mxu0 %v2150
  %3620 = vmatpush.msra.mxu0 %v2149
  %3621 = vmatpush.msra.mxu0 %v2148
  %3622 = vmatpush.msra.mxu0 %v2147
  %3623 = vmatpush.msra.mxu0 %v2146
  %3624 = vmatpush.msra.mxu0 %v2145
  %3625 = vmatpush.msra.mxu0 %v2144
  %3626 = vmatpush.msra.mxu0 %v2143
  %3627 = vmatpush.msra.mxu0 %v2142
  %3628 = vmatpush.msra.mxu0 %v2141
  %3629 = vmatpush.msra.mxu0 %v2140
  %3630 = vmatpush.msra.mxu0 %v2139
  %3631 = vmatpush.msra.mxu0 %v2138
  %3632 = vmatpush.msra.mxu0 %v2137
  %3633 = vmatpush.msra.mxu0 %v2136
  %3634 = vmatmul.f32.gmra.mxu0 %v3602
  %v3635 = vpop.f32.mrf.mxu0
  %v3636 = vadd.f32 0.0, %v3635
  %3637 = vdwg.mxu0
  %3638 = vmatpush.msra.mxu0 %v2167
  %3639 = vmatpush.msra.mxu0 %v2166
  %3640 = vmatpush.msra.mxu0 %v2165
  %3641 = vmatpush.msra.mxu0 %v2164
  %3642 = vmatpush.msra.mxu0 %v2163
  %3643 = vmatpush.msra.mxu0 %v2162
  %3644 = vmatpush.msra.mxu0 %v2161
  %3645 = vmatpush.msra.mxu0 %v2160
  %3646 = vmatpush.msra.mxu0 %v2159
  %3647 = vmatpush.msra.mxu0 %v2158
  %3648 = vmatpush.msra.mxu0 %v2157
  %3649 = vmatpush.msra.mxu0 %v2156
  %3650 = vmatpush.msra.mxu0 %v2155
  %3651 = vmatpush.msra.mxu0 %v2154
  %3652 = vmatpush.msra.mxu0 %v2153
  %3653 = vmatpush.msra.mxu0 %v2152
  %3654 = vmatmul.f32.gmra.mxu0 %v3603
  %v3655 = vpop.f32.mrf.mxu0
  %v3656 = vadd.f32 %v3636, %v3655
  %3657 = vdwg.mxu0
  %3658 = vmatpush.msra.mxu0 %v2183
  %3659 = vmatpush.msra.mxu0 %v2182
  %3660 = vmatpush.msra.mxu0 %v2181
  %3661 = vmatpush.msra.mxu0 %v2180
  %3662 = vmatpush.msra.mxu0 %v2179
  %3663 = vmatpush.msra.mxu0 %v2178
  %3664 = vmatpush.msra.mxu0 %v2177
  %3665 = vmatpush.msra.mxu0 %v2176
  %3666 = vmatpush.msra.mxu0 %v2175
  %3667 = vmatpush.msra.mxu0 %v2174
  %3668 = vmatpush.msra.mxu0 %v2173
  %3669 = vmatpush.msra.mxu0 %v2172
  %3670 = vmatpush.msra.mxu0 %v2171
  %3671 = vmatpush.msra.mxu0 %v2170
  %3672 = vmatpush.msra.mxu0 %v2169
  %3673 = vmatpush.msra.mxu0 %v2168
  %3674 = vmatmul.f32.gmra.mxu0 %v3604
  %v3675 = vpop.f32.mrf.mxu0
  %v3676 = vadd.f32 %v3656, %v3675
  %3677 = vdwg.mxu0
  %3678 = vmatpush.msra.mxu0 %v2199
  %3679 = vmatpush.msra.mxu0 %v2198
  %3680 = vmatpush.msra.mxu0 %v2197
  %3681 = vmatpush.msra.mxu0 %v2196
  %3682 = vmatpush.msra.mxu0 %v2195
  %3683 = vmatpush.msra.mxu0 %v2194
  %3684 = vmatpush.msra.mxu0 %v2193
  %3685 = vmatpush.msra.mxu0 %v2192
  %3686 = vmatpush.msra.mxu0 %v2191
  %3687 = vmatpush.msra.mxu0 %v2190
  %3688 = vmatpush.msra.mxu0 %v2189
  %3689 = vmatpush.msra.mxu0 %v2188
  %3690 = vmatpush.msra.mxu0 %v2187
  %3691 = vmatpush.msra.mxu0 %v2186
  %3692 = vmatpush.msra.mxu0 %v2185
  %3693 = vmatpush.msra.mxu0 %v2184
  %3694 = vmatmul.f32.gmra.mxu0 %v3605
  %v3695 = vpop.f32.mrf.mxu0
  %v3696 = vadd.f32 %v3676, %v3695
  %3697 = vdwg.mxu0
  %3698 = vmatpush.msra.mxu0 %v2215
  %3699 = vmatpush.msra.mxu0 %v2214
  %3700 = vmatpush.msra.mxu0 %v2213
  %3701 = vmatpush.msra.mxu0 %v2212
  %3702 = vmatpush.msra.mxu0 %v2211
  %3703 = vmatpush.msra.mxu0 %v2210
  %3704 = vmatpush.msra.mxu0 %v2209
  %3705 = vmatpush.msra.mxu0 %v2208
  %3706 = vmatpush.msra.mxu0 %v2207
  %3707 = vmatpush.msra.mxu0 %v2206
  %3708 = vmatpush.msra.mxu0 %v2205
  %3709 = vmatpush.msra.mxu0 %v2204
  %3710 = vmatpush.msra.mxu0 %v2203
  %3711 = vmatpush.msra.mxu0 %v2202
  %3712 = vmatpush.msra.mxu0 %v2201
  %3713 = vmatpush.msra.mxu0 %v2200
  %3714 = vmatmul.f32.gmra.mxu0 %v3606
  %v3715 = vpop.f32.mrf.mxu0
  %v3716 = vadd.f32 %v3696, %v3715
  %3717 = vdwg.mxu0
  %3718 = vmatpush.msra.mxu0 %v2231
  %3719 = vmatpush.msra.mxu0 %v2230
  %3720 = vmatpush.msra.mxu0 %v2229
  %3721 = vmatpush.msra.mxu0 %v2228
  %3722 = vmatpush.msra.mxu0 %v2227
  %3723 = vmatpush.msra.mxu0 %v2226
  %3724 = vmatpush.msra.mxu0 %v2225
  %3725 = vmatpush.msra.mxu0 %v2224
  %3726 = vmatpush.msra.mxu0 %v2223
  %3727 = vmatpush.msra.mxu0 %v2222
  %3728 = vmatpush.msra.mxu0 %v2221
  %3729 = vmatpush.msra.mxu0 %v2220
  %3730 = vmatpush.msra.mxu0 %v2219
  %3731 = vmatpush.msra.mxu0 %v2218
  %3732 = vmatpush.msra.mxu0 %v2217
  %3733 = vmatpush.msra.mxu0 %v2216
  %3734 = vmatmul.f32.gmra.mxu0 %v3607
  %v3735 = vpop.f32.mrf.mxu0
  %v3736 = vadd.f32 %v3716, %v3735
  %3737 = vdwg.mxu0
  %3738 = vmatpush.msra.mxu0 %v2247
  %3739 = vmatpush.msra.mxu0 %v2246
  %3740 = vmatpush.msra.mxu0 %v2245
  %3741 = vmatpush.msra.mxu0 %v2244
  %3742 = vmatpush.msra.mxu0 %v2243
  %3743 = vmatpush.msra.mxu0 %v2242
  %3744 = vmatpush.msra.mxu0 %v2241
  %3745 = vmatpush.msra.mxu0 %v2240
  %3746 = vmatpush.msra.mxu0 %v2239
  %3747 = vmatpush.msra.mxu0 %v2238
  %3748 = vmatpush.msra.mxu0 %v2237
  %3749 = vmatpush.msra.mxu0 %v2236
  %3750 = vmatpush.msra.mxu0 %v2235
  %3751 = vmatpush.msra.mxu0 %v2234
  %3752 = vmatpush.msra.mxu0 %v2233
  %3753 = vmatpush.msra.mxu0 %v2232
  %3754 = vmatmul.f32.gmra.mxu0 %v3608
  %v3755 = vpop.f32.mrf.mxu0
  %v3756 = vadd.f32 %v3736, %v3755
  %3757 = vdwg.mxu0
  %3758 = vmatpush.msra.mxu0 %v2263
  %3759 = vmatpush.msra.mxu0 %v2262
  %3760 = vmatpush.msra.mxu0 %v2261
  %3761 = vmatpush.msra.mxu0 %v2260
  %3762 = vmatpush.msra.mxu0 %v2259
  %3763 = vmatpush.msra.mxu0 %v2258
  %3764 = vmatpush.msra.mxu0 %v2257
  %3765 = vmatpush.msra.mxu0 %v2256
  %3766 = vmatpush.msra.mxu0 %v2255
  %3767 = vmatpush.msra.mxu0 %v2254
  %3768 = vmatpush.msra.mxu0 %v2253
  %3769 = vmatpush.msra.mxu0 %v2252
  %3770 = vmatpush.msra.mxu0 %v2251
  %3771 = vmatpush.msra.mxu0 %v2250
  %3772 = vmatpush.msra.mxu0 %v2249
  %3773 = vmatpush.msra.mxu0 %v2248
  %3774 = vmatmul.f32.gmra.mxu0 %v3609
  %v3775 = vpop.f32.mrf.mxu0
  %v3776 = vadd.f32 %v3756, %v3775
  %3777 = vdwg.mxu0
  %3778 = vmatpush.msra.mxu0 %v2279
  %3779 = vmatpush.msra.mxu0 %v2278
  %3780 = vmatpush.msra.mxu0 %v2277
  %3781 = vmatpush.msra.mxu0 %v2276
  %3782 = vmatpush.msra.mxu0 %v2275
  %3783 = vmatpush.msra.mxu0 %v2274
  %3784 = vmatpush.msra.mxu0 %v2273
  %3785 = vmatpush.msra.mxu0 %v2272
  %3786 = vmatpush.msra.mxu0 %v2271
  %3787 = vmatpush.msra.mxu0 %v2270
  %3788 = vmatpush.msra.mxu0 %v2269
  %3789 = vmatpush.msra.mxu0 %v2268
  %3790 = vmatpush.msra.mxu0 %v2267
  %3791 = vmatpush.msra.mxu0 %v2266
  %3792 = vmatpush.msra.mxu0 %v2265
  %3793 = vmatpush.msra.mxu0 %v2264
  %3794 = vmatmul.f32.gmra.mxu0 %v3610
  %v3795 = vpop.f32.mrf.mxu0
  %v3796 = vadd.f32 %v3776, %v3795
  %3797 = vdwg.mxu0
  %3798 = vmatpush.msra.mxu0 %v2295
  %3799 = vmatpush.msra.mxu0 %v2294
  %3800 = vmatpush.msra.mxu0 %v2293
  %3801 = vmatpush.msra.mxu0 %v2292
  %3802 = vmatpush.msra.mxu0 %v2291
  %3803 = vmatpush.msra.mxu0 %v2290
  %3804 = vmatpush.msra.mxu0 %v2289
  %3805 = vmatpush.msra.mxu0 %v2288
  %3806 = vmatpush.msra.mxu0 %v2287
  %3807 = vmatpush.msra.mxu0 %v2286
  %3808 = vmatpush.msra.mxu0 %v2285
  %3809 = vmatpush.msra.mxu0 %v2284
  %3810 = vmatpush.msra.mxu0 %v2283
  %3811 = vmatpush.msra.mxu0 %v2282
  %3812 = vmatpush.msra.mxu0 %v2281
  %3813 = vmatpush.msra.mxu0 %v2280
  %3814 = vmatmul.f32.gmra.mxu0 %v3611
  %v3815 = vpop.f32.mrf.mxu0
  %v3816 = vadd.f32 %v3796, %v3815
  %3817 = vdwg.mxu0
  %3818 = vmatpush.msra.mxu0 %v2311
  %3819 = vmatpush.msra.mxu0 %v2310
  %3820 = vmatpush.msra.mxu0 %v2309
  %3821 = vmatpush.msra.mxu0 %v2308
  %3822 = vmatpush.msra.mxu0 %v2307
  %3823 = vmatpush.msra.mxu0 %v2306
  %3824 = vmatpush.msra.mxu0 %v2305
  %3825 = vmatpush.msra.mxu0 %v2304
  %3826 = vmatpush.msra.mxu0 %v2303
  %3827 = vmatpush.msra.mxu0 %v2302
  %3828 = vmatpush.msra.mxu0 %v2301
  %3829 = vmatpush.msra.mxu0 %v2300
  %3830 = vmatpush.msra.mxu0 %v2299
  %3831 = vmatpush.msra.mxu0 %v2298
  %3832 = vmatpush.msra.mxu0 %v2297
  %3833 = vmatpush.msra.mxu0 %v2296
  %3834 = vmatmul.f32.gmra.mxu0 %v3612
  %v3835 = vpop.f32.mrf.mxu0
  %v3836 = vadd.f32 %v3816, %v3835
  %3837 = vdwg.mxu0
  %3838 = vmatpush.msra.mxu0 %v2327
  %3839 = vmatpush.msra.mxu0 %v2326
  %3840 = vmatpush.msra.mxu0 %v2325
  %3841 = vmatpush.msra.mxu0 %v2324
  %3842 = vmatpush.msra.mxu0 %v2323
  %3843 = vmatpush.msra.mxu0 %v2322
  %3844 = vmatpush.msra.mxu0 %v2321
  %3845 = vmatpush.msra.mxu0 %v2320
  %3846 = vmatpush.msra.mxu0 %v2319
  %3847 = vmatpush.msra.mxu0 %v2318
  %3848 = vmatpush.msra.mxu0 %v2317
  %3849 = vmatpush.msra.mxu0 %v2316
  %3850 = vmatpush.msra.mxu0 %v2315
  %3851 = vmatpush.msra.mxu0 %v2314
  %3852 = vmatpush.msra.mxu0 %v2313
  %3853 = vmatpush.msra.mxu0 %v2312
  %3854 = vmatmul.f32.gmra.mxu0 %v3613
  %v3855 = vpop.f32.mrf.mxu0
  %v3856 = vadd.f32 %v3836, %v3855
  %3857 = vdwg.mxu0
  %3858 = vmatpush.msra.mxu0 %v2343
  %3859 = vmatpush.msra.mxu0 %v2342
  %3860 = vmatpush.msra.mxu0 %v2341
  %3861 = vmatpush.msra.mxu0 %v2340
  %3862 = vmatpush.msra.mxu0 %v2339
  %3863 = vmatpush.msra.mxu0 %v2338
  %3864 = vmatpush.msra.mxu0 %v2337
  %3865 = vmatpush.msra.mxu0 %v2336
  %3866 = vmatpush.msra.mxu0 %v2335
  %3867 = vmatpush.msra.mxu0 %v2334
  %3868 = vmatpush.msra.mxu0 %v2333
  %3869 = vmatpush.msra.mxu0 %v2332
  %3870 = vmatpush.msra.mxu0 %v2331
  %3871 = vmatpush.msra.mxu0 %v2330
  %3872 = vmatpush.msra.mxu0 %v2329
  %3873 = vmatpush.msra.mxu0 %v2328
  %3874 = vmatmul.f32.gmra.mxu0 %v3614
  %v3875 = vpop.f32.mrf.mxu0
  %v3876 = vadd.f32 %v3856, %v3875
  %3877 = vdwg.mxu0
  %3878 = vmatpush.msra.mxu0 %v2359
  %3879 = vmatpush.msra.mxu0 %v2358
  %3880 = vmatpush.msra.mxu0 %v2357
  %3881 = vmatpush.msra.mxu0 %v2356
  %3882 = vmatpush.msra.mxu0 %v2355
  %3883 = vmatpush.msra.mxu0 %v2354
  %3884 = vmatpush.msra.mxu0 %v2353
  %3885 = vmatpush.msra.mxu0 %v2352
  %3886 = vmatpush.msra.mxu0 %v2351
  %3887 = vmatpush.msra.mxu0 %v2350
  %3888 = vmatpush.msra.mxu0 %v2349
  %3889 = vmatpush.msra.mxu0 %v2348
  %3890 = vmatpush.msra.mxu0 %v2347
  %3891 = vmatpush.msra.mxu0 %v2346
  %3892 = vmatpush.msra.mxu0 %v2345
  %3893 = vmatpush.msra.mxu0 %v2344
  %3894 = vmatmul.f32.gmra.mxu0 %v3615
  %v3895 = vpop.f32.mrf.mxu0
  %v3896 = vadd.f32 %v3876, %v3895
  %3897 = vdwg.mxu0
  %3898 = vmatpush.msra.mxu0 %v2375
  %3899 = vmatpush.msra.mxu0 %v2374
  %3900 = vmatpush.msra.mxu0 %v2373
  %3901 = vmatpush.msra.mxu0 %v2372
  %3902 = vmatpush.msra.mxu0 %v2371
  %3903 = vmatpush.msra.mxu0 %v2370
  %3904 = vmatpush.msra.mxu0 %v2369
  %3905 = vmatpush.msra.mxu0 %v2368
  %3906 = vmatpush.msra.mxu0 %v2367
  %3907 = vmatpush.msra.mxu0 %v2366
  %3908 = vmatpush.msra.mxu0 %v2365
  %3909 = vmatpush.msra.mxu0 %v2364
  %3910 = vmatpush.msra.mxu0 %v2363
  %3911 = vmatpush.msra.mxu0 %v2362
  %3912 = vmatpush.msra.mxu0 %v2361
  %3913 = vmatpush.msra.mxu0 %v2360
  %3914 = vmatmul.f32.gmra.mxu0 %v3616
  %v3915 = vpop.f32.mrf.mxu0
  %v3916 = vadd.f32 %v3896, %v3915
  %3917 = vdwg.mxu0
  %3918 = vmatpush.msra.mxu0 %v2391
  %3919 = vmatpush.msra.mxu0 %v2390
  %3920 = vmatpush.msra.mxu0 %v2389
  %3921 = vmatpush.msra.mxu0 %v2388
  %3922 = vmatpush.msra.mxu0 %v2387
  %3923 = vmatpush.msra.mxu0 %v2386
  %3924 = vmatpush.msra.mxu0 %v2385
  %3925 = vmatpush.msra.mxu0 %v2384
  %3926 = vmatpush.msra.mxu0 %v2383
  %3927 = vmatpush.msra.mxu0 %v2382
  %3928 = vmatpush.msra.mxu0 %v2381
  %3929 = vmatpush.msra.mxu0 %v2380
  %3930 = vmatpush.msra.mxu0 %v2379
  %3931 = vmatpush.msra.mxu0 %v2378
  %3932 = vmatpush.msra.mxu0 %v2377
  %3933 = vmatpush.msra.mxu0 %v2376
  %3934 = vmatmul.f32.gmra.mxu0 %v3617
  %v3935 = vpop.f32.mrf.mxu0
  %v3936 = vadd.f32 %v3916, %v3935
  %3937 = vdwg.mxu0
  %v3938 = vld [vmem:[%s10 + $0x36] sm:$0x1]
  %v3940 = vperm.slane %v3938, 0
  %3941 = vrot.lane.b32.xlu0 %v3940, 32
  %v3942 = vpop.permute.xlu0 %3941
  %v3944 = vadd.f32 %v3936, %v3942
  %3946 = vrot.lane.b32.xlu0 %v3944, 96
  %v3947 = vpop.permute.xlu0 %3946
  %v3949 = vadd.f32 %v3178, %v3947
  %v3950 = vsel %vm412, %v3949, 0.0
  %3951 = vadd.xlane.f32.xlu0 %v3950
  %v3952 = vpop.xlane.xlu0 %3951
  %v3953 = vmul.f32 %v3952, %v809
  %v3954 = vsub.f32 %v3949, %v3953
  %v3955 = vmul.f32 %v3954, %v3954
  %v3956 = vsel %vm412, %v3955, 0.0
  %3957 = vadd.xlane.f32.xlu0 %v3956
  %v3958 = vpop.xlane.xlu0 %3957
  %v3959 = vmul.f32 %v3958, %v809
  %v3960 = vadd.f32 %v3959, 1e-05
  %v3961 = vrsqrt.pop %v3960
  %v3962 = vmul.f32 %v3961, %v3960
  %v3963 = vmul.f32 %v3962, %v3961
  %v3964 = vmul.f32 0.5, %v3963
  %v3965 = vsub.f32 1.5, %v3964
  %v3966 = vmul.f32 %v3961, %v3965
  %vm3967 = vweird.f32 %v3960
  %vm3968 = vweird.f32 %v3961
  %vm3969 = vmor %vm3967, %vm3968
  %v3970 = vsel %vm3969, %v3961, %v3966
  %v3971 = vmul.f32 %v3954, %v3970
  %v3972 = vld [vmem:[%s10 + $0x13] sm:$0x1]
  %v3974 = vperm.slane %v3972, 0
  %v3976 = vmul.f32 %v3971, %v3974
  %v3977 = vld [vmem:[%s10 + $0x14] sm:$0x1]
  %v3979 = vperm.slane %v3977, 0
  %v3981 = vadd.f32 %v3976, %v3979
  %v3982 = vld [vmem:[%s8] sm:$0xff]
  %v3983 = vld [vmem:[%s8 + $0x8] sm:$0xff]
  %v3984 = vld [vmem:[%s8 + $0x10] sm:$0xff]
  %v3985 = vld [vmem:[%s8 + $0x18] sm:$0xff]
  %v3986 = vld [vmem:[%s8 + $0x20] sm:$0xff]
  %v3987 = vld [vmem:[%s8 + $0x28] sm:$0xff]
  %v3988 = vld [vmem:[%s8 + $0x30] sm:$0xff]
  %v3989 = vld [vmem:[%s8 + $0x38] sm:$0xff]
  %v3991 = vrot.slane %v3981, 2
  %v3992 = vsel %vm412, %v3991, 0
  %3994 = vmatpush.msra.mxu0 0.0
  %3995 = vmatpush.msra.mxu0 0.0
  %3996 = vmatpush.msra.mxu0 0.0
  %3997 = vmatpush.msra.mxu0 0.0
  %3998 = vmatpush.msra.mxu0 0.0
  %3999 = vmatpush.msra.mxu0 0.0
  %4000 = vmatpush.msra.mxu0 0.0
  %4001 = vmatpush.msra.mxu0 0.0
  %4002 = vmatpush.msra.mxu0 0.0
  %4003 = vmatpush.msra.mxu0 0.0
  %4004 = vmatpush.msra.mxu0 0.0
  %4005 = vmatpush.msra.mxu0 0.0
  %4006 = vmatpush.msra.mxu0 %v3989
  %4007 = vmatpush.msra.mxu0 %v3988
  %4008 = vmatpush.msra.mxu0 %v3987
  %4009 = vmatpush.msra.mxu0 %v3986
  %4010 = vmatmul.f32.gmra.mxu0 %v3992
  %v4011 = vpop.f32.mrf.mxu0
  %v4012 = vadd.f32 0.0, %v4011
  %4013 = vdwg.mxu0
  %v4014 = vsel %vm412, %v3981, 0
  %4016 = vmatpush.msra.mxu0 0.0
  %4017 = vmatpush.msra.mxu0 0.0
  %4018 = vmatpush.msra.mxu0 0.0
  %4019 = vmatpush.msra.mxu0 0.0
  %4020 = vmatpush.msra.mxu0 0.0
  %4021 = vmatpush.msra.mxu0 0.0
  %4022 = vmatpush.msra.mxu0 0.0
  %4023 = vmatpush.msra.mxu0 0.0
  %4024 = vmatpush.msra.mxu0 0.0
  %4025 = vmatpush.msra.mxu0 0.0
  %4026 = vmatpush.msra.mxu0 0.0
  %4027 = vmatpush.msra.mxu0 0.0
  %4028 = vmatpush.msra.mxu0 %v3985
  %4029 = vmatpush.msra.mxu0 %v3984
  %4030 = vmatpush.msra.mxu0 %v3983
  %4031 = vmatpush.msra.mxu0 %v3982
  %4032 = vmatmul.f32.gmra.mxu0 %v4014
  %v4033 = vpop.f32.mrf.mxu0
  %v4034 = vadd.f32 %v4012, %v4033
  %4035 = vdwg.mxu0
  %v4036 = vld [vmem:[%s8 + $0x40] sm:$0xff]
  %v4037 = vld [vmem:[%s8 + $0x48] sm:$0xff]
  %v4038 = vld [vmem:[%s8 + $0x50] sm:$0xff]
  %v4039 = vld [vmem:[%s8 + $0x58] sm:$0xff]
  %v4040 = vrot.slane %v3981, 4
  %v4041 = vsel %vm412, %v4040, 0
  %4043 = vmatpush.msra.mxu0 0.0
  %4044 = vmatpush.msra.mxu0 0.0
  %4045 = vmatpush.msra.mxu0 0.0
  %4046 = vmatpush.msra.mxu0 0.0
  %4047 = vmatpush.msra.mxu0 0.0
  %4048 = vmatpush.msra.mxu0 0.0
  %4049 = vmatpush.msra.mxu0 0.0
  %4050 = vmatpush.msra.mxu0 0.0
  %4051 = vmatpush.msra.mxu0 0.0
  %4052 = vmatpush.msra.mxu0 0.0
  %4053 = vmatpush.msra.mxu0 0.0
  %4054 = vmatpush.msra.mxu0 0.0
  %4055 = vmatpush.msra.mxu0 %v4039
  %4056 = vmatpush.msra.mxu0 %v4038
  %4057 = vmatpush.msra.mxu0 %v4037
  %4058 = vmatpush.msra.mxu0 %v4036
  %4059 = vmatmul.f32.gmra.mxu0 %v4041
  %v4060 = vpop.f32.mrf.mxu0
  %v4061 = vadd.f32 0.0, %v4060
  %4062 = vdwg.mxu0
  %v4063 = vadd.f32 %v4034, %v4061
  %v4064 = vld [vmem:[%s8 + $0x60] sm:$0xff]
  %v4065 = vld [vmem:[%s8 + $0x68] sm:$0xff]
  %v4066 = vld [vmem:[%s8 + $0x70] sm:$0xff]
  %v4067 = vld [vmem:[%s8 + $0x78] sm:$0xff]
  %v4068 = vrot.slane %v3981, 6
  %v4069 = vsel %vm412, %v4068, 0
  %4071 = vmatpush.msra.mxu0 0.0
  %4072 = vmatpush.msra.mxu0 0.0
  %4073 = vmatpush.msra.mxu0 0.0
  %4074 = vmatpush.msra.mxu0 0.0
  %4075 = vmatpush.msra.mxu0 0.0
  %4076 = vmatpush.msra.mxu0 0.0
  %4077 = vmatpush.msra.mxu0 0.0
  %4078 = vmatpush.msra.mxu0 0.0
  %4079 = vmatpush.msra.mxu0 0.0
  %4080 = vmatpush.msra.mxu0 0.0
  %4081 = vmatpush.msra.mxu0 0.0
  %4082 = vmatpush.msra.mxu0 0.0
  %4083 = vmatpush.msra.mxu0 %v4067
  %4084 = vmatpush.msra.mxu0 %v4066
  %4085 = vmatpush.msra.mxu0 %v4065
  %4086 = vmatpush.msra.mxu0 %v4064
  %4087 = vmatmul.f32.gmra.mxu0 %v4069
  %v4088 = vpop.f32.mrf.mxu0
  %v4089 = vadd.f32 0.0, %v4088
  %4090 = vdwg.mxu0
  %v4091 = vadd.f32 %v4063, %v4089
  %v4092 = vld [vmem:[%s10 + $0x37] sm:$0x1]
  %v4094 = vperm.slane %v4092, 0
  %v4096 = vadd.f32 %v4091, %v4094
  %v4097 = vld [vmem:[%s9] sm:$0xff]
  %v4098 = vld [vmem:[%s9 + $0x8] sm:$0xff]
  %v4099 = vld [vmem:[%s10 + $0x38] sm:$0x1]
  %v4101 = vperm.slane %v4099, 0
  %v4104 = vsel %vm350, %v4096, 0
  %4106 = vmatpush.msra.mxu0 0.0
  %4107 = vmatpush.msra.mxu0 0.0
  %4108 = vmatpush.msra.mxu0 0.0
  %4109 = vmatpush.msra.mxu0 0.0
  %4110 = vmatpush.msra.mxu0 0.0
  %4111 = vmatpush.msra.mxu0 0.0
  %4112 = vmatpush.msra.mxu0 0.0
  %4113 = vmatpush.msra.mxu0 0.0
  %4114 = vmatpush.msra.mxu0 0.0
  %4115 = vmatpush.msra.mxu0 0.0
  %4116 = vmatpush.msra.mxu0 0.0
  %4117 = vmatpush.msra.mxu0 0.0
  %4118 = vmatpush.msra.mxu0 0.0
  %4119 = vmatpush.msra.mxu0 0.0
  %4120 = vmatpush.msra.mxu0 %v4098
  %4121 = vmatpush.msra.mxu0 %v4097
  %4122 = vmatmul.f32.gmra.mxu0 %v4104
  %v4123 = vpop.f32.mrf.mxu0
  %v4124 = vadd.f32 %v4101, %v4123
  %4125 = vdwg.mxu0
  %v4126 = vadd.f32 %v4096, %v4124
  %vm4127 = vcmask 123904
  %v4128 = vsel %vm4127, %v4126, 0.0
  %4129 = vadd.xlane.f32.xlu0 %v4128
  %v4130 = vpop.xlane.xlu0 %4129
  %v4131 = vrcp.pop 16.0
  %v4132 = vmul.f32 16.0, %v4131
  %v4133 = vsub.f32 1.0, %v4132
  %v4134 = vmul.f32 %v4131, %v4133
  %v4135 = vadd.f32 %v4131, %v4134
  %vm4136 = vweird.f32 %v4131
  %v4137 = vsel %vm4136, %v4131, %v4135
  %v4138 = vmul.f32 %v4130, %v4137
  %v4139 = vsub.f32 %v4126, %v4138
  %v4140 = vmul.f32 %v4139, %v4139
  %v4141 = vsel %vm4127, %v4140, 0.0
  %4142 = vadd.xlane.f32.xlu0 %v4141
  %v4143 = vpop.xlane.xlu0 %4142
  %v4144 = vmul.f32 %v4143, %v4137
  %v4145 = vadd.f32 %v4144, 1e-05
  %v4146 = vrsqrt.pop %v4145
  %v4147 = vmul.f32 %v4146, %v4145
  %v4148 = vmul.f32 %v4147, %v4146
  %v4149 = vmul.f32 0.5, %v4148
  %v4150 = vsub.f32 1.5, %v4149
  %v4151 = vmul.f32 %v4146, %v4150
  %vm4152 = vweird.f32 %v4145
  %vm4153 = vweird.f32 %v4146
  %vm4154 = vmor %vm4152, %vm4153
  %v4155 = vsel %vm4154, %v4146, %v4151
  %v4156 = vmul.f32 %v4139, %v4155
  %v4157 = vld [vmem:[%s10 + $0x39] sm:$0x1]
  %v4159 = vperm.slane %v4157, 0
  %v4161 = vmul.f32 %v4156, %v4159
  %v4162 = vld [vmem:[%s10 + $0x3a] sm:$0x1]
  %v4164 = vperm.slane %v4162, 0
  %v4166 = vadd.f32 %v4161, %v4164
  %v4167 = vld [vmem:[%s10 + $0x3b] sm:$0x1]
  %v4169 = vperm.slane %v4167, 0
  %4173 = vrot.lane.b32.xlu0 %v4097, 112
  %v4174 = vpop.permute.xlu0 %4173
  %4175 = vrot.lane.b32.xlu0 %v4098, 112
  %v4176 = vpop.permute.xlu0 %4175
  %v4180 = vsel %vm350, %v4166, 0
  %4182 = vmatpush.msra.mxu0 0.0
  %4183 = vmatpush.msra.mxu0 0.0
  %4184 = vmatpush.msra.mxu0 0.0
  %4185 = vmatpush.msra.mxu0 0.0
  %4186 = vmatpush.msra.mxu0 0.0
  %4187 = vmatpush.msra.mxu0 0.0
  %4188 = vmatpush.msra.mxu0 0.0
  %4189 = vmatpush.msra.mxu0 0.0
  %4190 = vmatpush.msra.mxu0 0.0
  %4191 = vmatpush.msra.mxu0 0.0
  %4192 = vmatpush.msra.mxu0 0.0
  %4193 = vmatpush.msra.mxu0 0.0
  %4194 = vmatpush.msra.mxu0 0.0
  %4195 = vmatpush.msra.mxu0 0.0
  %4196 = vmatpush.msra.mxu0 %v4176
  %4197 = vmatpush.msra.mxu0 %v4174
  %4198 = vmatmul.f32.gmra.mxu0 %v4180
  %v4199 = vpop.f32.mrf.mxu0
  %v4200 = vadd.f32 %v4169, %v4199
  %4201 = vdwg.mxu0
  %4203 = vrot.lane.b32.xlu0 %v4200, 64
  %v4204 = vpop.permute.xlu0 %4203
  %v4206 = vsel %vm309, %v331, %v4204
  %vm4207 = vcmask 719872
  %v4208 = vsel %vm4207, %v4206, 0.0
  %4209 = vst [vmem:[%s11] sm:$0x3] %v4208
  // Predicated region
  $region46: #{end2end_forward.1} parent=0 // pred_check
    _
  $region47: #{end2end_forward.1} parent=0 // pred_check_branch
    %4211 = sbr.rel (0) target = $region49
  $region48: #{end2end_forward.1} parent=0 // pred_region
    _
  $region49: #{end2end_forward.1} parent=0 // pred_fallthru
    _
  // Predicated region
  $region50: #{end2end_forward.1} parent=0 // pred_check
    _
  $region51: #{end2end_forward.1} parent=0 // pred_check_branch
    %4213 = sbr.rel (0) target = $region53
  $region52: #{end2end_forward.1} parent=0 // pred_region
    _
  $region53: #{end2end_forward.1} parent=0 // pred_fallthru
    _

</llo_original>
